<compile_context>
chip_gen: v7x
topology: tpu7x:2x2x1
jax: 0.10.0
libtpu: 0.0.40
codegen_flags: <defaults>
</compile_context>

<pallas_src>
import functools

import jax
import jax.numpy as jnp
from jax.experimental import pallas as pl
from jax.experimental.pallas import tpu as pltpu

EPS = 1e-5                                    # BatchNorm eps (host-side only)
_BN_SCALE = 1.0 / float((1.0 + EPS) ** 0.5)   # eval-mode BN with default stats
MXU_DTYPE = jnp.bfloat16                      # MXU operand dtype (f32 accumulate)

SETTINGS = {
    'input_features': 8,
    'conv_params': [(4, (16, 16, 32)), (4, (32, 32, 32))],   # (K, channels)
    'fc_params': [(0.1, 32), (0.1, 16)],                     # (dropout, units)
    'output_classes': 4,
    'node_predict': False,
}


# ------------------------------ fused kernel --------------------------------

def _make_forward_kernel(conv_ks, n_fc, node_predict):
    """Builds the fused forward kernel.  conv_ks / n_fc / node_predict are static."""
    n_blocks = len(conv_ks)

    def kernel(*refs):
        o_ref = refs[-1]
        it = iter(refs[:-1])
        x_ref = next(it); pos_ref = next(it)
        bidc_ref = next(it); bidr_ref = next(it)
        pool_ref = next(it); noh_ref = next(it)
        bns_ref = next(it); bnt_ref = next(it)
        wg0_ref = next(it); bg0_ref = next(it)
        blocks = [tuple(next(it) for _ in range(9)) for _ in range(n_blocks)]
        fcs = [(next(it), next(it)) for _ in range(n_fc)]
        wo_ref = next(it); bo_ref = next(it)

        n = x_ref.shape[0]

        def mm(a, w_ref):
            # MXU matmul: cast lhs to the (bf16) weight dtype, accumulate in f32.
            w = w_ref[...]
            return jnp.dot(a.astype(w.dtype), w, preferred_element_type=jnp.float32)

        # ---- input BN (folded affine) + initial mean-pool + global_process[0] ----
        fts = x_ref[...] * bns_ref[...] + bnt_ref[...]
        pool = pool_ref[...]                        # [B, N] mean-pool matrix
        noh = noh_ref[...]                          # [N, B] node->graph one-hot
        u = jnp.dot(pool, fts, preferred_element_type=jnp.float32)
        u = jnp.maximum(mm(u, wg0_ref) + bg0_ref[...], 0.0)

        # static [N, N] helpers shared by all conv blocks
        row = jax.lax.broadcasted_iota(jnp.int32, (n, n), 0)
        col = jax.lax.broadcasted_iota(jnp.int32, (n, n), 1)
        col_f = col.astype(jnp.float32)
        eye_f = (row == col).astype(jnp.float32)
        valid = (bidc_ref[...] == bidr_ref[...]) & (row != col)   # same graph, no self loop

        pts = pos_ref[...]
        for blk, k_nn in enumerate(conv_ks):
            w1a, w1b, w1c, w2, w3, ws, wgu, wgp, bg = blocks[blk]

            # knn_graph: masked pairwise-distance surrogate.  Row-wise ordering of
            # ||p_j||^2 - 2<p_i,p_j> is identical to ||p_i - p_j||^2 (sq_i is const
            # per row), so we skip it and avoid transposing the [N,1] vector.
            cross = jax.lax.dot_general(pts, pts, (((1,), (1,)), ((), ())),
                                        preferred_element_type=jnp.float32)
            sq_j = jnp.sum(cross * eye_f, axis=0, keepdims=True)   # diag -> [1, N]
            d = jnp.where(valid, sq_j - 2.0 * cross, 1e30)

            # u_i = u[batch]  (gather via one-hot matmul, stays on the MXU)
            u_nodes = jnp.dot(noh, u, preferred_element_type=jnp.float32)

            # k nearest neighbors: iterative row-wise argmin on the VMEM-resident
            # tile; x_j gathered with a one-hot matmul, ties broken to lowest index.
            # TODO(synk): graphs with < k+1 nodes would pick masked entries here
            # (PyG knn_graph would emit fewer edges) — fine for this workload.
            diffs = []
            for _ in range(k_nn):
                rowmin = jnp.min(d, axis=1, keepdims=True)
                sel = jnp.min(jnp.where(d == rowmin, col_f, 1e9), axis=1, keepdims=True)
                sel_mask = col_f == sel                        # exactly one col per row
                xj = jnp.dot(sel_mask.astype(jnp.float32), fts,
                             preferred_element_type=jnp.float32)
                diffs.append(xj - fts)                         # x_j - x_i
                d = jnp.where(sel_mask, 1e30, d)

            # message MLP, batched over all K*N edges:
            #   cat([u_i, x_i, x_j-x_i]) @ W1 = u_i@W1a + x_i@W1b + (x_j-x_i)@W1c
            base = mm(u_nodes, w1a) + mm(fts, w1b)             # shared across K
            xdiff = jnp.concatenate(diffs, axis=0)             # [K*N, Cin]
            base_all = jnp.concatenate([base] * k_nn, axis=0)  # [K*N, C0]
            h = jnp.maximum(base_all + mm(xdiff, w1c), 0.0)
            h = jnp.maximum(mm(h, w2), 0.0)
            h = jnp.maximum(mm(h, w3), 0.0)                    # [K*N, C2]

            # 'max' aggregation over the K neighbors (static row slices)
            agg = h[0:n]
            for k in range(1, k_nn):
                agg = jnp.maximum(agg, h[k * n:(k + 1) * n])

            # skip path + ReLU   (skip_mlp = Linear(bias=False) + BN, folded)
            fts = jnp.maximum(agg + mm(fts, ws), 0.0)

            # u = ReLU(Linear(cat([u, mean_pool(fts)])))  — Wg pre-split, no lane concat
            pooled = jnp.dot(pool, fts, preferred_element_type=jnp.float32)
            u = jnp.maximum(mm(u, wgu) + mm(pooled, wgp) + bg[...], 0.0)
            pts = fts

        xo = fts if node_predict else u
        for wf, bf in fcs:                                     # Dropout = identity (eval)
            xo = jnp.maximum(mm(xo, wf) + bf[...], 0.0)
        o_ref[...] = mm(xo, wo_ref) + bo_ref[...]              # Softmax never applied in forward()

    return kernel


# ------------------------------ wrapper --------------------------------------

def trident_forward(params, x, pos, batch_ids, *, num_graphs, settings):
    n = x.shape[0]
    bid = batch_ids.astype(jnp.int32)

    # tiny one-time glue (XLA): graph-membership one-hot / mean-pool matrices
    oh = (jnp.arange(num_graphs, dtype=jnp.int32)[:, None] == bid[None, :]).astype(jnp.float32)
    pool = oh / jnp.maximum(jnp.sum(oh, axis=1, keepdims=True), 1.0)   # [B, N]
    noh = jnp.transpose(oh)                                            # [N, B]

    inputs = [x, pos, bid.reshape(n, 1), bid.reshape(1, n), pool, noh,
              params['input_bn'][0], params['input_bn'][1],
              params['global0'][0], params['global0'][1]]
    conv_ks = []
    for i, (k_nn, _channels) in enumerate(settings['conv_params']):
        conv_ks.append(k_nn)
        cp = params['conv'][i]
        inputs += [cp['w1a'], cp['w1b'], cp['w1c'], cp['w2'], cp['w3'], cp['ws'],
                   cp['wgu'], cp['wgp'], cp['bg']]
    for wf, bf in params['fc']:
        inputs += [wf, bf]
    inputs += [params['out'][0], params['out'][1]]

    node_predict = settings['node_predict']
    out_rows = n if node_predict else num_graphs
    kernel = _make_forward_kernel(tuple(conv_ks), len(params['fc']), node_predict)

    # TODO(synk): for realistic N, tile with a grid over node row-blocks (streaming
    # running-top-k, "parallel" leading axis for v7x's 2 TensorCores, 128-lane
    # padded activations); at N=32 everything fits in VMEM so one gridless call wins.
    return pl.pallas_call(
        kernel,
        out_shape=jax.ShapeDtypeStruct((out_rows, settings['output_classes']), jnp.float32),
        in_specs=[pl.BlockSpec(memory_space=pltpu.MemorySpace.VMEM)] * len(inputs),
        out_specs=pl.BlockSpec(memory_space=pltpu.MemorySpace.VMEM),
    )(*inputs)


# ------------------------------ parameters -----------------------------------

def _linear_init(key, fan_in, fan_out):
    # torch.nn.Linear default init: U(-1/sqrt(fan_in), 1/sqrt(fan_in))
    kw, kb = jax.random.split(key)
    bound = 1.0 / float(fan_in) ** 0.5
    w = jax.random.uniform(kw, (fan_in, fan_out), jnp.float32, -bound, bound)
    b = jax.random.uniform(kb, (1, fan_out), jnp.float32, -bound, bound)
    return w, b


def init_params(key, settings):
    params = {}
    prev = settings['input_features']
    keys = iter(jax.random.split(key, 64))

    # input_bn (eval, default stats): per-channel scale / shift
    params['input_bn'] = (jnp.full((1, prev), _BN_SCALE, jnp.float32),
                          jnp.zeros((1, prev), jnp.float32))

    # global_process[0]: Linear(prev, prev) + BN + ReLU   (BN folded)
    w, b = _linear_init(next(keys), prev, prev)
    params['global0'] = ((w * _BN_SCALE).astype(MXU_DTYPE), b * _BN_SCALE)

    params['conv'] = []
    for _k_nn, channels in settings['conv_params']:
        c0, c1, c2 = channels
        cin = prev
        w1, _ = _linear_init(next(keys), 3 * cin, c0)    # Linear(3*cin, c0, bias=False)
        w2, _ = _linear_init(next(keys), c0, c1)
        w3, _ = _linear_init(next(keys), c1, c2)
        ws, _ = _linear_init(next(keys), cin, c2)        # skip_mlp Linear(bias=False)
        wg, bg = _linear_init(next(keys), cin + c2, c2)  # global_process[idx+1]
        w1 = (w1 * _BN_SCALE).astype(MXU_DTYPE)
        wg = wg * _BN_SCALE
        params['conv'].append(dict(
            # W1 split along the cat([u_i, x_i, x_j-x_i]) row blocks
            w1a=w1[0:cin], w1b=w1[cin:2 * cin], w1c=w1[2 * cin:3 * cin],
            w2=(w2 * _BN_SCALE).astype(MXU_DTYPE),
            w3=(w3 * _BN_SCALE).astype(MXU_DTYPE),
            ws=(ws * _BN_SCALE).astype(MXU_DTYPE),
            # global Linear split along cat([u, pooled]) row blocks
            wgu=wg[0:cin].astype(MXU_DTYPE),
            wgp=wg[cin:cin + c2].astype(MXU_DTYPE),
            bg=bg * _BN_SCALE))
        prev = c2

    params['fc'] = []
    for _drop, units in settings['fc_params']:
        w, b = _linear_init(next(keys), prev, units)
        params['fc'].append((w.astype(MXU_DTYPE), b))
        prev = units

    w, b = _linear_init(next(keys), prev, settings['output_classes'])
    params['out'] = (w.astype(MXU_DTYPE), b)
    return params


# --------------------------------- main ---------------------------------------

if __name__ == "__main__":
    key = jax.random.PRNGKey(0)
    kx, kp, kparams = jax.random.split(key, 3)

    num_graphs = 2
    nodes_per_graph = 16
    n_total = num_graphs * nodes_per_graph
    feat = SETTINGS['input_features']

    x = jax.random.normal(kx, (n_total, feat), jnp.float32)
    pos = jax.random.normal(kp, (n_total, 3), jnp.float32)
    batch_ids = jnp.repeat(jnp.arange(num_graphs, dtype=jnp.int32), nodes_per_graph)

    params = init_params(kparams, SETTINGS)
    fwd = jax.jit(functools.partial(trident_forward,
                                    num_graphs=num_graphs, settings=SETTINGS))
    out = jax.block_until_ready(fwd(params, x, pos, batch_ids))

    assert out.shape == (num_graphs, SETTINGS['output_classes'])
    assert bool(jnp.all(jnp.isfinite(out)))
    print("KERNEL_OK")
</pallas_src>

<mosaic_0001>
module attributes {stable_mosaic.version = 11 : i64} {
  func.func @kernel(%arg0: memref<32x8xf32, #tpu.memory_space<vmem>>, %arg1: memref<32x3xf32, #tpu.memory_space<vmem>>, %arg2: memref<32x1xi32, #tpu.memory_space<vmem>>, %arg3: memref<1x32xi32, #tpu.memory_space<vmem>>, %arg4: memref<2x32xf32, #tpu.memory_space<vmem>>, %arg5: memref<32x2xf32, #tpu.memory_space<vmem>>, %arg6: memref<1x8xf32, #tpu.memory_space<vmem>>, %arg7: memref<1x8xf32, #tpu.memory_space<vmem>>, %arg8: memref<8x8xbf16, #tpu.memory_space<vmem>>, %arg9: memref<1x8xf32, #tpu.memory_space<vmem>>, %arg10: memref<8x16xbf16, #tpu.memory_space<vmem>>, %arg11: memref<8x16xbf16, #tpu.memory_space<vmem>>, %arg12: memref<8x16xbf16, #tpu.memory_space<vmem>>, %arg13: memref<16x16xbf16, #tpu.memory_space<vmem>>, %arg14: memref<16x32xbf16, #tpu.memory_space<vmem>>, %arg15: memref<8x32xbf16, #tpu.memory_space<vmem>>, %arg16: memref<8x32xbf16, #tpu.memory_space<vmem>>, %arg17: memref<32x32xbf16, #tpu.memory_space<vmem>>, %arg18: memref<1x32xf32, #tpu.memory_space<vmem>>, %arg19: memref<32x32xbf16, #tpu.memory_space<vmem>>, %arg20: memref<32x32xbf16, #tpu.memory_space<vmem>>, %arg21: memref<32x32xbf16, #tpu.memory_space<vmem>>, %arg22: memref<32x32xbf16, #tpu.memory_space<vmem>>, %arg23: memref<32x32xbf16, #tpu.memory_space<vmem>>, %arg24: memref<32x32xbf16, #tpu.memory_space<vmem>>, %arg25: memref<32x32xbf16, #tpu.memory_space<vmem>>, %arg26: memref<32x32xbf16, #tpu.memory_space<vmem>>, %arg27: memref<1x32xf32, #tpu.memory_space<vmem>>, %arg28: memref<32x32xbf16, #tpu.memory_space<vmem>>, %arg29: memref<1x32xf32, #tpu.memory_space<vmem>>, %arg30: memref<32x16xbf16, #tpu.memory_space<vmem>>, %arg31: memref<1x16xf32, #tpu.memory_space<vmem>>, %arg32: memref<16x4xbf16, #tpu.memory_space<vmem>>, %arg33: memref<1x4xf32, #tpu.memory_space<vmem>>, %arg34: memref<2x4xf32, #tpu.memory_space<vmem>>) attributes {dimension_semantics = [], scalar_prefetch = 0 : i64, scratch_operands = 0 : i64, tpu.core_type = #tpu.core_type<tc>} {
    %c0 = arith.constant 0 : index
    %c0_0 = arith.constant 0 : index
    %0 = vector.load %arg0[%c0, %c0_0] : memref<32x8xf32, #tpu.memory_space<vmem>>, vector<32x8xf32>
    %c0_1 = arith.constant 0 : index
    %c0_2 = arith.constant 0 : index
    %1 = vector.load %arg6[%c0_1, %c0_2] : memref<1x8xf32, #tpu.memory_space<vmem>>, vector<1x8xf32>
    %2 = vector.broadcast %1 : vector<1x8xf32> to vector<32x8xf32>
    %3 = arith.mulf %0, %2 : vector<32x8xf32>
    %c0_3 = arith.constant 0 : index
    %c0_4 = arith.constant 0 : index
    %4 = vector.load %arg7[%c0_3, %c0_4] : memref<1x8xf32, #tpu.memory_space<vmem>>, vector<1x8xf32>
    %5 = vector.broadcast %4 : vector<1x8xf32> to vector<32x8xf32>
    %6 = arith.addf %3, %5 : vector<32x8xf32>
    %c0_5 = arith.constant 0 : index
    %c0_6 = arith.constant 0 : index
    %7 = vector.load %arg4[%c0_5, %c0_6] : memref<2x32xf32, #tpu.memory_space<vmem>>, vector<2x32xf32>
    %c0_7 = arith.constant 0 : index
    %c0_8 = arith.constant 0 : index
    %8 = vector.load %arg5[%c0_7, %c0_8] : memref<32x2xf32, #tpu.memory_space<vmem>>, vector<32x2xf32>
    %cst = arith.constant dense<0.000000e+00> : vector<2x8xf32>
    %9 = tpu.matmul %7, %6, %cst {dimension_numbers = #tpu.dot_dimension_numbers<[1], [0], [0], [1], [0, 0, 1, 1], [], []>} : vector<2x32xf32>, vector<32x8xf32>, vector<2x8xf32> -> vector<2x8xf32>
    %c0_9 = arith.constant 0 : index
    %c0_10 = arith.constant 0 : index
    %10 = vector.load %arg8[%c0_9, %c0_10] : memref<8x8xbf16, #tpu.memory_space<vmem>>, vector<8x8xbf16>
    %11 = arith.truncf %9 : vector<2x8xf32> to vector<2x8xbf16>
    %cst_11 = arith.constant dense<0.000000e+00> : vector<2x8xf32>
    %12 = tpu.matmul %11, %10, %cst_11 {dimension_numbers = #tpu.dot_dimension_numbers<[1], [0], [0], [1], [0, 0, 1, 1], [], []>} : vector<2x8xbf16>, vector<8x8xbf16>, vector<2x8xf32> -> vector<2x8xf32>
    %c0_12 = arith.constant 0 : index
    %c0_13 = arith.constant 0 : index
    %13 = vector.load %arg9[%c0_12, %c0_13] : memref<1x8xf32, #tpu.memory_space<vmem>>, vector<1x8xf32>
    %14 = vector.broadcast %13 : vector<1x8xf32> to vector<2x8xf32>
    %15 = arith.addf %12, %14 : vector<2x8xf32>
    %cst_14 = arith.constant 0.000000e+00 : f32
    %16 = vector.broadcast %cst_14 : f32 to vector<2x8xf32>
    %17 = arith.maximumf %15, %16 : vector<2x8xf32>
    %18 = tpu.iota {dimensions = array<i32: 0>} : vector<32x32xi32>
    %19 = tpu.iota {dimensions = array<i32: 1>} : vector<32x32xi32>
    %20 = arith.sitofp %19 : vector<32x32xi32> to vector<32x32xf32>
    %21 = arith.cmpi eq, %18, %19 : vector<32x32xi32>
    %22 = arith.extui %21 : vector<32x32xi1> to vector<32x32xi32>
    %23 = arith.sitofp %22 : vector<32x32xi32> to vector<32x32xf32>
    %c0_15 = arith.constant 0 : index
    %c0_16 = arith.constant 0 : index
    %24 = vector.load %arg2[%c0_15, %c0_16] : memref<32x1xi32, #tpu.memory_space<vmem>>, vector<32x1xi32>
    %c0_17 = arith.constant 0 : index
    %c0_18 = arith.constant 0 : index
    %25 = vector.load %arg3[%c0_17, %c0_18] : memref<1x32xi32, #tpu.memory_space<vmem>>, vector<1x32xi32>
    %26 = vector.broadcast %24 : vector<32x1xi32> to vector<32x32xi32>
    %27 = vector.broadcast %25 : vector<1x32xi32> to vector<32x32xi32>
    %28 = arith.cmpi eq, %26, %27 : vector<32x32xi32>
    %29 = arith.cmpi ne, %18, %19 : vector<32x32xi32>
    %30 = arith.andi %28, %29 : vector<32x32xi1>
    %c0_19 = arith.constant 0 : index
    %c0_20 = arith.constant 0 : index
    %31 = vector.load %arg1[%c0_19, %c0_20] : memref<32x3xf32, #tpu.memory_space<vmem>>, vector<32x3xf32>
    %cst_21 = arith.constant dense<0.000000e+00> : vector<32x32xf32>
    %32 = tpu.matmul %31, %31, %cst_21 {dimension_numbers = #tpu.dot_dimension_numbers<[1], [1], [0], [0], [0, 0, 1, 0], [], []>} : vector<32x3xf32>, vector<32x3xf32>, vector<32x32xf32> -> vector<32x32xf32>
    %33 = arith.mulf %32, %23 : vector<32x32xf32>
    %cst_22 = arith.constant dense<0.000000e+00> : vector<32xf32>
    %34 = vector.multi_reduction <add>, %33, %cst_22 [0] : vector<32x32xf32> to vector<32xf32>
    %35 = vector.shape_cast %34 : vector<32xf32> to vector<1x32xf32>
    %cst_23 = arith.constant 2.000000e+00 : f32
    %36 = vector.broadcast %cst_23 : f32 to vector<32x32xf32>
    %37 = arith.mulf %36, %32 : vector<32x32xf32>
    %38 = vector.broadcast %35 : vector<1x32xf32> to vector<32x32xf32>
    %39 = arith.subf %38, %37 : vector<32x32xf32>
    %cst_24 = arith.constant 1.000000e+30 : f32
    %40 = vector.broadcast %cst_24 : f32 to vector<32x32xf32>
    %41 = arith.select %30, %39, %40 : vector<32x32xi1>, vector<32x32xf32>
    %cst_25 = arith.constant dense<0.000000e+00> : vector<32x8xf32>
    %42 = tpu.matmul %8, %17, %cst_25 {dimension_numbers = #tpu.dot_dimension_numbers<[1], [0], [0], [1], [0, 0, 1, 1], [], []>} : vector<32x2xf32>, vector<2x8xf32>, vector<32x8xf32> -> vector<32x8xf32>
    %cst_26 = arith.constant dense<0x7F800000> : vector<32xf32>
    %43 = vector.multi_reduction <minimumf>, %41, %cst_26 [1] : vector<32x32xf32> to vector<32xf32>
    %44 = vector.shape_cast %43 : vector<32xf32> to vector<32x1xf32>
    %45 = vector.broadcast %44 : vector<32x1xf32> to vector<32x32xf32>
    %46 = arith.cmpf oeq, %41, %45 : vector<32x32xf32>
    %cst_27 = arith.constant 1.000000e+09 : f32
    %47 = vector.broadcast %cst_27 : f32 to vector<32x32xf32>
    %48 = arith.select %46, %20, %47 : vector<32x32xi1>, vector<32x32xf32>
    %cst_28 = arith.constant dense<0x7F800000> : vector<32xf32>
    %49 = vector.multi_reduction <minimumf>, %48, %cst_28 [1] : vector<32x32xf32> to vector<32xf32>
    %50 = vector.shape_cast %49 : vector<32xf32> to vector<32x1xf32>
    %51 = vector.broadcast %50 : vector<32x1xf32> to vector<32x32xf32>
    %52 = arith.cmpf oeq, %20, %51 : vector<32x32xf32>
    %53 = arith.extui %52 : vector<32x32xi1> to vector<32x32xi32>
    %54 = arith.sitofp %53 : vector<32x32xi32> to vector<32x32xf32>
    %cst_29 = arith.constant dense<0.000000e+00> : vector<32x8xf32>
    %55 = tpu.matmul %54, %6, %cst_29 {dimension_numbers = #tpu.dot_dimension_numbers<[1], [0], [0], [1], [0, 0, 1, 1], [], []>} : vector<32x32xf32>, vector<32x8xf32>, vector<32x8xf32> -> vector<32x8xf32>
    %56 = arith.subf %55, %6 : vector<32x8xf32>
    %cst_30 = arith.constant 1.000000e+30 : f32
    %57 = vector.broadcast %cst_30 : f32 to vector<32x32xf32>
    %58 = arith.select %52, %57, %41 : vector<32x32xi1>, vector<32x32xf32>
    %cst_31 = arith.constant dense<0x7F800000> : vector<32xf32>
    %59 = vector.multi_reduction <minimumf>, %58, %cst_31 [1] : vector<32x32xf32> to vector<32xf32>
    %60 = vector.shape_cast %59 : vector<32xf32> to vector<32x1xf32>
    %61 = vector.broadcast %60 : vector<32x1xf32> to vector<32x32xf32>
    %62 = arith.cmpf oeq, %58, %61 : vector<32x32xf32>
    %cst_32 = arith.constant 1.000000e+09 : f32
    %63 = vector.broadcast %cst_32 : f32 to vector<32x32xf32>
    %64 = arith.select %62, %20, %63 : vector<32x32xi1>, vector<32x32xf32>
    %cst_33 = arith.constant dense<0x7F800000> : vector<32xf32>
    %65 = vector.multi_reduction <minimumf>, %64, %cst_33 [1] : vector<32x32xf32> to vector<32xf32>
    %66 = vector.shape_cast %65 : vector<32xf32> to vector<32x1xf32>
    %67 = vector.broadcast %66 : vector<32x1xf32> to vector<32x32xf32>
    %68 = arith.cmpf oeq, %20, %67 : vector<32x32xf32>
    %69 = arith.extui %68 : vector<32x32xi1> to vector<32x32xi32>
    %70 = arith.sitofp %69 : vector<32x32xi32> to vector<32x32xf32>
    %cst_34 = arith.constant dense<0.000000e+00> : vector<32x8xf32>
    %71 = tpu.matmul %70, %6, %cst_34 {dimension_numbers = #tpu.dot_dimension_numbers<[1], [0], [0], [1], [0, 0, 1, 1], [], []>} : vector<32x32xf32>, vector<32x8xf32>, vector<32x8xf32> -> vector<32x8xf32>
    %72 = arith.subf %71, %6 : vector<32x8xf32>
    %cst_35 = arith.constant 1.000000e+30 : f32
    %73 = vector.broadcast %cst_35 : f32 to vector<32x32xf32>
    %74 = arith.select %68, %73, %58 : vector<32x32xi1>, vector<32x32xf32>
    %cst_36 = arith.constant dense<0x7F800000> : vector<32xf32>
    %75 = vector.multi_reduction <minimumf>, %74, %cst_36 [1] : vector<32x32xf32> to vector<32xf32>
    %76 = vector.shape_cast %75 : vector<32xf32> to vector<32x1xf32>
    %77 = vector.broadcast %76 : vector<32x1xf32> to vector<32x32xf32>
    %78 = arith.cmpf oeq, %74, %77 : vector<32x32xf32>
    %cst_37 = arith.constant 1.000000e+09 : f32
    %79 = vector.broadcast %cst_37 : f32 to vector<32x32xf32>
    %80 = arith.select %78, %20, %79 : vector<32x32xi1>, vector<32x32xf32>
    %cst_38 = arith.constant dense<0x7F800000> : vector<32xf32>
    %81 = vector.multi_reduction <minimumf>, %80, %cst_38 [1] : vector<32x32xf32> to vector<32xf32>
    %82 = vector.shape_cast %81 : vector<32xf32> to vector<32x1xf32>
    %83 = vector.broadcast %82 : vector<32x1xf32> to vector<32x32xf32>
    %84 = arith.cmpf oeq, %20, %83 : vector<32x32xf32>
    %85 = arith.extui %84 : vector<32x32xi1> to vector<32x32xi32>
    %86 = arith.sitofp %85 : vector<32x32xi32> to vector<32x32xf32>
    %cst_39 = arith.constant dense<0.000000e+00> : vector<32x8xf32>
    %87 = tpu.matmul %86, %6, %cst_39 {dimension_numbers = #tpu.dot_dimension_numbers<[1], [0], [0], [1], [0, 0, 1, 1], [], []>} : vector<32x32xf32>, vector<32x8xf32>, vector<32x8xf32> -> vector<32x8xf32>
    %88 = arith.subf %87, %6 : vector<32x8xf32>
    %cst_40 = arith.constant 1.000000e+30 : f32
    %89 = vector.broadcast %cst_40 : f32 to vector<32x32xf32>
    %90 = arith.select %84, %89, %74 : vector<32x32xi1>, vector<32x32xf32>
    %cst_41 = arith.constant dense<0x7F800000> : vector<32xf32>
    %91 = vector.multi_reduction <minimumf>, %90, %cst_41 [1] : vector<32x32xf32> to vector<32xf32>
    %92 = vector.shape_cast %91 : vector<32xf32> to vector<32x1xf32>
    %93 = vector.broadcast %92 : vector<32x1xf32> to vector<32x32xf32>
    %94 = arith.cmpf oeq, %90, %93 : vector<32x32xf32>
    %cst_42 = arith.constant 1.000000e+09 : f32
    %95 = vector.broadcast %cst_42 : f32 to vector<32x32xf32>
    %96 = arith.select %94, %20, %95 : vector<32x32xi1>, vector<32x32xf32>
    %cst_43 = arith.constant dense<0x7F800000> : vector<32xf32>
    %97 = vector.multi_reduction <minimumf>, %96, %cst_43 [1] : vector<32x32xf32> to vector<32xf32>
    %98 = vector.shape_cast %97 : vector<32xf32> to vector<32x1xf32>
    %99 = vector.broadcast %98 : vector<32x1xf32> to vector<32x32xf32>
    %100 = arith.cmpf oeq, %20, %99 : vector<32x32xf32>
    %101 = arith.extui %100 : vector<32x32xi1> to vector<32x32xi32>
    %102 = arith.sitofp %101 : vector<32x32xi32> to vector<32x32xf32>
    %cst_44 = arith.constant dense<0.000000e+00> : vector<32x8xf32>
    %103 = tpu.matmul %102, %6, %cst_44 {dimension_numbers = #tpu.dot_dimension_numbers<[1], [0], [0], [1], [0, 0, 1, 1], [], []>} : vector<32x32xf32>, vector<32x8xf32>, vector<32x8xf32> -> vector<32x8xf32>
    %104 = arith.subf %103, %6 : vector<32x8xf32>
    %c0_45 = arith.constant 0 : index
    %c0_46 = arith.constant 0 : index
    %105 = vector.load %arg10[%c0_45, %c0_46] : memref<8x16xbf16, #tpu.memory_space<vmem>>, vector<8x16xbf16>
    %106 = arith.truncf %42 : vector<32x8xf32> to vector<32x8xbf16>
    %cst_47 = arith.constant dense<0.000000e+00> : vector<32x16xf32>
    %107 = tpu.matmul %106, %105, %cst_47 {dimension_numbers = #tpu.dot_dimension_numbers<[1], [0], [0], [1], [0, 0, 1, 1], [], []>} : vector<32x8xbf16>, vector<8x16xbf16>, vector<32x16xf32> -> vector<32x16xf32>
    %c0_48 = arith.constant 0 : index
    %c0_49 = arith.constant 0 : index
    %108 = vector.load %arg11[%c0_48, %c0_49] : memref<8x16xbf16, #tpu.memory_space<vmem>>, vector<8x16xbf16>
    %109 = arith.truncf %6 : vector<32x8xf32> to vector<32x8xbf16>
    %cst_50 = arith.constant dense<0.000000e+00> : vector<32x16xf32>
    %110 = tpu.matmul %109, %108, %cst_50 {dimension_numbers = #tpu.dot_dimension_numbers<[1], [0], [0], [1], [0, 0, 1, 1], [], []>} : vector<32x8xbf16>, vector<8x16xbf16>, vector<32x16xf32> -> vector<32x16xf32>
    %111 = arith.addf %107, %110 : vector<32x16xf32>
    %112 = tpu.concatenate %56, %72, %88, %104 in 0 : vector<32x8xf32>, vector<32x8xf32>, vector<32x8xf32>, vector<32x8xf32> -> vector<128x8xf32>
    %113 = tpu.concatenate %111, %111, %111, %111 in 0 : vector<32x16xf32>, vector<32x16xf32>, vector<32x16xf32>, vector<32x16xf32> -> vector<128x16xf32>
    %c0_51 = arith.constant 0 : index
    %c0_52 = arith.constant 0 : index
    %114 = vector.load %arg12[%c0_51, %c0_52] : memref<8x16xbf16, #tpu.memory_space<vmem>>, vector<8x16xbf16>
    %115 = arith.truncf %112 : vector<128x8xf32> to vector<128x8xbf16>
    %cst_53 = arith.constant dense<0.000000e+00> : vector<128x16xf32>
    %116 = tpu.matmul %115, %114, %cst_53 {dimension_numbers = #tpu.dot_dimension_numbers<[1], [0], [0], [1], [0, 0, 1, 1], [], []>} : vector<128x8xbf16>, vector<8x16xbf16>, vector<128x16xf32> -> vector<128x16xf32>
    %117 = arith.addf %113, %116 : vector<128x16xf32>
    %cst_54 = arith.constant 0.000000e+00 : f32
    %118 = vector.broadcast %cst_54 : f32 to vector<128x16xf32>
    %119 = arith.maximumf %117, %118 : vector<128x16xf32>
    %c0_55 = arith.constant 0 : index
    %c0_56 = arith.constant 0 : index
    %120 = vector.load %arg13[%c0_55, %c0_56] : memref<16x16xbf16, #tpu.memory_space<vmem>>, vector<16x16xbf16>
    %121 = arith.truncf %119 : vector<128x16xf32> to vector<128x16xbf16>
    %cst_57 = arith.constant dense<0.000000e+00> : vector<128x16xf32>
    %122 = tpu.matmul %121, %120, %cst_57 {dimension_numbers = #tpu.dot_dimension_numbers<[1], [0], [0], [1], [0, 0, 1, 1], [], []>} : vector<128x16xbf16>, vector<16x16xbf16>, vector<128x16xf32> -> vector<128x16xf32>
    %cst_58 = arith.constant 0.000000e+00 : f32
    %123 = vector.broadcast %cst_58 : f32 to vector<128x16xf32>
    %124 = arith.maximumf %122, %123 : vector<128x16xf32>
    %c0_59 = arith.constant 0 : index
    %c0_60 = arith.constant 0 : index
    %125 = vector.load %arg14[%c0_59, %c0_60] : memref<16x32xbf16, #tpu.memory_space<vmem>>, vector<16x32xbf16>
    %126 = arith.truncf %124 : vector<128x16xf32> to vector<128x16xbf16>
    %cst_61 = arith.constant dense<0.000000e+00> : vector<128x32xf32>
    %127 = tpu.matmul %126, %125, %cst_61 {dimension_numbers = #tpu.dot_dimension_numbers<[1], [0], [0], [1], [0, 0, 1, 1], [], []>} : vector<128x16xbf16>, vector<16x32xbf16>, vector<128x32xf32> -> vector<128x32xf32>
    %cst_62 = arith.constant 0.000000e+00 : f32
    %128 = vector.broadcast %cst_62 : f32 to vector<128x32xf32>
    %129 = arith.maximumf %127, %128 : vector<128x32xf32>
    %130 = vector.extract_strided_slice %129 {offsets = [0, 0], sizes = [32, 32], strides = [1, 1]} : vector<128x32xf32> to vector<32x32xf32>
    %131 = vector.extract_strided_slice %129 {offsets = [32, 0], sizes = [32, 32], strides = [1, 1]} : vector<128x32xf32> to vector<32x32xf32>
    %132 = arith.maximumf %130, %131 : vector<32x32xf32>
    %133 = vector.extract_strided_slice %129 {offsets = [64, 0], sizes = [32, 32], strides = [1, 1]} : vector<128x32xf32> to vector<32x32xf32>
    %134 = arith.maximumf %132, %133 : vector<32x32xf32>
    %135 = vector.extract_strided_slice %129 {offsets = [96, 0], sizes = [32, 32], strides = [1, 1]} : vector<128x32xf32> to vector<32x32xf32>
    %136 = arith.maximumf %134, %135 : vector<32x32xf32>
    %c0_63 = arith.constant 0 : index
    %c0_64 = arith.constant 0 : index
    %137 = vector.load %arg15[%c0_63, %c0_64] : memref<8x32xbf16, #tpu.memory_space<vmem>>, vector<8x32xbf16>
    %138 = arith.truncf %6 : vector<32x8xf32> to vector<32x8xbf16>
    %cst_65 = arith.constant dense<0.000000e+00> : vector<32x32xf32>
    %139 = tpu.matmul %138, %137, %cst_65 {dimension_numbers = #tpu.dot_dimension_numbers<[1], [0], [0], [1], [0, 0, 1, 1], [], []>} : vector<32x8xbf16>, vector<8x32xbf16>, vector<32x32xf32> -> vector<32x32xf32>
    %140 = arith.addf %136, %139 : vector<32x32xf32>
    %cst_66 = arith.constant 0.000000e+00 : f32
    %141 = vector.broadcast %cst_66 : f32 to vector<32x32xf32>
    %142 = arith.maximumf %140, %141 : vector<32x32xf32>
    %cst_67 = arith.constant dense<0.000000e+00> : vector<2x32xf32>
    %143 = tpu.matmul %7, %142, %cst_67 {dimension_numbers = #tpu.dot_dimension_numbers<[1], [0], [0], [1], [0, 0, 1, 1], [], []>} : vector<2x32xf32>, vector<32x32xf32>, vector<2x32xf32> -> vector<2x32xf32>
    %c0_68 = arith.constant 0 : index
    %c0_69 = arith.constant 0 : index
    %144 = vector.load %arg16[%c0_68, %c0_69] : memref<8x32xbf16, #tpu.memory_space<vmem>>, vector<8x32xbf16>
    %145 = arith.truncf %17 : vector<2x8xf32> to vector<2x8xbf16>
    %cst_70 = arith.constant dense<0.000000e+00> : vector<2x32xf32>
    %146 = tpu.matmul %145, %144, %cst_70 {dimension_numbers = #tpu.dot_dimension_numbers<[1], [0], [0], [1], [0, 0, 1, 1], [], []>} : vector<2x8xbf16>, vector<8x32xbf16>, vector<2x32xf32> -> vector<2x32xf32>
    %c0_71 = arith.constant 0 : index
    %c0_72 = arith.constant 0 : index
    %147 = vector.load %arg17[%c0_71, %c0_72] : memref<32x32xbf16, #tpu.memory_space<vmem>>, vector<32x32xbf16>
    %148 = arith.truncf %143 : vector<2x32xf32> to vector<2x32xbf16>
    %cst_73 = arith.constant dense<0.000000e+00> : vector<2x32xf32>
    %149 = tpu.matmul %148, %147, %cst_73 {dimension_numbers = #tpu.dot_dimension_numbers<[1], [0], [0], [1], [0, 0, 1, 1], [], []>} : vector<2x32xbf16>, vector<32x32xbf16>, vector<2x32xf32> -> vector<2x32xf32>
    %150 = arith.addf %146, %149 : vector<2x32xf32>
    %c0_74 = arith.constant 0 : index
    %c0_75 = arith.constant 0 : index
    %151 = vector.load %arg18[%c0_74, %c0_75] : memref<1x32xf32, #tpu.memory_space<vmem>>, vector<1x32xf32>
    %152 = vector.broadcast %151 : vector<1x32xf32> to vector<2x32xf32>
    %153 = arith.addf %150, %152 : vector<2x32xf32>
    %cst_76 = arith.constant 0.000000e+00 : f32
    %154 = vector.broadcast %cst_76 : f32 to vector<2x32xf32>
    %155 = arith.maximumf %153, %154 : vector<2x32xf32>
    %cst_77 = arith.constant dense<0.000000e+00> : vector<32x32xf32>
    %156 = tpu.matmul %142, %142, %cst_77 {dimension_numbers = #tpu.dot_dimension_numbers<[1], [1], [0], [0], [0, 0, 1, 0], [], []>} : vector<32x32xf32>, vector<32x32xf32>, vector<32x32xf32> -> vector<32x32xf32>
    %157 = arith.mulf %156, %23 : vector<32x32xf32>
    %cst_78 = arith.constant dense<0.000000e+00> : vector<32xf32>
    %158 = vector.multi_reduction <add>, %157, %cst_78 [0] : vector<32x32xf32> to vector<32xf32>
    %159 = vector.shape_cast %158 : vector<32xf32> to vector<1x32xf32>
    %cst_79 = arith.constant 2.000000e+00 : f32
    %160 = vector.broadcast %cst_79 : f32 to vector<32x32xf32>
    %161 = arith.mulf %160, %156 : vector<32x32xf32>
    %162 = vector.broadcast %159 : vector<1x32xf32> to vector<32x32xf32>
    %163 = arith.subf %162, %161 : vector<32x32xf32>
    %cst_80 = arith.constant 1.000000e+30 : f32
    %164 = vector.broadcast %cst_80 : f32 to vector<32x32xf32>
    %165 = arith.select %30, %163, %164 : vector<32x32xi1>, vector<32x32xf32>
    %cst_81 = arith.constant dense<0.000000e+00> : vector<32x32xf32>
    %166 = tpu.matmul %8, %155, %cst_81 {dimension_numbers = #tpu.dot_dimension_numbers<[1], [0], [0], [1], [0, 0, 1, 1], [], []>} : vector<32x2xf32>, vector<2x32xf32>, vector<32x32xf32> -> vector<32x32xf32>
    %cst_82 = arith.constant dense<0x7F800000> : vector<32xf32>
    %167 = vector.multi_reduction <minimumf>, %165, %cst_82 [1] : vector<32x32xf32> to vector<32xf32>
    %168 = vector.shape_cast %167 : vector<32xf32> to vector<32x1xf32>
    %169 = vector.broadcast %168 : vector<32x1xf32> to vector<32x32xf32>
    %170 = arith.cmpf oeq, %165, %169 : vector<32x32xf32>
    %cst_83 = arith.constant 1.000000e+09 : f32
    %171 = vector.broadcast %cst_83 : f32 to vector<32x32xf32>
    %172 = arith.select %170, %20, %171 : vector<32x32xi1>, vector<32x32xf32>
    %cst_84 = arith.constant dense<0x7F800000> : vector<32xf32>
    %173 = vector.multi_reduction <minimumf>, %172, %cst_84 [1] : vector<32x32xf32> to vector<32xf32>
    %174 = vector.shape_cast %173 : vector<32xf32> to vector<32x1xf32>
    %175 = vector.broadcast %174 : vector<32x1xf32> to vector<32x32xf32>
    %176 = arith.cmpf oeq, %20, %175 : vector<32x32xf32>
    %177 = arith.extui %176 : vector<32x32xi1> to vector<32x32xi32>
    %178 = arith.sitofp %177 : vector<32x32xi32> to vector<32x32xf32>
    %cst_85 = arith.constant dense<0.000000e+00> : vector<32x32xf32>
    %179 = tpu.matmul %178, %142, %cst_85 {dimension_numbers = #tpu.dot_dimension_numbers<[1], [0], [0], [1], [0, 0, 1, 1], [], []>} : vector<32x32xf32>, vector<32x32xf32>, vector<32x32xf32> -> vector<32x32xf32>
    %180 = arith.subf %179, %142 : vector<32x32xf32>
    %cst_86 = arith.constant 1.000000e+30 : f32
    %181 = vector.broadcast %cst_86 : f32 to vector<32x32xf32>
    %182 = arith.select %176, %181, %165 : vector<32x32xi1>, vector<32x32xf32>
    %cst_87 = arith.constant dense<0x7F800000> : vector<32xf32>
    %183 = vector.multi_reduction <minimumf>, %182, %cst_87 [1] : vector<32x32xf32> to vector<32xf32>
    %184 = vector.shape_cast %183 : vector<32xf32> to vector<32x1xf32>
    %185 = vector.broadcast %184 : vector<32x1xf32> to vector<32x32xf32>
    %186 = arith.cmpf oeq, %182, %185 : vector<32x32xf32>
    %cst_88 = arith.constant 1.000000e+09 : f32
    %187 = vector.broadcast %cst_88 : f32 to vector<32x32xf32>
    %188 = arith.select %186, %20, %187 : vector<32x32xi1>, vector<32x32xf32>
    %cst_89 = arith.constant dense<0x7F800000> : vector<32xf32>
    %189 = vector.multi_reduction <minimumf>, %188, %cst_89 [1] : vector<32x32xf32> to vector<32xf32>
    %190 = vector.shape_cast %189 : vector<32xf32> to vector<32x1xf32>
    %191 = vector.broadcast %190 : vector<32x1xf32> to vector<32x32xf32>
    %192 = arith.cmpf oeq, %20, %191 : vector<32x32xf32>
    %193 = arith.extui %192 : vector<32x32xi1> to vector<32x32xi32>
    %194 = arith.sitofp %193 : vector<32x32xi32> to vector<32x32xf32>
    %cst_90 = arith.constant dense<0.000000e+00> : vector<32x32xf32>
    %195 = tpu.matmul %194, %142, %cst_90 {dimension_numbers = #tpu.dot_dimension_numbers<[1], [0], [0], [1], [0, 0, 1, 1], [], []>} : vector<32x32xf32>, vector<32x32xf32>, vector<32x32xf32> -> vector<32x32xf32>
    %196 = arith.subf %195, %142 : vector<32x32xf32>
    %cst_91 = arith.constant 1.000000e+30 : f32
    %197 = vector.broadcast %cst_91 : f32 to vector<32x32xf32>
    %198 = arith.select %192, %197, %182 : vector<32x32xi1>, vector<32x32xf32>
    %cst_92 = arith.constant dense<0x7F800000> : vector<32xf32>
    %199 = vector.multi_reduction <minimumf>, %198, %cst_92 [1] : vector<32x32xf32> to vector<32xf32>
    %200 = vector.shape_cast %199 : vector<32xf32> to vector<32x1xf32>
    %201 = vector.broadcast %200 : vector<32x1xf32> to vector<32x32xf32>
    %202 = arith.cmpf oeq, %198, %201 : vector<32x32xf32>
    %cst_93 = arith.constant 1.000000e+09 : f32
    %203 = vector.broadcast %cst_93 : f32 to vector<32x32xf32>
    %204 = arith.select %202, %20, %203 : vector<32x32xi1>, vector<32x32xf32>
    %cst_94 = arith.constant dense<0x7F800000> : vector<32xf32>
    %205 = vector.multi_reduction <minimumf>, %204, %cst_94 [1] : vector<32x32xf32> to vector<32xf32>
    %206 = vector.shape_cast %205 : vector<32xf32> to vector<32x1xf32>
    %207 = vector.broadcast %206 : vector<32x1xf32> to vector<32x32xf32>
    %208 = arith.cmpf oeq, %20, %207 : vector<32x32xf32>
    %209 = arith.extui %208 : vector<32x32xi1> to vector<32x32xi32>
    %210 = arith.sitofp %209 : vector<32x32xi32> to vector<32x32xf32>
    %cst_95 = arith.constant dense<0.000000e+00> : vector<32x32xf32>
    %211 = tpu.matmul %210, %142, %cst_95 {dimension_numbers = #tpu.dot_dimension_numbers<[1], [0], [0], [1], [0, 0, 1, 1], [], []>} : vector<32x32xf32>, vector<32x32xf32>, vector<32x32xf32> -> vector<32x32xf32>
    %212 = arith.subf %211, %142 : vector<32x32xf32>
    %cst_96 = arith.constant 1.000000e+30 : f32
    %213 = vector.broadcast %cst_96 : f32 to vector<32x32xf32>
    %214 = arith.select %208, %213, %198 : vector<32x32xi1>, vector<32x32xf32>
    %cst_97 = arith.constant dense<0x7F800000> : vector<32xf32>
    %215 = vector.multi_reduction <minimumf>, %214, %cst_97 [1] : vector<32x32xf32> to vector<32xf32>
    %216 = vector.shape_cast %215 : vector<32xf32> to vector<32x1xf32>
    %217 = vector.broadcast %216 : vector<32x1xf32> to vector<32x32xf32>
    %218 = arith.cmpf oeq, %214, %217 : vector<32x32xf32>
    %cst_98 = arith.constant 1.000000e+09 : f32
    %219 = vector.broadcast %cst_98 : f32 to vector<32x32xf32>
    %220 = arith.select %218, %20, %219 : vector<32x32xi1>, vector<32x32xf32>
    %cst_99 = arith.constant dense<0x7F800000> : vector<32xf32>
    %221 = vector.multi_reduction <minimumf>, %220, %cst_99 [1] : vector<32x32xf32> to vector<32xf32>
    %222 = vector.shape_cast %221 : vector<32xf32> to vector<32x1xf32>
    %223 = vector.broadcast %222 : vector<32x1xf32> to vector<32x32xf32>
    %224 = arith.cmpf oeq, %20, %223 : vector<32x32xf32>
    %225 = arith.extui %224 : vector<32x32xi1> to vector<32x32xi32>
    %226 = arith.sitofp %225 : vector<32x32xi32> to vector<32x32xf32>
    %cst_100 = arith.constant dense<0.000000e+00> : vector<32x32xf32>
    %227 = tpu.matmul %226, %142, %cst_100 {dimension_numbers = #tpu.dot_dimension_numbers<[1], [0], [0], [1], [0, 0, 1, 1], [], []>} : vector<32x32xf32>, vector<32x32xf32>, vector<32x32xf32> -> vector<32x32xf32>
    %228 = arith.subf %227, %142 : vector<32x32xf32>
    %c0_101 = arith.constant 0 : index
    %c0_102 = arith.constant 0 : index
    %229 = vector.load %arg19[%c0_101, %c0_102] : memref<32x32xbf16, #tpu.memory_space<vmem>>, vector<32x32xbf16>
    %230 = arith.truncf %166 : vector<32x32xf32> to vector<32x32xbf16>
    %cst_103 = arith.constant dense<0.000000e+00> : vector<32x32xf32>
    %231 = tpu.matmul %230, %229, %cst_103 {dimension_numbers = #tpu.dot_dimension_numbers<[1], [0], [0], [1], [0, 0, 1, 1], [], []>} : vector<32x32xbf16>, vector<32x32xbf16>, vector<32x32xf32> -> vector<32x32xf32>
    %c0_104 = arith.constant 0 : index
    %c0_105 = arith.constant 0 : index
    %232 = vector.load %arg20[%c0_104, %c0_105] : memref<32x32xbf16, #tpu.memory_space<vmem>>, vector<32x32xbf16>
    %233 = arith.truncf %142 : vector<32x32xf32> to vector<32x32xbf16>
    %cst_106 = arith.constant dense<0.000000e+00> : vector<32x32xf32>
    %234 = tpu.matmul %233, %232, %cst_106 {dimension_numbers = #tpu.dot_dimension_numbers<[1], [0], [0], [1], [0, 0, 1, 1], [], []>} : vector<32x32xbf16>, vector<32x32xbf16>, vector<32x32xf32> -> vector<32x32xf32>
    %235 = arith.addf %231, %234 : vector<32x32xf32>
    %236 = tpu.concatenate %180, %196, %212, %228 in 0 : vector<32x32xf32>, vector<32x32xf32>, vector<32x32xf32>, vector<32x32xf32> -> vector<128x32xf32>
    %237 = tpu.concatenate %235, %235, %235, %235 in 0 : vector<32x32xf32>, vector<32x32xf32>, vector<32x32xf32>, vector<32x32xf32> -> vector<128x32xf32>
    %c0_107 = arith.constant 0 : index
    %c0_108 = arith.constant 0 : index
    %238 = vector.load %arg21[%c0_107, %c0_108] : memref<32x32xbf16, #tpu.memory_space<vmem>>, vector<32x32xbf16>
    %239 = arith.truncf %236 : vector<128x32xf32> to vector<128x32xbf16>
    %cst_109 = arith.constant dense<0.000000e+00> : vector<128x32xf32>
    %240 = tpu.matmul %239, %238, %cst_109 {dimension_numbers = #tpu.dot_dimension_numbers<[1], [0], [0], [1], [0, 0, 1, 1], [], []>} : vector<128x32xbf16>, vector<32x32xbf16>, vector<128x32xf32> -> vector<128x32xf32>
    %241 = arith.addf %237, %240 : vector<128x32xf32>
    %cst_110 = arith.constant 0.000000e+00 : f32
    %242 = vector.broadcast %cst_110 : f32 to vector<128x32xf32>
    %243 = arith.maximumf %241, %242 : vector<128x32xf32>
    %c0_111 = arith.constant 0 : index
    %c0_112 = arith.constant 0 : index
    %244 = vector.load %arg22[%c0_111, %c0_112] : memref<32x32xbf16, #tpu.memory_space<vmem>>, vector<32x32xbf16>
    %245 = arith.truncf %243 : vector<128x32xf32> to vector<128x32xbf16>
    %cst_113 = arith.constant dense<0.000000e+00> : vector<128x32xf32>
    %246 = tpu.matmul %245, %244, %cst_113 {dimension_numbers = #tpu.dot_dimension_numbers<[1], [0], [0], [1], [0, 0, 1, 1], [], []>} : vector<128x32xbf16>, vector<32x32xbf16>, vector<128x32xf32> -> vector<128x32xf32>
    %cst_114 = arith.constant 0.000000e+00 : f32
    %247 = vector.broadcast %cst_114 : f32 to vector<128x32xf32>
    %248 = arith.maximumf %246, %247 : vector<128x32xf32>
    %c0_115 = arith.constant 0 : index
    %c0_116 = arith.constant 0 : index
    %249 = vector.load %arg23[%c0_115, %c0_116] : memref<32x32xbf16, #tpu.memory_space<vmem>>, vector<32x32xbf16>
    %250 = arith.truncf %248 : vector<128x32xf32> to vector<128x32xbf16>
    %cst_117 = arith.constant dense<0.000000e+00> : vector<128x32xf32>
    %251 = tpu.matmul %250, %249, %cst_117 {dimension_numbers = #tpu.dot_dimension_numbers<[1], [0], [0], [1], [0, 0, 1, 1], [], []>} : vector<128x32xbf16>, vector<32x32xbf16>, vector<128x32xf32> -> vector<128x32xf32>
    %cst_118 = arith.constant 0.000000e+00 : f32
    %252 = vector.broadcast %cst_118 : f32 to vector<128x32xf32>
    %253 = arith.maximumf %251, %252 : vector<128x32xf32>
    %254 = vector.extract_strided_slice %253 {offsets = [0, 0], sizes = [32, 32], strides = [1, 1]} : vector<128x32xf32> to vector<32x32xf32>
    %255 = vector.extract_strided_slice %253 {offsets = [32, 0], sizes = [32, 32], strides = [1, 1]} : vector<128x32xf32> to vector<32x32xf32>
    %256 = arith.maximumf %254, %255 : vector<32x32xf32>
    %257 = vector.extract_strided_slice %253 {offsets = [64, 0], sizes = [32, 32], strides = [1, 1]} : vector<128x32xf32> to vector<32x32xf32>
    %258 = arith.maximumf %256, %257 : vector<32x32xf32>
    %259 = vector.extract_strided_slice %253 {offsets = [96, 0], sizes = [32, 32], strides = [1, 1]} : vector<128x32xf32> to vector<32x32xf32>
    %260 = arith.maximumf %258, %259 : vector<32x32xf32>
    %c0_119 = arith.constant 0 : index
    %c0_120 = arith.constant 0 : index
    %261 = vector.load %arg24[%c0_119, %c0_120] : memref<32x32xbf16, #tpu.memory_space<vmem>>, vector<32x32xbf16>
    %262 = arith.truncf %142 : vector<32x32xf32> to vector<32x32xbf16>
    %cst_121 = arith.constant dense<0.000000e+00> : vector<32x32xf32>
    %263 = tpu.matmul %262, %261, %cst_121 {dimension_numbers = #tpu.dot_dimension_numbers<[1], [0], [0], [1], [0, 0, 1, 1], [], []>} : vector<32x32xbf16>, vector<32x32xbf16>, vector<32x32xf32> -> vector<32x32xf32>
    %264 = arith.addf %260, %263 : vector<32x32xf32>
    %cst_122 = arith.constant 0.000000e+00 : f32
    %265 = vector.broadcast %cst_122 : f32 to vector<32x32xf32>
    %266 = arith.maximumf %264, %265 : vector<32x32xf32>
    %cst_123 = arith.constant dense<0.000000e+00> : vector<2x32xf32>
    %267 = tpu.matmul %7, %266, %cst_123 {dimension_numbers = #tpu.dot_dimension_numbers<[1], [0], [0], [1], [0, 0, 1, 1], [], []>} : vector<2x32xf32>, vector<32x32xf32>, vector<2x32xf32> -> vector<2x32xf32>
    %c0_124 = arith.constant 0 : index
    %c0_125 = arith.constant 0 : index
    %268 = vector.load %arg25[%c0_124, %c0_125] : memref<32x32xbf16, #tpu.memory_space<vmem>>, vector<32x32xbf16>
    %269 = arith.truncf %155 : vector<2x32xf32> to vector<2x32xbf16>
    %cst_126 = arith.constant dense<0.000000e+00> : vector<2x32xf32>
    %270 = tpu.matmul %269, %268, %cst_126 {dimension_numbers = #tpu.dot_dimension_numbers<[1], [0], [0], [1], [0, 0, 1, 1], [], []>} : vector<2x32xbf16>, vector<32x32xbf16>, vector<2x32xf32> -> vector<2x32xf32>
    %c0_127 = arith.constant 0 : index
    %c0_128 = arith.constant 0 : index
    %271 = vector.load %arg26[%c0_127, %c0_128] : memref<32x32xbf16, #tpu.memory_space<vmem>>, vector<32x32xbf16>
    %272 = arith.truncf %267 : vector<2x32xf32> to vector<2x32xbf16>
    %cst_129 = arith.constant dense<0.000000e+00> : vector<2x32xf32>
    %273 = tpu.matmul %272, %271, %cst_129 {dimension_numbers = #tpu.dot_dimension_numbers<[1], [0], [0], [1], [0, 0, 1, 1], [], []>} : vector<2x32xbf16>, vector<32x32xbf16>, vector<2x32xf32> -> vector<2x32xf32>
    %274 = arith.addf %270, %273 : vector<2x32xf32>
    %c0_130 = arith.constant 0 : index
    %c0_131 = arith.constant 0 : index
    %275 = vector.load %arg27[%c0_130, %c0_131] : memref<1x32xf32, #tpu.memory_space<vmem>>, vector<1x32xf32>
    %276 = vector.broadcast %275 : vector<1x32xf32> to vector<2x32xf32>
    %277 = arith.addf %274, %276 : vector<2x32xf32>
    %cst_132 = arith.constant 0.000000e+00 : f32
    %278 = vector.broadcast %cst_132 : f32 to vector<2x32xf32>
    %279 = arith.maximumf %277, %278 : vector<2x32xf32>
    %c0_133 = arith.constant 0 : index
    %c0_134 = arith.constant 0 : index
    %280 = vector.load %arg28[%c0_133, %c0_134] : memref<32x32xbf16, #tpu.memory_space<vmem>>, vector<32x32xbf16>
    %281 = arith.truncf %279 : vector<2x32xf32> to vector<2x32xbf16>
    %cst_135 = arith.constant dense<0.000000e+00> : vector<2x32xf32>
    %282 = tpu.matmul %281, %280, %cst_135 {dimension_numbers = #tpu.dot_dimension_numbers<[1], [0], [0], [1], [0, 0, 1, 1], [], []>} : vector<2x32xbf16>, vector<32x32xbf16>, vector<2x32xf32> -> vector<2x32xf32>
    %c0_136 = arith.constant 0 : index
    %c0_137 = arith.constant 0 : index
    %283 = vector.load %arg29[%c0_136, %c0_137] : memref<1x32xf32, #tpu.memory_space<vmem>>, vector<1x32xf32>
    %284 = vector.broadcast %283 : vector<1x32xf32> to vector<2x32xf32>
    %285 = arith.addf %282, %284 : vector<2x32xf32>
    %cst_138 = arith.constant 0.000000e+00 : f32
    %286 = vector.broadcast %cst_138 : f32 to vector<2x32xf32>
    %287 = arith.maximumf %285, %286 : vector<2x32xf32>
    %c0_139 = arith.constant 0 : index
    %c0_140 = arith.constant 0 : index
    %288 = vector.load %arg30[%c0_139, %c0_140] : memref<32x16xbf16, #tpu.memory_space<vmem>>, vector<32x16xbf16>
    %289 = arith.truncf %287 : vector<2x32xf32> to vector<2x32xbf16>
    %cst_141 = arith.constant dense<0.000000e+00> : vector<2x16xf32>
    %290 = tpu.matmul %289, %288, %cst_141 {dimension_numbers = #tpu.dot_dimension_numbers<[1], [0], [0], [1], [0, 0, 1, 1], [], []>} : vector<2x32xbf16>, vector<32x16xbf16>, vector<2x16xf32> -> vector<2x16xf32>
    %c0_142 = arith.constant 0 : index
    %c0_143 = arith.constant 0 : index
    %291 = vector.load %arg31[%c0_142, %c0_143] : memref<1x16xf32, #tpu.memory_space<vmem>>, vector<1x16xf32>
    %292 = vector.broadcast %291 : vector<1x16xf32> to vector<2x16xf32>
    %293 = arith.addf %290, %292 : vector<2x16xf32>
    %cst_144 = arith.constant 0.000000e+00 : f32
    %294 = vector.broadcast %cst_144 : f32 to vector<2x16xf32>
    %295 = arith.maximumf %293, %294 : vector<2x16xf32>
    %c0_145 = arith.constant 0 : index
    %c0_146 = arith.constant 0 : index
    %296 = vector.load %arg32[%c0_145, %c0_146] : memref<16x4xbf16, #tpu.memory_space<vmem>>, vector<16x4xbf16>
    %297 = arith.truncf %295 : vector<2x16xf32> to vector<2x16xbf16>
    %cst_147 = arith.constant dense<0.000000e+00> : vector<2x4xf32>
    %298 = tpu.matmul %297, %296, %cst_147 {dimension_numbers = #tpu.dot_dimension_numbers<[1], [0], [0], [1], [0, 0, 1, 1], [], []>} : vector<2x16xbf16>, vector<16x4xbf16>, vector<2x4xf32> -> vector<2x4xf32>
    %c0_148 = arith.constant 0 : index
    %c0_149 = arith.constant 0 : index
    %299 = vector.load %arg33[%c0_148, %c0_149] : memref<1x4xf32, #tpu.memory_space<vmem>>, vector<1x4xf32>
    %300 = vector.broadcast %299 : vector<1x4xf32> to vector<2x4xf32>
    %301 = arith.addf %298, %300 : vector<2x4xf32>
    %c0_150 = arith.constant 0 : index
    %c0_151 = arith.constant 0 : index
    %302 = vector.load %arg34[%c0_150, %c0_151] : memref<2x4xf32, #tpu.memory_space<vmem>>, vector<2x4xf32>
    tpu.vector_store %arg34[%c0_150, %c0_151], %301 {strides = array<i32>} : memref<2x4xf32, #tpu.memory_space<vmem>>, vector<2x4xf32>,
    return
  }
}

</mosaic_0001>

<llo_original>
// kernel: trident_forward.1
$region0: #{trident_forward.1}
  #allocation0 [shape = 'u32[]', space=smem, size = 0x4, offset = 0x4, fixed_abs, tag = 'smem constant byte address 0x4 - core index']
  #allocation1 [shape = 'u32[144,128]{1,0:T(1,128)}', space=vmem, size = 0x12000, scoped, tag = 'internal scratch']
  %s0 = inlined_call_operand.smem [shape: u32[35], index: -1, kind: input, shape index: {}]
  %s1 = sld [smem:[%s0]]
  %s2 = scalar_lea.smem %s0, 1
  %s3 = sld [smem:[%s2]]
  %s4 = scalar_lea.smem %s0, 2
  %s5 = sld [smem:[%s4]]
  %s6 = scalar_lea.smem %s0, 3
  %s7 = sld [smem:[%s6]]
  %s8 = scalar_lea.smem %s0, 4
  %s9 = sld [smem:[%s8]]
  %s10 = scalar_lea.smem %s0, 5
  %s11 = sld [smem:[%s10]]
  %s12 = scalar_lea.smem %s0, 6
  %s13 = sld [smem:[%s12]]
  %s14 = scalar_lea.smem %s0, 7
  %s15 = sld [smem:[%s14]]
  %s16 = scalar_lea.smem %s0, 8
  %s17 = sld [smem:[%s16]]
  %s18 = scalar_lea.smem %s0, 9
  %s19 = sld [smem:[%s18]]
  %s20 = scalar_lea.smem %s0, 10
  %s21 = sld [smem:[%s20]]
  %s22 = scalar_lea.smem %s0, 11
  %s23 = sld [smem:[%s22]]
  %s24 = scalar_lea.smem %s0, 12
  %s25 = sld [smem:[%s24]]
  %s26 = scalar_lea.smem %s0, 13
  %s27 = sld [smem:[%s26]]
  %s28 = scalar_lea.smem %s0, 14
  %s29 = sld [smem:[%s28]]
  %s30 = scalar_lea.smem %s0, 15
  %s31 = sld [smem:[%s30]]
  %s32 = scalar_lea.smem %s0, 16
  %s33 = sld [smem:[%s32]]
  %s34 = scalar_lea.smem %s0, 17
  %s35 = sld [smem:[%s34]]
  %s36 = scalar_lea.smem %s0, 18
  %s37 = sld [smem:[%s36]]
  %s38 = scalar_lea.smem %s0, 19
  %s39 = sld [smem:[%s38]]
  %s40 = scalar_lea.smem %s0, 20
  %s41 = sld [smem:[%s40]]
  %s42 = scalar_lea.smem %s0, 21
  %s43 = sld [smem:[%s42]]
  %s44 = scalar_lea.smem %s0, 22
  %s45 = sld [smem:[%s44]]
  %s46 = scalar_lea.smem %s0, 23
  %s47 = sld [smem:[%s46]]
  %s48 = scalar_lea.smem %s0, 24
  %s49 = sld [smem:[%s48]]
  %s50 = scalar_lea.smem %s0, 25
  %s51 = sld [smem:[%s50]]
  %s52 = scalar_lea.smem %s0, 26
  %s53 = sld [smem:[%s52]]
  %s54 = scalar_lea.smem %s0, 27
  %s55 = sld [smem:[%s54]]
  %s56 = scalar_lea.smem %s0, 28
  %s57 = sld [smem:[%s56]]
  %s58 = scalar_lea.smem %s0, 29
  %s59 = sld [smem:[%s58]]
  %s60 = scalar_lea.smem %s0, 30
  %s61 = sld [smem:[%s60]]
  %s62 = scalar_lea.smem %s0, 31
  %s63 = sld [smem:[%s62]]
  %s64 = scalar_lea.smem %s0, 32
  %s65 = sld [smem:[%s64]]
  %s66 = scalar_lea.smem %s0, 33
  %s67 = sld [smem:[%s66]]
  %s68 = scalar_lea.smem %s0, 34
  %s69 = sld [smem:[%s68]]
  %s70 = sld [smem:[#allocation0]]
  $region154: #{trident_forward.1} parent=0
    _
  %s72 = ssub.s32 1, %s70
  %s73 = scalar_select 0, %s72, %s70
  $region1: #{trident_forward.1} parent=0
    #allocation2 [shape = 'u8[2048]{0}', space=vmem, size = 0x800, scoped, tag = 'input window, operand 10, single buffered']
    #allocation3 [shape = 's32[1]{0}', space=sflag, size = 0x4, scoped, tag = 'scoped memory for trident_forward.1']
    #allocation4 [shape = 's32[1]{0}', space=sflag, size = 0x4, scoped, tag = 'scoped memory for trident_forward.1']
    #allocation5 [shape = 'u8[512]{0}', space=vmem, size = 0x400, scoped, tag = 'input window, operand 18, single buffered']
    #allocation6 [shape = 's32[1]{0}', space=sflag, size = 0x4, scoped, tag = 'scoped memory for trident_forward.1']
    #allocation7 [shape = 'u8[1024]{0}', space=vmem, size = 0x400, scoped, tag = 'output window, operand 0, single buffered']
    %74 = vsyncpa [#allocation3], 0
    %75 = vsyncpa [#allocation6], 0
    %76 = vsyncpa [#allocation4], 0
    // Predicated region
    $region2: #{trident_forward.1} parent=1 // pred_check
      _
    $region3: #{trident_forward.1} parent=1 // pred_check_branch
      %78 = sbr.rel (0) target = $region5
    $region4: #{trident_forward.1} parent=1 // pred_region
      _
    $region5: #{trident_forward.1} parent=1 // pred_fallthru
      _
    // Predicated region
    $region6: #{trident_forward.1} parent=1 // pred_check
      _
    $region7: #{trident_forward.1} parent=1 // pred_check_branch
      %80 = sbr.rel (0) target = $region9
    $region8: #{trident_forward.1} parent=1 // pred_region
      _
    $region9: #{trident_forward.1} parent=1 // pred_fallthru
      _
    // Predicated region
    $region10: #{trident_forward.1} parent=1 // pred_check
      _
    $region11: #{trident_forward.1} parent=1 // pred_check_branch
      %82 = sbr.rel (0) target = $region13
    $region12: #{trident_forward.1} parent=1 // pred_region
      _
    $region13: #{trident_forward.1} parent=1 // pred_fallthru
      _
    // Predicated region
    $region14: #{trident_forward.1} parent=1 // pred_check
      _
    $region15: #{trident_forward.1} parent=1 // pred_check_branch
      %84 = sbr.rel (0) target = $region17
    $region16: #{trident_forward.1} parent=1 // pred_region
      _
    $region17: #{trident_forward.1} parent=1 // pred_fallthru
      _
    // Predicated region
    $region18: #{trident_forward.1} parent=1 // pred_check
      _
    $region19: #{trident_forward.1} parent=1 // pred_check_branch
      %86 = sbr.rel (0) target = $region21
    $region20: #{trident_forward.1} parent=1 // pred_region
      _
    $region21: #{trident_forward.1} parent=1 // pred_fallthru
      _
    // Predicated region
    $region22: #{trident_forward.1} parent=1 // pred_check
      _
    $region23: #{trident_forward.1} parent=1 // pred_check_branch
      %88 = sbr.rel (0) target = $region25
    $region24: #{trident_forward.1} parent=1 // pred_region
      _
    $region25: #{trident_forward.1} parent=1 // pred_fallthru
      _
    // Predicated region
    $region26: #{trident_forward.1} parent=1 // pred_check
      _
    $region27: #{trident_forward.1} parent=1 // pred_check_branch
      %90 = sbr.rel (0) target = $region29
    $region28: #{trident_forward.1} parent=1 // pred_region
      _
    $region29: #{trident_forward.1} parent=1 // pred_fallthru
      _
    // Predicated region
    $region30: #{trident_forward.1} parent=1 // pred_check
      _
    $region31: #{trident_forward.1} parent=1 // pred_check_branch
      %92 = sbr.rel (0) target = $region33
    $region32: #{trident_forward.1} parent=1 // pred_region
      _
    $region33: #{trident_forward.1} parent=1 // pred_fallthru
      _
    // Predicated region
    $region34: #{trident_forward.1} parent=1 // pred_check
      _
    $region35: #{trident_forward.1} parent=1 // pred_check_branch
      %94 = sbr.rel (0) target = $region37
    $region36: #{trident_forward.1} parent=1 // pred_region
      _
    $region37: #{trident_forward.1} parent=1 // pred_fallthru
      _
    // Predicated region
    $region38: #{trident_forward.1} parent=1 // pred_check
      _
    $region39: #{trident_forward.1} parent=1 // pred_check_branch
      %96 = sbr.rel (0) target = $region41
    $region40: #{trident_forward.1} parent=1 // pred_region
      _
    $region41: #{trident_forward.1} parent=1 // pred_fallthru
      _
    // Predicated region
    $region42: #{trident_forward.1} parent=1 // pred_check
      _
    $region43: #{trident_forward.1} parent=1 // pred_check_branch
      %98 = sbr.rel (0) target = $region45
    $region44: #{trident_forward.1} parent=1 // pred_region
      %s100 = ssub.s32 64, 64
      %101 = vsyncadd [#allocation3], %s100
      %s103 = sshll.u32 [#allocation2], 4
      %s104 = int_to_ptr.vmem [resolvable:$true] %s103
      %106 = dma.hbm_to_vmem [thread:$0]  %s21, 64, %s104, [#allocation3]
    $region45: #{trident_forward.1} parent=1 // pred_fallthru
      _
    // Predicated region
    $region46: #{trident_forward.1} parent=1 // pred_check
      _
    $region47: #{trident_forward.1} parent=1 // pred_check_branch
      %108 = sbr.rel (0) target = $region49
    $region48: #{trident_forward.1} parent=1 // pred_region
      _
    $region49: #{trident_forward.1} parent=1 // pred_fallthru
      _
    // Predicated region
    $region50: #{trident_forward.1} parent=1 // pred_check
      _
    $region51: #{trident_forward.1} parent=1 // pred_check_branch
      %110 = sbr.rel (0) target = $region53
    $region52: #{trident_forward.1} parent=1 // pred_region
      _
    $region53: #{trident_forward.1} parent=1 // pred_fallthru
      _
    // Predicated region
    $region54: #{trident_forward.1} parent=1 // pred_check
      _
    $region55: #{trident_forward.1} parent=1 // pred_check_branch
      %112 = sbr.rel (0) target = $region57
    $region56: #{trident_forward.1} parent=1 // pred_region
      _
    $region57: #{trident_forward.1} parent=1 // pred_fallthru
      _
    // Predicated region
    $region58: #{trident_forward.1} parent=1 // pred_check
      _
    $region59: #{trident_forward.1} parent=1 // pred_check_branch
      %114 = sbr.rel (0) target = $region61
    $region60: #{trident_forward.1} parent=1 // pred_region
      _
    $region61: #{trident_forward.1} parent=1 // pred_fallthru
      _
    // Predicated region
    $region62: #{trident_forward.1} parent=1 // pred_check
      _
    $region63: #{trident_forward.1} parent=1 // pred_check_branch
      %116 = sbr.rel (0) target = $region65
    $region64: #{trident_forward.1} parent=1 // pred_region
      _
    $region65: #{trident_forward.1} parent=1 // pred_fallthru
      _
    // Predicated region
    $region66: #{trident_forward.1} parent=1 // pred_check
      _
    $region67: #{trident_forward.1} parent=1 // pred_check_branch
      %118 = sbr.rel (0) target = $region69
    $region68: #{trident_forward.1} parent=1 // pred_region
      _
    $region69: #{trident_forward.1} parent=1 // pred_fallthru
      _
    // Predicated region
    $region70: #{trident_forward.1} parent=1 // pred_check
      _
    $region71: #{trident_forward.1} parent=1 // pred_check_branch
      %120 = sbr.rel (0) target = $region73
    $region72: #{trident_forward.1} parent=1 // pred_region
      _
    $region73: #{trident_forward.1} parent=1 // pred_fallthru
      _
    // Predicated region
    $region74: #{trident_forward.1} parent=1 // pred_check
      _
    $region75: #{trident_forward.1} parent=1 // pred_check_branch
      %122 = sbr.rel (0) target = $region77
    $region76: #{trident_forward.1} parent=1 // pred_region
      %s124 = ssub.s32 16, 16
      %125 = vsyncadd [#allocation6], %s124
      %s127 = sshll.u32 [#allocation5], 4
      %s128 = int_to_ptr.vmem [resolvable:$true] %s127
      %130 = dma.hbm_to_vmem [thread:$0]  %s37, 16, %s128, [#allocation6]
    $region77: #{trident_forward.1} parent=1 // pred_fallthru
      _
    // Predicated region
    $region78: #{trident_forward.1} parent=1 // pred_check
      _
    $region79: #{trident_forward.1} parent=1 // pred_check_branch
      %132 = sbr.rel (0) target = $region81
    $region80: #{trident_forward.1} parent=1 // pred_region
      _
    $region81: #{trident_forward.1} parent=1 // pred_fallthru
      _
    // Predicated region
    $region82: #{trident_forward.1} parent=1 // pred_check
      _
    $region83: #{trident_forward.1} parent=1 // pred_check_branch
      %134 = sbr.rel (0) target = $region85
    $region84: #{trident_forward.1} parent=1 // pred_region
      _
    $region85: #{trident_forward.1} parent=1 // pred_fallthru
      _
    // Predicated region
    $region86: #{trident_forward.1} parent=1 // pred_check
      _
    $region87: #{trident_forward.1} parent=1 // pred_check_branch
      %136 = sbr.rel (0) target = $region89
    $region88: #{trident_forward.1} parent=1 // pred_region
      _
    $region89: #{trident_forward.1} parent=1 // pred_fallthru
      _
    // Predicated region
    $region90: #{trident_forward.1} parent=1 // pred_check
      _
    $region91: #{trident_forward.1} parent=1 // pred_check_branch
      %138 = sbr.rel (0) target = $region93
    $region92: #{trident_forward.1} parent=1 // pred_region
      _
    $region93: #{trident_forward.1} parent=1 // pred_fallthru
      _
    // Predicated region
    $region94: #{trident_forward.1} parent=1 // pred_check
      _
    $region95: #{trident_forward.1} parent=1 // pred_check_branch
      %140 = sbr.rel (0) target = $region97
    $region96: #{trident_forward.1} parent=1 // pred_region
      _
    $region97: #{trident_forward.1} parent=1 // pred_fallthru
      _
    // Predicated region
    $region98: #{trident_forward.1} parent=1 // pred_check
      _
    $region99: #{trident_forward.1} parent=1 // pred_check_branch
      %142 = sbr.rel (0) target = $region101
    $region100: #{trident_forward.1} parent=1 // pred_region
      _
    $region101: #{trident_forward.1} parent=1 // pred_fallthru
      _
    // Predicated region
    $region102: #{trident_forward.1} parent=1 // pred_check
      _
    $region103: #{trident_forward.1} parent=1 // pred_check_branch
      %144 = sbr.rel (0) target = $region105
    $region104: #{trident_forward.1} parent=1 // pred_region
      _
    $region105: #{trident_forward.1} parent=1 // pred_fallthru
      _
    // Predicated region
    $region106: #{trident_forward.1} parent=1 // pred_check
      _
    $region107: #{trident_forward.1} parent=1 // pred_check_branch
      %146 = sbr.rel (0) target = $region109
    $region108: #{trident_forward.1} parent=1 // pred_region
      _
    $region109: #{trident_forward.1} parent=1 // pred_fallthru
      _
    // Predicated region
    $region110: #{trident_forward.1} parent=1 // pred_check
      _
    $region111: #{trident_forward.1} parent=1 // pred_check_branch
      %148 = sbr.rel (0) target = $region113
    $region112: #{trident_forward.1} parent=1 // pred_region
      _
    $region113: #{trident_forward.1} parent=1 // pred_fallthru
      _
    // Predicated region
    $region114: #{trident_forward.1} parent=1 // pred_check
      _
    $region115: #{trident_forward.1} parent=1 // pred_check_branch
      %150 = sbr.rel (0) target = $region117
    $region116: #{trident_forward.1} parent=1 // pred_region
      _
    $region117: #{trident_forward.1} parent=1 // pred_fallthru
      _
    // Predicated region
    $region118: #{trident_forward.1} parent=1 // pred_check
      _
    $region119: #{trident_forward.1} parent=1 // pred_check_branch
      %152 = sbr.rel (0) target = $region121
    $region120: #{trident_forward.1} parent=1 // pred_region
      _
    $region121: #{trident_forward.1} parent=1 // pred_fallthru
      _
    // Predicated region
    $region122: #{trident_forward.1} parent=1 // pred_check
      _
    $region123: #{trident_forward.1} parent=1 // pred_check_branch
      %154 = sbr.rel (0) target = $region125
    $region124: #{trident_forward.1} parent=1 // pred_region
      _
    $region125: #{trident_forward.1} parent=1 // pred_fallthru
      _
    // Predicated region
    $region126: #{trident_forward.1} parent=1 // pred_check
      _
    $region127: #{trident_forward.1} parent=1 // pred_check_branch
      %156 = sbr.rel (0) target = $region129
    $region128: #{trident_forward.1} parent=1 // pred_region
      _
    $region129: #{trident_forward.1} parent=1 // pred_fallthru
      _
    // Predicated region
    $region130: #{trident_forward.1} parent=1 // pred_check
      _
    $region131: #{trident_forward.1} parent=1 // pred_check_branch
      %158 = sbr.rel (0) target = $region133
    $region132: #{trident_forward.1} parent=1 // pred_region
      _
    $region133: #{trident_forward.1} parent=1 // pred_fallthru
      _
    // Predicated region
    $region134: #{trident_forward.1} parent=1 // pred_check
      _
    $region135: #{trident_forward.1} parent=1 // pred_check_branch
      %160 = sbr.rel (0) target = $region137
    $region136: #{trident_forward.1} parent=1 // pred_region
      _
    $region137: #{trident_forward.1} parent=1 // pred_fallthru
      _
    // Predicated region
    $region138: #{trident_forward.1} parent=1 // pred_check
      _
    $region139: #{trident_forward.1} parent=1 // pred_check_branch
      %162 = sbr.rel (0) target = $region141
    $region140: #{trident_forward.1} parent=1 // pred_region
      %163 = dma.done [#allocation3], 64
    $region141: #{trident_forward.1} parent=1 // pred_fallthru
      _
    // Predicated region
    $region142: #{trident_forward.1} parent=1 // pred_check
      _
    $region143: #{trident_forward.1} parent=1 // pred_check_branch
      %165 = sbr.rel (0) target = $region145
    $region144: #{trident_forward.1} parent=1 // pred_region
      %166 = dma.done [#allocation6], 16
    $region145: #{trident_forward.1} parent=1 // pred_fallthru
      _
    %v168 = vld [vmem:[%s1] sm:$0xff]
    %v169 = vld [vmem:[%s1 + $0x8] sm:$0xff]
    %v170 = vld [vmem:[%s1 + $0x10] sm:$0xff]
    %v171 = vld [vmem:[%s1 + $0x18] sm:$0xff]
    %v172 = vld [vmem:[%s13] sm:$0x1]
    %v174 = vlaneseq
    %v175 = vshrl.u32 %v174, 7
    %v176 = vsub.s32 0, %v175
    %v177 = vrot.slane %v172, %v176
    %v179 = vmul.f32 %v168, %v177
    %v180 = vmul.f32 %v169, %v177
    %v181 = vmul.f32 %v170, %v177
    %v182 = vmul.f32 %v171, %v177
    %v183 = vld [vmem:[%s15] sm:$0x1]
    %v185 = vlaneseq
    %v186 = vshrl.u32 %v185, 7
    %v187 = vsub.s32 0, %v186
    %v188 = vrot.slane %v183, %v187
    %v190 = vadd.f32 %v179, %v188
    %v191 = vadd.f32 %v180, %v188
    %v192 = vadd.f32 %v181, %v188
    %v193 = vadd.f32 %v182, %v188
    %v194 = vld [vmem:[%s9] sm:$0x3]
    %v195 = vld [vmem:[%s11] sm:$0xff]
    %v196 = vld [vmem:[%s11 + $0x8] sm:$0xff]
    %v197 = vld [vmem:[%s11 + $0x10] sm:$0xff]
    %v198 = vld [vmem:[%s11 + $0x18] sm:$0xff]
    %vm199 = vcmask 261120
    %v201 = vsel %vm199, %v194, 0
    %203 = vmatprep.subr.mxu0 0.0
    %204 = vmatpush1.msra.mxu0 %v190
    %205 = vmatprep.subr.mxu0 0.0
    %206 = vmatpush1.msra.mxu0 %v191
    %207 = vmatprep.subr.mxu0 0.0
    %208 = vmatpush1.msra.mxu0 %v192
    %209 = vmatprep.subr.mxu0 0.0
    %210 = vmatpush1.msra.mxu0 %v193
    %211 = vmatprep.subr.mxu0 0.0
    %212 = vmatpush1.msra.mxu0 0.0
    %213 = vmatprep.subr.mxu0 0.0
    %214 = vmatpush1.msra.mxu0 0.0
    %215 = vmatprep.subr.mxu0 0.0
    %216 = vmatpush1.msra.mxu0 0.0
    %217 = vmatprep.subr.mxu0 0.0
    %218 = vmatpush1.msra.mxu0 0.0
    %219 = vmatprep.subr.mxu0 0.0
    %220 = vmatpush1.msra.mxu0 0.0
    %221 = vmatprep.subr.mxu0 0.0
    %222 = vmatpush1.msra.mxu0 0.0
    %223 = vmatprep.subr.mxu0 0.0
    %224 = vmatpush1.msra.mxu0 0.0
    %225 = vmatprep.subr.mxu0 0.0
    %226 = vmatpush1.msra.mxu0 0.0
    %227 = vmatprep.subr.mxu0 0.0
    %228 = vmatpush1.msra.mxu0 0.0
    %229 = vmatprep.subr.mxu0 0.0
    %230 = vmatpush1.msra.mxu0 0.0
    %231 = vmatprep.subr.mxu0 0.0
    %232 = vmatpush1.msra.mxu0 0.0
    %233 = vmatprep.subr.mxu0 0.0
    %234 = vmatpush1.msra.mxu0 0.0
    %235 = vmatprep.subr.mxu0 0.0
    %236 = vmatpush1.msra.mxu0 0.0
    %237 = vmatprep.subr.mxu0 0.0
    %238 = vmatpush1.msra.mxu0 0.0
    %239 = vmatprep.subr.mxu0 0.0
    %240 = vmatpush1.msra.mxu0 0.0
    %241 = vmatprep.subr.mxu0 0.0
    %242 = vmatpush1.msra.mxu0 0.0
    %243 = vmatprep.subr.mxu0 0.0
    %244 = vmatpush1.msra.mxu0 0.0
    %245 = vmatprep.subr.mxu0 0.0
    %246 = vmatpush1.msra.mxu0 0.0
    %247 = vmatprep.subr.mxu0 0.0
    %248 = vmatpush1.msra.mxu0 0.0
    %249 = vmatprep.subr.mxu0 0.0
    %250 = vmatpush1.msra.mxu0 0.0
    %251 = vmatprep.subr.mxu0 0.0
    %252 = vmatpush1.msra.mxu0 0.0
    %253 = vmatprep.subr.mxu0 0.0
    %254 = vmatpush1.msra.mxu0 0.0
    %255 = vmatprep.subr.mxu0 0.0
    %256 = vmatpush1.msra.mxu0 0.0
    %257 = vmatprep.subr.mxu0 0.0
    %258 = vmatpush1.msra.mxu0 0.0
    %259 = vmatprep.subr.mxu0 0.0
    %260 = vmatpush1.msra.mxu0 0.0
    %261 = vmatprep.subr.mxu0 0.0
    %262 = vmatpush1.msra.mxu0 0.0
    %263 = vmatprep.subr.mxu0 0.0
    %264 = vmatpush1.msra.mxu0 0.0
    %265 = vmatprep.subr.mxu0 0.0
    %266 = vmatpush1.msra.mxu0 0.0
    %267 = vmatprep.mubr.f32.mxu0 0.0
    %268 = vmatmul.mubr.f32.gmra.mrb[0].mxu0 %v201
    %v269 = vpop.f32.mrb[0].mxu0
    %v270 = vadd.f32 0.0, %v269
    %v271 = vpop.f32.mrb[0].mxu0
    %272 = vdwg.mxu0
    %v273 = vld [vmem:[%s17] sm:$0xf]
    %v274 = vpack.c.bf16 %v270, %v270
    %v275 = vld [vmem:[%s19] sm:$0x1]
    %v277 = vlaneseq
    %v278 = vshrl.u32 %v277, 7
    %v279 = vsub.s32 0, %v278
    %v280 = vrot.slane %v275, %v279
    %vm282 = vcmask 64512
    %v284 = vsel %vm282, %v274, 0
    %vm286 = vcmask 1043456
    %v288 = vsel %vm286, %v273, 0
    %290 = vmatprep.subr.bf16.mxu0 0
    %291 = vmatpush1.bf16.msra.mxu0 %v288
    %292 = vmatprep.subr.bf16.mxu0 0
    %293 = vmatpush1.bf16.msra.mxu0 0
    %294 = vmatprep.subr.bf16.mxu0 0
    %295 = vmatpush1.bf16.msra.mxu0 0
    %296 = vmatprep.subr.bf16.mxu0 0
    %297 = vmatpush1.bf16.msra.mxu0 0
    %298 = vmatprep.subr.bf16.mxu0 0
    %299 = vmatpush1.bf16.msra.mxu0 0
    %300 = vmatprep.subr.bf16.mxu0 0
    %301 = vmatpush1.bf16.msra.mxu0 0
    %302 = vmatprep.subr.bf16.mxu0 0
    %303 = vmatpush1.bf16.msra.mxu0 0
    %304 = vmatprep.subr.bf16.mxu0 0
    %305 = vmatpush1.bf16.msra.mxu0 0
    %306 = vmatprep.subr.bf16.mxu0 0
    %307 = vmatpush1.bf16.msra.mxu0 0
    %308 = vmatprep.subr.bf16.mxu0 0
    %309 = vmatpush1.bf16.msra.mxu0 0
    %310 = vmatprep.subr.bf16.mxu0 0
    %311 = vmatpush1.bf16.msra.mxu0 0
    %312 = vmatprep.subr.bf16.mxu0 0
    %313 = vmatpush1.bf16.msra.mxu0 0
    %314 = vmatprep.subr.bf16.mxu0 0
    %315 = vmatpush1.bf16.msra.mxu0 0
    %316 = vmatprep.subr.bf16.mxu0 0
    %317 = vmatpush1.bf16.msra.mxu0 0
    %318 = vmatprep.subr.bf16.mxu0 0
    %319 = vmatpush1.bf16.msra.mxu0 0
    %320 = vmatprep.subr.bf16.mxu0 0
    %321 = vmatpush1.bf16.msra.mxu0 0
    %322 = vmatprep.mubr.bf16.mxu0 0
    %323 = vmatmul.mubr.bf16.gmra.mrb[0].mxu0 %v284
    %v324 = vpop.f32.mrb[0].mxu0
    %v325 = vadd.f32 %v280, %v324
    %v326 = vpop.f32.mrb[0].mxu0
    %v327 = vpop.f32.mrb[0].mxu0
    %v328 = vpop.f32.mrb[0].mxu0
    %329 = vdwg.mxu0
    %v330 = vmax.f32 %v325, 0.0
    %v331 = vlaneseq
    %v332 = vshrl.u32 %v331, 7
    %v333 = vadd.s32 %v332, 8
    %v334 = vadd.s32 %v332, 16
    %v335 = vadd.s32 %v332, 24
    %v336 = vlaneseq
    %v337 = vand.u32 %v336, 127
    %v338 = vcvt.s32.f32 %v337
    %vm339 = vcmp.eq.s32.totalorder %v332, %v337
    %vm340 = vcmp.eq.s32.totalorder %v333, %v337
    %vm341 = vcmp.eq.s32.totalorder %v334, %v337
    %vm342 = vcmp.eq.s32.totalorder %v335, %v337
    %v343 = vsel %vm339, 1, 0
    %v344 = vsel %vm340, 1, 0
    %v345 = vsel %vm341, 1, 0
    %v346 = vsel %vm342, 1, 0
    %v347 = vcvt.s32.f32 %v343
    %v348 = vcvt.s32.f32 %v344
    %v349 = vcvt.s32.f32 %v345
    %v350 = vcvt.s32.f32 %v346
    %v351 = vld [vmem:[%s5] sm:$0xff]
    %v352 = vld [vmem:[%s5 + $0x8] sm:$0xff]
    %v353 = vld [vmem:[%s5 + $0x10] sm:$0xff]
    %v354 = vld [vmem:[%s5 + $0x18] sm:$0xff]
    %v355 = vld [vmem:[%s7] sm:$0x1]
    %356 = vset.pattern.permute.xlu0 0
    %357 = vperm.xlu0 %356, %v351
    %v358 = vpop.permute.xlu0 %357
    %359 = vset.pattern.permute.xlu0 0
    %360 = vperm.xlu0 %359, %v352
    %v361 = vpop.permute.xlu0 %360
    %362 = vset.pattern.permute.xlu0 0
    %363 = vperm.xlu0 %362, %v353
    %v364 = vpop.permute.xlu0 %363
    %365 = vset.pattern.permute.xlu0 0
    %366 = vperm.xlu0 %365, %v354
    %v367 = vpop.permute.xlu0 %366
    %v368 = vlaneseq
    %v369 = vshrl.u32 %v368, 7
    %v370 = vsub.s32 0, %v369
    %v371 = vrot.slane %v355, %v370
    %vm372 = vcmp.eq.s32.totalorder %v358, %v371
    %vm373 = vcmp.eq.s32.totalorder %v361, %v371
    %vm374 = vcmp.eq.s32.totalorder %v364, %v371
    %vm375 = vcmp.eq.s32.totalorder %v367, %v371
    %vm376 = vcmp.ne.s32.totalorder %v332, %v337
    %vm377 = vcmp.ne.s32.totalorder %v333, %v337
    %vm378 = vcmp.ne.s32.totalorder %v334, %v337
    %vm379 = vcmp.ne.s32.totalorder %v335, %v337
    %vm380 = vmand %vm372, %vm376
    %vm381 = vmand %vm373, %vm377
    %vm382 = vmand %vm374, %vm378
    %vm383 = vmand %vm375, %vm379
    %v384 = vld [vmem:[%s3] sm:$0xff]
    %v385 = vld [vmem:[%s3 + $0x8] sm:$0xff]
    %v386 = vld [vmem:[%s3 + $0x10] sm:$0xff]
    %v387 = vld [vmem:[%s3 + $0x18] sm:$0xff]
    %vm388 = vcmask 23552
    %v390 = vsel %vm388, %v384, 0
    %v393 = vsel %vm388, %v385, 0
    %v396 = vsel %vm388, %v386, 0
    %v399 = vsel %vm388, %v387, 0
    %401 = vmatprep.subr.mxu0 0.0
    %402 = vmatpush1.xpose.msra.mxu0 %v390
    %403 = vmatprep.subr.mxu0 0.0
    %404 = vmatpush1.xpose.msra.mxu0 %v393
    %405 = vmatprep.subr.mxu0 0.0
    %406 = vmatpush1.xpose.msra.mxu0 %v396
    %407 = vmatprep.subr.mxu0 0.0
    %408 = vmatpush1.xpose.msra.mxu0 %v399
    %409 = vmatprep.subr.mxu0 0.0
    %410 = vmatpush1.xpose.msra.mxu0 0.0
    %411 = vmatprep.subr.mxu0 0.0
    %412 = vmatpush1.xpose.msra.mxu0 0.0
    %413 = vmatprep.subr.mxu0 0.0
    %414 = vmatpush1.xpose.msra.mxu0 0.0
    %415 = vmatprep.subr.mxu0 0.0
    %416 = vmatpush1.xpose.msra.mxu0 0.0
    %417 = vmatprep.subr.mxu0 0.0
    %418 = vmatpush1.xpose.msra.mxu0 0.0
    %419 = vmatprep.subr.mxu0 0.0
    %420 = vmatpush1.xpose.msra.mxu0 0.0
    %421 = vmatprep.subr.mxu0 0.0
    %422 = vmatpush1.xpose.msra.mxu0 0.0
    %423 = vmatprep.subr.mxu0 0.0
    %424 = vmatpush1.xpose.msra.mxu0 0.0
    %425 = vmatprep.subr.mxu0 0.0
    %426 = vmatpush1.xpose.msra.mxu0 0.0
    %427 = vmatprep.subr.mxu0 0.0
    %428 = vmatpush1.xpose.msra.mxu0 0.0
    %429 = vmatprep.subr.mxu0 0.0
    %430 = vmatpush1.xpose.msra.mxu0 0.0
    %431 = vmatprep.subr.mxu0 0.0
    %432 = vmatpush1.xpose.msra.mxu0 0.0
    %433 = vmatprep.subr.mxu0 0.0
    %434 = vmatpush1.xpose.msra.mxu0 0.0
    %435 = vmatprep.subr.mxu0 0.0
    %436 = vmatpush1.xpose.msra.mxu0 0.0
    %437 = vmatprep.subr.mxu0 0.0
    %438 = vmatpush1.xpose.msra.mxu0 0.0
    %439 = vmatprep.subr.mxu0 0.0
    %440 = vmatpush1.xpose.msra.mxu0 0.0
    %441 = vmatprep.subr.mxu0 0.0
    %442 = vmatpush1.xpose.msra.mxu0 0.0
    %443 = vmatprep.subr.mxu0 0.0
    %444 = vmatpush1.xpose.msra.mxu0 0.0
    %445 = vmatprep.subr.mxu0 0.0
    %446 = vmatpush1.xpose.msra.mxu0 0.0
    %447 = vmatprep.subr.mxu0 0.0
    %448 = vmatpush1.xpose.msra.mxu0 0.0
    %449 = vmatprep.subr.mxu0 0.0
    %450 = vmatpush1.xpose.msra.mxu0 0.0
    %451 = vmatprep.subr.mxu0 0.0
    %452 = vmatpush1.xpose.msra.mxu0 0.0
    %453 = vmatprep.subr.mxu0 0.0
    %454 = vmatpush1.xpose.msra.mxu0 0.0
    %455 = vmatprep.subr.mxu0 0.0
    %456 = vmatpush1.xpose.msra.mxu0 0.0
    %457 = vmatprep.subr.mxu0 0.0
    %458 = vmatpush1.xpose.msra.mxu0 0.0
    %459 = vmatprep.subr.mxu0 0.0
    %460 = vmatpush1.xpose.msra.mxu0 0.0
    %461 = vmatprep.subr.mxu0 0.0
    %462 = vmatpush1.xpose.msra.mxu0 0.0
    %463 = vmatprep.subr.mxu0 0.0
    %464 = vmatpush1.xpose.msra.mxu0 0.0
    %465 = vmatprep.mubr.f32.mxu0 0.0
    %466 = vmatmul.mubr.f32.gmra.mrb[0].mxu0 %v390
    %v467 = vpop.f32.mrb[0].mxu0
    %v468 = vadd.f32 0.0, %v467
    %v469 = vpop.f32.mrb[0].mxu0
    %470 = vmatprep.mubr.f32.mxu0 0.0
    %471 = vmatmul.mubr.f32.gmra.mrb[0].mxu0 %v393
    %v472 = vpop.f32.mrb[0].mxu0
    %v473 = vadd.f32 0.0, %v472
    %v474 = vpop.f32.mrb[0].mxu0
    %475 = vmatprep.mubr.f32.mxu0 0.0
    %476 = vmatmul.mubr.f32.gmra.mrb[0].mxu0 %v396
    %v477 = vpop.f32.mrb[0].mxu0
    %v478 = vadd.f32 0.0, %v477
    %v479 = vpop.f32.mrb[0].mxu0
    %480 = vmatprep.mubr.f32.mxu0 0.0
    %481 = vmatmul.mubr.f32.gmra.mrb[0].mxu0 %v399
    %v482 = vpop.f32.mrb[0].mxu0
    %v483 = vadd.f32 0.0, %v482
    %v484 = vpop.f32.mrb[0].mxu0
    %485 = vdwg.mxu0
    %v486 = vmul.f32 %v468, %v347
    %v487 = vmul.f32 %v473, %v348
    %v488 = vmul.f32 %v478, %v349
    %v489 = vmul.f32 %v483, %v350
    %v490 = vsel %vm199, %v486, 0.0
    %v491 = vsel %vm199, %v487, 0.0
    %v492 = vadd.f32 %v490, %v491
    %v493 = vsel %vm199, %v488, 0.0
    %v494 = vadd.f32 %v492, %v493
    %v495 = vsel %vm199, %v489, 0.0
    %v496 = vadd.f32 %v494, %v495
    %v497 = vrot.slane %v496, 4
    %v498 = vadd.f32 %v496, %v497
    %v499 = vrot.slane %v498, 2
    %v500 = vadd.f32 %v498, %v499
    %v501 = vrot.slane %v500, 1
    %v502 = vadd.f32 %v500, %v501
    %v503 = vmul.f32 %v468, 2.0
    %v504 = vmul.f32 %v473, 2.0
    %v505 = vmul.f32 %v478, 2.0
    %v506 = vmul.f32 %v483, 2.0
    %v507 = vsub.f32 %v502, %v503
    %v508 = vsub.f32 %v502, %v504
    %v509 = vsub.f32 %v502, %v505
    %v510 = vsub.f32 %v502, %v506
    %v511 = vsel %vm380, %v507, 1e+30
    %v512 = vsel %vm381, %v508, 1e+30
    %v513 = vsel %vm382, %v509, 1e+30
    %v514 = vsel %vm383, %v510, 1e+30
    %vm515 = vcmask 15360
    %v517 = vsel %vm515, %v195, 0
    %v520 = vsel %vm515, %v196, 0
    %v523 = vsel %vm515, %v197, 0
    %v526 = vsel %vm515, %v198, 0
    %vm528 = vcmask 1041408
    %v530 = vsel %vm528, %v330, 0
    %532 = vmatprep.subr.mxu0 0.0
    %533 = vmatpush1.msra.mxu0 %v530
    %534 = vmatprep.subr.mxu0 0.0
    %535 = vmatpush1.msra.mxu0 0.0
    %536 = vmatprep.subr.mxu0 0.0
    %537 = vmatpush1.msra.mxu0 0.0
    %538 = vmatprep.subr.mxu0 0.0
    %539 = vmatpush1.msra.mxu0 0.0
    %540 = vmatprep.subr.mxu0 0.0
    %541 = vmatpush1.msra.mxu0 0.0
    %542 = vmatprep.subr.mxu0 0.0
    %543 = vmatpush1.msra.mxu0 0.0
    %544 = vmatprep.subr.mxu0 0.0
    %545 = vmatpush1.msra.mxu0 0.0
    %546 = vmatprep.subr.mxu0 0.0
    %547 = vmatpush1.msra.mxu0 0.0
    %548 = vmatprep.subr.mxu0 0.0
    %549 = vmatpush1.msra.mxu0 0.0
    %550 = vmatprep.subr.mxu0 0.0
    %551 = vmatpush1.msra.mxu0 0.0
    %552 = vmatprep.subr.mxu0 0.0
    %553 = vmatpush1.msra.mxu0 0.0
    %554 = vmatprep.subr.mxu0 0.0
    %555 = vmatpush1.msra.mxu0 0.0
    %556 = vmatprep.subr.mxu0 0.0
    %557 = vmatpush1.msra.mxu0 0.0
    %558 = vmatprep.subr.mxu0 0.0
    %559 = vmatpush1.msra.mxu0 0.0
    %560 = vmatprep.subr.mxu0 0.0
    %561 = vmatpush1.msra.mxu0 0.0
    %562 = vmatprep.subr.mxu0 0.0
    %563 = vmatpush1.msra.mxu0 0.0
    %564 = vmatprep.subr.mxu0 0.0
    %565 = vmatpush1.msra.mxu0 0.0
    %566 = vmatprep.subr.mxu0 0.0
    %567 = vmatpush1.msra.mxu0 0.0
    %568 = vmatprep.subr.mxu0 0.0
    %569 = vmatpush1.msra.mxu0 0.0
    %570 = vmatprep.subr.mxu0 0.0
    %571 = vmatpush1.msra.mxu0 0.0
    %572 = vmatprep.subr.mxu0 0.0
    %573 = vmatpush1.msra.mxu0 0.0
    %574 = vmatprep.subr.mxu0 0.0
    %575 = vmatpush1.msra.mxu0 0.0
    %576 = vmatprep.subr.mxu0 0.0
    %577 = vmatpush1.msra.mxu0 0.0
    %578 = vmatprep.subr.mxu0 0.0
    %579 = vmatpush1.msra.mxu0 0.0
    %580 = vmatprep.subr.mxu0 0.0
    %581 = vmatpush1.msra.mxu0 0.0
    %582 = vmatprep.subr.mxu0 0.0
    %583 = vmatpush1.msra.mxu0 0.0
    %584 = vmatprep.subr.mxu0 0.0
    %585 = vmatpush1.msra.mxu0 0.0
    %586 = vmatprep.subr.mxu0 0.0
    %587 = vmatpush1.msra.mxu0 0.0
    %588 = vmatprep.subr.mxu0 0.0
    %589 = vmatpush1.msra.mxu0 0.0
    %590 = vmatprep.subr.mxu0 0.0
    %591 = vmatpush1.msra.mxu0 0.0
    %592 = vmatprep.subr.mxu0 0.0
    %593 = vmatpush1.msra.mxu0 0.0
    %594 = vmatprep.subr.mxu0 0.0
    %595 = vmatpush1.msra.mxu0 0.0
    %596 = vmatprep.mubr.f32.mxu0 0.0
    %597 = vmatmul.mubr.f32.gmra.mrb[0].mxu0 %v517
    %v598 = vpop.f32.mrb[0].mxu0
    %v599 = vadd.f32 0.0, %v598
    %v600 = vpop.f32.mrb[0].mxu0
    %601 = vmatprep.mubr.f32.mxu0 0.0
    %602 = vmatmul.mubr.f32.gmra.mrb[0].mxu0 %v520
    %v603 = vpop.f32.mrb[0].mxu0
    %v604 = vadd.f32 0.0, %v603
    %v605 = vpop.f32.mrb[0].mxu0
    %606 = vmatprep.mubr.f32.mxu0 0.0
    %607 = vmatmul.mubr.f32.gmra.mrb[0].mxu0 %v523
    %v608 = vpop.f32.mrb[0].mxu0
    %v609 = vadd.f32 0.0, %v608
    %v610 = vpop.f32.mrb[0].mxu0
    %611 = vmatprep.mubr.f32.mxu0 0.0
    %612 = vmatmul.mubr.f32.gmra.mrb[0].mxu0 %v526
    %v613 = vpop.f32.mrb[0].mxu0
    %v614 = vadd.f32 0.0, %v613
    %v615 = vpop.f32.mrb[0].mxu0
    %616 = vdwg.mxu0
    %v617 = vsel %vm199, %v511, inf
    %618 = vmin.xlane.f32.xlu0 %v617
    %v619 = vpop.xlane.xlu0 %618
    %v620 = vsel %vm199, %v512, inf
    %621 = vmin.xlane.f32.xlu0 %v620
    %v622 = vpop.xlane.xlu0 %621
    %v623 = vsel %vm199, %v513, inf
    %624 = vmin.xlane.f32.xlu0 %v623
    %v625 = vpop.xlane.xlu0 %624
    %v626 = vsel %vm199, %v514, inf
    %627 = vmin.xlane.f32.xlu0 %v626
    %v628 = vpop.xlane.xlu0 %627
    %vm629 = vcmp.eq.f32.partialorder %v511, %v619
    %vm630 = vcmp.eq.f32.partialorder %v512, %v622
    %vm631 = vcmp.eq.f32.partialorder %v513, %v625
    %vm632 = vcmp.eq.f32.partialorder %v514, %v628
    %v633 = vsel %vm629, %v338, 1e+09
    %v634 = vsel %vm630, %v338, 1e+09
    %v635 = vsel %vm631, %v338, 1e+09
    %v636 = vsel %vm632, %v338, 1e+09
    %v637 = vsel %vm199, %v633, inf
    %638 = vmin.xlane.f32.xlu0 %v637
    %v639 = vpop.xlane.xlu0 %638
    %v640 = vsel %vm199, %v634, inf
    %641 = vmin.xlane.f32.xlu0 %v640
    %v642 = vpop.xlane.xlu0 %641
    %v643 = vsel %vm199, %v635, inf
    %644 = vmin.xlane.f32.xlu0 %v643
    %v645 = vpop.xlane.xlu0 %644
    %v646 = vsel %vm199, %v636, inf
    %647 = vmin.xlane.f32.xlu0 %v646
    %v648 = vpop.xlane.xlu0 %647
    %vm649 = vcmp.eq.f32.partialorder %v338, %v639
    %vm650 = vcmp.eq.f32.partialorder %v338, %v642
    %vm651 = vcmp.eq.f32.partialorder %v338, %v645
    %vm652 = vcmp.eq.f32.partialorder %v338, %v648
    %v653 = vsel %vm649, 1, 0
    %v654 = vsel %vm650, 1, 0
    %v655 = vsel %vm651, 1, 0
    %v656 = vsel %vm652, 1, 0
    %v657 = vcvt.s32.f32 %v653
    %v658 = vcvt.s32.f32 %v654
    %v659 = vcvt.s32.f32 %v655
    %v660 = vcvt.s32.f32 %v656
    %v662 = vsel %vm199, %v657, 0
    %v665 = vsel %vm199, %v658, 0
    %v668 = vsel %vm199, %v659, 0
    %v671 = vsel %vm199, %v660, 0
    %673 = vmatprep.subr.mxu0 0.0
    %674 = vmatpush1.msra.mxu0 %v190
    %675 = vmatprep.subr.mxu0 0.0
    %676 = vmatpush1.msra.mxu0 %v191
    %677 = vmatprep.subr.mxu0 0.0
    %678 = vmatpush1.msra.mxu0 %v192
    %679 = vmatprep.subr.mxu0 0.0
    %680 = vmatpush1.msra.mxu0 %v193
    %681 = vmatprep.subr.mxu0 0.0
    %682 = vmatpush1.msra.mxu0 0.0
    %683 = vmatprep.subr.mxu0 0.0
    %684 = vmatpush1.msra.mxu0 0.0
    %685 = vmatprep.subr.mxu0 0.0
    %686 = vmatpush1.msra.mxu0 0.0
    %687 = vmatprep.subr.mxu0 0.0
    %688 = vmatpush1.msra.mxu0 0.0
    %689 = vmatprep.subr.mxu0 0.0
    %690 = vmatpush1.msra.mxu0 0.0
    %691 = vmatprep.subr.mxu0 0.0
    %692 = vmatpush1.msra.mxu0 0.0
    %693 = vmatprep.subr.mxu0 0.0
    %694 = vmatpush1.msra.mxu0 0.0
    %695 = vmatprep.subr.mxu0 0.0
    %696 = vmatpush1.msra.mxu0 0.0
    %697 = vmatprep.subr.mxu0 0.0
    %698 = vmatpush1.msra.mxu0 0.0
    %699 = vmatprep.subr.mxu0 0.0
    %700 = vmatpush1.msra.mxu0 0.0
    %701 = vmatprep.subr.mxu0 0.0
    %702 = vmatpush1.msra.mxu0 0.0
    %703 = vmatprep.subr.mxu0 0.0
    %704 = vmatpush1.msra.mxu0 0.0
    %705 = vmatprep.subr.mxu0 0.0
    %706 = vmatpush1.msra.mxu0 0.0
    %707 = vmatprep.subr.mxu0 0.0
    %708 = vmatpush1.msra.mxu0 0.0
    %709 = vmatprep.subr.mxu0 0.0
    %710 = vmatpush1.msra.mxu0 0.0
    %711 = vmatprep.subr.mxu0 0.0
    %712 = vmatpush1.msra.mxu0 0.0
    %713 = vmatprep.subr.mxu0 0.0
    %714 = vmatpush1.msra.mxu0 0.0
    %715 = vmatprep.subr.mxu0 0.0
    %716 = vmatpush1.msra.mxu0 0.0
    %717 = vmatprep.subr.mxu0 0.0
    %718 = vmatpush1.msra.mxu0 0.0
    %719 = vmatprep.subr.mxu0 0.0
    %720 = vmatpush1.msra.mxu0 0.0
    %721 = vmatprep.subr.mxu0 0.0
    %722 = vmatpush1.msra.mxu0 0.0
    %723 = vmatprep.subr.mxu0 0.0
    %724 = vmatpush1.msra.mxu0 0.0
    %725 = vmatprep.subr.mxu0 0.0
    %726 = vmatpush1.msra.mxu0 0.0
    %727 = vmatprep.subr.mxu0 0.0
    %728 = vmatpush1.msra.mxu0 0.0
    %729 = vmatprep.subr.mxu0 0.0
    %730 = vmatpush1.msra.mxu0 0.0
    %731 = vmatprep.subr.mxu0 0.0
    %732 = vmatpush1.msra.mxu0 0.0
    %733 = vmatprep.subr.mxu0 0.0
    %734 = vmatpush1.msra.mxu0 0.0
    %735 = vmatprep.subr.mxu0 0.0
    %736 = vmatpush1.msra.mxu0 0.0
    %737 = vmatprep.mubr.f32.mxu0 0.0
    %738 = vmatmul.mubr.f32.gmra.mrb[0].mxu0 %v662
    %v739 = vpop.f32.mrb[0].mxu0
    %v740 = vadd.f32 0.0, %v739
    %v741 = vpop.f32.mrb[0].mxu0
    %742 = vmatprep.mubr.f32.mxu0 0.0
    %743 = vmatmul.mubr.f32.gmra.mrb[0].mxu0 %v665
    %v744 = vpop.f32.mrb[0].mxu0
    %v745 = vadd.f32 0.0, %v744
    %v746 = vpop.f32.mrb[0].mxu0
    %747 = vmatprep.mubr.f32.mxu0 0.0
    %748 = vmatmul.mubr.f32.gmra.mrb[0].mxu0 %v668
    %v749 = vpop.f32.mrb[0].mxu0
    %v750 = vadd.f32 0.0, %v749
    %v751 = vpop.f32.mrb[0].mxu0
    %752 = vmatprep.mubr.f32.mxu0 0.0
    %753 = vmatmul.mubr.f32.gmra.mrb[0].mxu0 %v671
    %v754 = vpop.f32.mrb[0].mxu0
    %v755 = vadd.f32 0.0, %v754
    %v756 = vpop.f32.mrb[0].mxu0
    %757 = vdwg.mxu0
    %v758 = vsub.f32 %v740, %v190
    %v759 = vsub.f32 %v745, %v191
    %v760 = vsub.f32 %v750, %v192
    %v761 = vsub.f32 %v755, %v193
    %v762 = vsel %vm649, 1e+30, %v511
    %v763 = vsel %vm650, 1e+30, %v512
    %v764 = vsel %vm651, 1e+30, %v513
    %v765 = vsel %vm652, 1e+30, %v514
    %v766 = vsel %vm199, %v762, inf
    %767 = vmin.xlane.f32.xlu0 %v766
    %v768 = vpop.xlane.xlu0 %767
    %v769 = vsel %vm199, %v763, inf
    %770 = vmin.xlane.f32.xlu0 %v769
    %v771 = vpop.xlane.xlu0 %770
    %v772 = vsel %vm199, %v764, inf
    %773 = vmin.xlane.f32.xlu0 %v772
    %v774 = vpop.xlane.xlu0 %773
    %v775 = vsel %vm199, %v765, inf
    %776 = vmin.xlane.f32.xlu0 %v775
    %v777 = vpop.xlane.xlu0 %776
    %vm778 = vcmp.eq.f32.partialorder %v762, %v768
    %vm779 = vcmp.eq.f32.partialorder %v763, %v771
    %vm780 = vcmp.eq.f32.partialorder %v764, %v774
    %vm781 = vcmp.eq.f32.partialorder %v765, %v777
    %v782 = vsel %vm778, %v338, 1e+09
    %v783 = vsel %vm779, %v338, 1e+09
    %v784 = vsel %vm780, %v338, 1e+09
    %v785 = vsel %vm781, %v338, 1e+09
    %v786 = vsel %vm199, %v782, inf
    %787 = vmin.xlane.f32.xlu0 %v786
    %v788 = vpop.xlane.xlu0 %787
    %v789 = vsel %vm199, %v783, inf
    %790 = vmin.xlane.f32.xlu0 %v789
    %v791 = vpop.xlane.xlu0 %790
    %v792 = vsel %vm199, %v784, inf
    %793 = vmin.xlane.f32.xlu0 %v792
    %v794 = vpop.xlane.xlu0 %793
    %v795 = vsel %vm199, %v785, inf
    %796 = vmin.xlane.f32.xlu0 %v795
    %v797 = vpop.xlane.xlu0 %796
    %vm798 = vcmp.eq.f32.partialorder %v338, %v788
    %vm799 = vcmp.eq.f32.partialorder %v338, %v791
    %vm800 = vcmp.eq.f32.partialorder %v338, %v794
    %vm801 = vcmp.eq.f32.partialorder %v338, %v797
    %v802 = vsel %vm798, 1, 0
    %v803 = vsel %vm799, 1, 0
    %v804 = vsel %vm800, 1, 0
    %v805 = vsel %vm801, 1, 0
    %v806 = vcvt.s32.f32 %v802
    %v807 = vcvt.s32.f32 %v803
    %v808 = vcvt.s32.f32 %v804
    %v809 = vcvt.s32.f32 %v805
    %v811 = vsel %vm199, %v806, 0
    %v814 = vsel %vm199, %v807, 0
    %v817 = vsel %vm199, %v808, 0
    %v820 = vsel %vm199, %v809, 0
    %822 = vmatprep.subr.mxu0 0.0
    %823 = vmatpush1.msra.mxu0 %v190
    %824 = vmatprep.subr.mxu0 0.0
    %825 = vmatpush1.msra.mxu0 %v191
    %826 = vmatprep.subr.mxu0 0.0
    %827 = vmatpush1.msra.mxu0 %v192
    %828 = vmatprep.subr.mxu0 0.0
    %829 = vmatpush1.msra.mxu0 %v193
    %830 = vmatprep.subr.mxu0 0.0
    %831 = vmatpush1.msra.mxu0 0.0
    %832 = vmatprep.subr.mxu0 0.0
    %833 = vmatpush1.msra.mxu0 0.0
    %834 = vmatprep.subr.mxu0 0.0
    %835 = vmatpush1.msra.mxu0 0.0
    %836 = vmatprep.subr.mxu0 0.0
    %837 = vmatpush1.msra.mxu0 0.0
    %838 = vmatprep.subr.mxu0 0.0
    %839 = vmatpush1.msra.mxu0 0.0
    %840 = vmatprep.subr.mxu0 0.0
    %841 = vmatpush1.msra.mxu0 0.0
    %842 = vmatprep.subr.mxu0 0.0
    %843 = vmatpush1.msra.mxu0 0.0
    %844 = vmatprep.subr.mxu0 0.0
    %845 = vmatpush1.msra.mxu0 0.0
    %846 = vmatprep.subr.mxu0 0.0
    %847 = vmatpush1.msra.mxu0 0.0
    %848 = vmatprep.subr.mxu0 0.0
    %849 = vmatpush1.msra.mxu0 0.0
    %850 = vmatprep.subr.mxu0 0.0
    %851 = vmatpush1.msra.mxu0 0.0
    %852 = vmatprep.subr.mxu0 0.0
    %853 = vmatpush1.msra.mxu0 0.0
    %854 = vmatprep.subr.mxu0 0.0
    %855 = vmatpush1.msra.mxu0 0.0
    %856 = vmatprep.subr.mxu0 0.0
    %857 = vmatpush1.msra.mxu0 0.0
    %858 = vmatprep.subr.mxu0 0.0
    %859 = vmatpush1.msra.mxu0 0.0
    %860 = vmatprep.subr.mxu0 0.0
    %861 = vmatpush1.msra.mxu0 0.0
    %862 = vmatprep.subr.mxu0 0.0
    %863 = vmatpush1.msra.mxu0 0.0
    %864 = vmatprep.subr.mxu0 0.0
    %865 = vmatpush1.msra.mxu0 0.0
    %866 = vmatprep.subr.mxu0 0.0
    %867 = vmatpush1.msra.mxu0 0.0
    %868 = vmatprep.subr.mxu0 0.0
    %869 = vmatpush1.msra.mxu0 0.0
    %870 = vmatprep.subr.mxu0 0.0
    %871 = vmatpush1.msra.mxu0 0.0
    %872 = vmatprep.subr.mxu0 0.0
    %873 = vmatpush1.msra.mxu0 0.0
    %874 = vmatprep.subr.mxu0 0.0
    %875 = vmatpush1.msra.mxu0 0.0
    %876 = vmatprep.subr.mxu0 0.0
    %877 = vmatpush1.msra.mxu0 0.0
    %878 = vmatprep.subr.mxu0 0.0
    %879 = vmatpush1.msra.mxu0 0.0
    %880 = vmatprep.subr.mxu0 0.0
    %881 = vmatpush1.msra.mxu0 0.0
    %882 = vmatprep.subr.mxu0 0.0
    %883 = vmatpush1.msra.mxu0 0.0
    %884 = vmatprep.subr.mxu0 0.0
    %885 = vmatpush1.msra.mxu0 0.0
    %886 = vmatprep.mubr.f32.mxu0 0.0
    %887 = vmatmul.mubr.f32.gmra.mrb[0].mxu0 %v811
    %v888 = vpop.f32.mrb[0].mxu0
    %v889 = vadd.f32 0.0, %v888
    %v890 = vpop.f32.mrb[0].mxu0
    %891 = vmatprep.mubr.f32.mxu0 0.0
    %892 = vmatmul.mubr.f32.gmra.mrb[0].mxu0 %v814
    %v893 = vpop.f32.mrb[0].mxu0
    %v894 = vadd.f32 0.0, %v893
    %v895 = vpop.f32.mrb[0].mxu0
    %896 = vmatprep.mubr.f32.mxu0 0.0
    %897 = vmatmul.mubr.f32.gmra.mrb[0].mxu0 %v817
    %v898 = vpop.f32.mrb[0].mxu0
    %v899 = vadd.f32 0.0, %v898
    %v900 = vpop.f32.mrb[0].mxu0
    %901 = vmatprep.mubr.f32.mxu0 0.0
    %902 = vmatmul.mubr.f32.gmra.mrb[0].mxu0 %v820
    %v903 = vpop.f32.mrb[0].mxu0
    %v904 = vadd.f32 0.0, %v903
    %v905 = vpop.f32.mrb[0].mxu0
    %906 = vdwg.mxu0
    %v907 = vsub.f32 %v889, %v190
    %v908 = vsub.f32 %v894, %v191
    %v909 = vsub.f32 %v899, %v192
    %v910 = vsub.f32 %v904, %v193
    %v911 = vsel %vm798, 1e+30, %v762
    %v912 = vsel %vm799, 1e+30, %v763
    %v913 = vsel %vm800, 1e+30, %v764
    %v914 = vsel %vm801, 1e+30, %v765
    %v915 = vsel %vm199, %v911, inf
    %916 = vmin.xlane.f32.xlu0 %v915
    %v917 = vpop.xlane.xlu0 %916
    %v918 = vsel %vm199, %v912, inf
    %919 = vmin.xlane.f32.xlu0 %v918
    %v920 = vpop.xlane.xlu0 %919
    %v921 = vsel %vm199, %v913, inf
    %922 = vmin.xlane.f32.xlu0 %v921
    %v923 = vpop.xlane.xlu0 %922
    %v924 = vsel %vm199, %v914, inf
    %925 = vmin.xlane.f32.xlu0 %v924
    %v926 = vpop.xlane.xlu0 %925
    %vm927 = vcmp.eq.f32.partialorder %v911, %v917
    %vm928 = vcmp.eq.f32.partialorder %v912, %v920
    %vm929 = vcmp.eq.f32.partialorder %v913, %v923
    %vm930 = vcmp.eq.f32.partialorder %v914, %v926
    %v931 = vsel %vm927, %v338, 1e+09
    %v932 = vsel %vm928, %v338, 1e+09
    %v933 = vsel %vm929, %v338, 1e+09
    %v934 = vsel %vm930, %v338, 1e+09
    %v935 = vsel %vm199, %v931, inf
    %936 = vmin.xlane.f32.xlu0 %v935
    %v937 = vpop.xlane.xlu0 %936
    %v938 = vsel %vm199, %v932, inf
    %939 = vmin.xlane.f32.xlu0 %v938
    %v940 = vpop.xlane.xlu0 %939
    %v941 = vsel %vm199, %v933, inf
    %942 = vmin.xlane.f32.xlu0 %v941
    %v943 = vpop.xlane.xlu0 %942
    %v944 = vsel %vm199, %v934, inf
    %945 = vmin.xlane.f32.xlu0 %v944
    %v946 = vpop.xlane.xlu0 %945
    %vm947 = vcmp.eq.f32.partialorder %v338, %v937
    %vm948 = vcmp.eq.f32.partialorder %v338, %v940
    %vm949 = vcmp.eq.f32.partialorder %v338, %v943
    %vm950 = vcmp.eq.f32.partialorder %v338, %v946
    %v951 = vsel %vm947, 1, 0
    %v952 = vsel %vm948, 1, 0
    %v953 = vsel %vm949, 1, 0
    %v954 = vsel %vm950, 1, 0
    %v955 = vcvt.s32.f32 %v951
    %v956 = vcvt.s32.f32 %v952
    %v957 = vcvt.s32.f32 %v953
    %v958 = vcvt.s32.f32 %v954
    %v960 = vsel %vm199, %v955, 0
    %v963 = vsel %vm199, %v956, 0
    %v966 = vsel %vm199, %v957, 0
    %v969 = vsel %vm199, %v958, 0
    %971 = vmatprep.subr.mxu0 0.0
    %972 = vmatpush1.msra.mxu0 %v190
    %973 = vmatprep.subr.mxu0 0.0
    %974 = vmatpush1.msra.mxu0 %v191
    %975 = vmatprep.subr.mxu0 0.0
    %976 = vmatpush1.msra.mxu0 %v192
    %977 = vmatprep.subr.mxu0 0.0
    %978 = vmatpush1.msra.mxu0 %v193
    %979 = vmatprep.subr.mxu0 0.0
    %980 = vmatpush1.msra.mxu0 0.0
    %981 = vmatprep.subr.mxu0 0.0
    %982 = vmatpush1.msra.mxu0 0.0
    %983 = vmatprep.subr.mxu0 0.0
    %984 = vmatpush1.msra.mxu0 0.0
    %985 = vmatprep.subr.mxu0 0.0
    %986 = vmatpush1.msra.mxu0 0.0
    %987 = vmatprep.subr.mxu0 0.0
    %988 = vmatpush1.msra.mxu0 0.0
    %989 = vmatprep.subr.mxu0 0.0
    %990 = vmatpush1.msra.mxu0 0.0
    %991 = vmatprep.subr.mxu0 0.0
    %992 = vmatpush1.msra.mxu0 0.0
    %993 = vmatprep.subr.mxu0 0.0
    %994 = vmatpush1.msra.mxu0 0.0
    %995 = vmatprep.subr.mxu0 0.0
    %996 = vmatpush1.msra.mxu0 0.0
    %997 = vmatprep.subr.mxu0 0.0
    %998 = vmatpush1.msra.mxu0 0.0
    %999 = vmatprep.subr.mxu0 0.0
    %1000 = vmatpush1.msra.mxu0 0.0
    %1001 = vmatprep.subr.mxu0 0.0
    %1002 = vmatpush1.msra.mxu0 0.0
    %1003 = vmatprep.subr.mxu0 0.0
    %1004 = vmatpush1.msra.mxu0 0.0
    %1005 = vmatprep.subr.mxu0 0.0
    %1006 = vmatpush1.msra.mxu0 0.0
    %1007 = vmatprep.subr.mxu0 0.0
    %1008 = vmatpush1.msra.mxu0 0.0
    %1009 = vmatprep.subr.mxu0 0.0
    %1010 = vmatpush1.msra.mxu0 0.0
    %1011 = vmatprep.subr.mxu0 0.0
    %1012 = vmatpush1.msra.mxu0 0.0
    %1013 = vmatprep.subr.mxu0 0.0
    %1014 = vmatpush1.msra.mxu0 0.0
    %1015 = vmatprep.subr.mxu0 0.0
    %1016 = vmatpush1.msra.mxu0 0.0
    %1017 = vmatprep.subr.mxu0 0.0
    %1018 = vmatpush1.msra.mxu0 0.0
    %1019 = vmatprep.subr.mxu0 0.0
    %1020 = vmatpush1.msra.mxu0 0.0
    %1021 = vmatprep.subr.mxu0 0.0
    %1022 = vmatpush1.msra.mxu0 0.0
    %1023 = vmatprep.subr.mxu0 0.0
    %1024 = vmatpush1.msra.mxu0 0.0
    %1025 = vmatprep.subr.mxu0 0.0
    %1026 = vmatpush1.msra.mxu0 0.0
    %1027 = vmatprep.subr.mxu0 0.0
    %1028 = vmatpush1.msra.mxu0 0.0
    %1029 = vmatprep.subr.mxu0 0.0
    %1030 = vmatpush1.msra.mxu0 0.0
    %1031 = vmatprep.subr.mxu0 0.0
    %1032 = vmatpush1.msra.mxu0 0.0
    %1033 = vmatprep.subr.mxu0 0.0
    %1034 = vmatpush1.msra.mxu0 0.0
    %1035 = vmatprep.mubr.f32.mxu0 0.0
    %1036 = vmatmul.mubr.f32.gmra.mrb[0].mxu0 %v960
    %v1037 = vpop.f32.mrb[0].mxu0
    %v1038 = vadd.f32 0.0, %v1037
    %v1039 = vpop.f32.mrb[0].mxu0
    %1040 = vmatprep.mubr.f32.mxu0 0.0
    %1041 = vmatmul.mubr.f32.gmra.mrb[0].mxu0 %v963
    %v1042 = vpop.f32.mrb[0].mxu0
    %v1043 = vadd.f32 0.0, %v1042
    %v1044 = vpop.f32.mrb[0].mxu0
    %1045 = vmatprep.mubr.f32.mxu0 0.0
    %1046 = vmatmul.mubr.f32.gmra.mrb[0].mxu0 %v966
    %v1047 = vpop.f32.mrb[0].mxu0
    %v1048 = vadd.f32 0.0, %v1047
    %v1049 = vpop.f32.mrb[0].mxu0
    %1050 = vmatprep.mubr.f32.mxu0 0.0
    %1051 = vmatmul.mubr.f32.gmra.mrb[0].mxu0 %v969
    %v1052 = vpop.f32.mrb[0].mxu0
    %v1053 = vadd.f32 0.0, %v1052
    %v1054 = vpop.f32.mrb[0].mxu0
    %1055 = vdwg.mxu0
    %v1056 = vsub.f32 %v1038, %v190
    %v1057 = vsub.f32 %v1043, %v191
    %v1058 = vsub.f32 %v1048, %v192
    %v1059 = vsub.f32 %v1053, %v193
    %v1060 = vsel %vm947, 1e+30, %v911
    %v1061 = vsel %vm948, 1e+30, %v912
    %v1062 = vsel %vm949, 1e+30, %v913
    %v1063 = vsel %vm950, 1e+30, %v914
    %v1064 = vsel %vm199, %v1060, inf
    %1065 = vmin.xlane.f32.xlu0 %v1064
    %v1066 = vpop.xlane.xlu0 %1065
    %v1067 = vsel %vm199, %v1061, inf
    %1068 = vmin.xlane.f32.xlu0 %v1067
    %v1069 = vpop.xlane.xlu0 %1068
    %v1070 = vsel %vm199, %v1062, inf
    %1071 = vmin.xlane.f32.xlu0 %v1070
    %v1072 = vpop.xlane.xlu0 %1071
    %v1073 = vsel %vm199, %v1063, inf
    %1074 = vmin.xlane.f32.xlu0 %v1073
    %v1075 = vpop.xlane.xlu0 %1074
    %vm1076 = vcmp.eq.f32.partialorder %v1060, %v1066
    %vm1077 = vcmp.eq.f32.partialorder %v1061, %v1069
    %vm1078 = vcmp.eq.f32.partialorder %v1062, %v1072
    %vm1079 = vcmp.eq.f32.partialorder %v1063, %v1075
    %v1080 = vsel %vm1076, %v338, 1e+09
    %v1081 = vsel %vm1077, %v338, 1e+09
    %v1082 = vsel %vm1078, %v338, 1e+09
    %v1083 = vsel %vm1079, %v338, 1e+09
    %v1084 = vsel %vm199, %v1080, inf
    %1085 = vmin.xlane.f32.xlu0 %v1084
    %v1086 = vpop.xlane.xlu0 %1085
    %v1087 = vsel %vm199, %v1081, inf
    %1088 = vmin.xlane.f32.xlu0 %v1087
    %v1089 = vpop.xlane.xlu0 %1088
    %v1090 = vsel %vm199, %v1082, inf
    %1091 = vmin.xlane.f32.xlu0 %v1090
    %v1092 = vpop.xlane.xlu0 %1091
    %v1093 = vsel %vm199, %v1083, inf
    %1094 = vmin.xlane.f32.xlu0 %v1093
    %v1095 = vpop.xlane.xlu0 %1094
    %vm1096 = vcmp.eq.f32.partialorder %v338, %v1086
    %vm1097 = vcmp.eq.f32.partialorder %v338, %v1089
    %vm1098 = vcmp.eq.f32.partialorder %v338, %v1092
    %vm1099 = vcmp.eq.f32.partialorder %v338, %v1095
    %v1100 = vsel %vm1096, 1, 0
    %v1101 = vsel %vm1097, 1, 0
    %v1102 = vsel %vm1098, 1, 0
    %v1103 = vsel %vm1099, 1, 0
    %v1104 = vcvt.s32.f32 %v1100
    %v1105 = vcvt.s32.f32 %v1101
    %v1106 = vcvt.s32.f32 %v1102
    %v1107 = vcvt.s32.f32 %v1103
    %v1109 = vsel %vm199, %v1104, 0
    %v1112 = vsel %vm199, %v1105, 0
    %v1115 = vsel %vm199, %v1106, 0
    %v1118 = vsel %vm199, %v1107, 0
    %1120 = vmatprep.subr.mxu0 0.0
    %1121 = vmatpush1.msra.mxu0 %v190
    %1122 = vmatprep.subr.mxu0 0.0
    %1123 = vmatpush1.msra.mxu0 %v191
    %1124 = vmatprep.subr.mxu0 0.0
    %1125 = vmatpush1.msra.mxu0 %v192
    %1126 = vmatprep.subr.mxu0 0.0
    %1127 = vmatpush1.msra.mxu0 %v193
    %1128 = vmatprep.subr.mxu0 0.0
    %1129 = vmatpush1.msra.mxu0 0.0
    %1130 = vmatprep.subr.mxu0 0.0
    %1131 = vmatpush1.msra.mxu0 0.0
    %1132 = vmatprep.subr.mxu0 0.0
    %1133 = vmatpush1.msra.mxu0 0.0
    %1134 = vmatprep.subr.mxu0 0.0
    %1135 = vmatpush1.msra.mxu0 0.0
    %1136 = vmatprep.subr.mxu0 0.0
    %1137 = vmatpush1.msra.mxu0 0.0
    %1138 = vmatprep.subr.mxu0 0.0
    %1139 = vmatpush1.msra.mxu0 0.0
    %1140 = vmatprep.subr.mxu0 0.0
    %1141 = vmatpush1.msra.mxu0 0.0
    %1142 = vmatprep.subr.mxu0 0.0
    %1143 = vmatpush1.msra.mxu0 0.0
    %1144 = vmatprep.subr.mxu0 0.0
    %1145 = vmatpush1.msra.mxu0 0.0
    %1146 = vmatprep.subr.mxu0 0.0
    %1147 = vmatpush1.msra.mxu0 0.0
    %1148 = vmatprep.subr.mxu0 0.0
    %1149 = vmatpush1.msra.mxu0 0.0
    %1150 = vmatprep.subr.mxu0 0.0
    %1151 = vmatpush1.msra.mxu0 0.0
    %1152 = vmatprep.subr.mxu0 0.0
    %1153 = vmatpush1.msra.mxu0 0.0
    %1154 = vmatprep.subr.mxu0 0.0
    %1155 = vmatpush1.msra.mxu0 0.0
    %1156 = vmatprep.subr.mxu0 0.0
    %1157 = vmatpush1.msra.mxu0 0.0
    %1158 = vmatprep.subr.mxu0 0.0
    %1159 = vmatpush1.msra.mxu0 0.0
    %1160 = vmatprep.subr.mxu0 0.0
    %1161 = vmatpush1.msra.mxu0 0.0
    %1162 = vmatprep.subr.mxu0 0.0
    %1163 = vmatpush1.msra.mxu0 0.0
    %1164 = vmatprep.subr.mxu0 0.0
    %1165 = vmatpush1.msra.mxu0 0.0
    %1166 = vmatprep.subr.mxu0 0.0
    %1167 = vmatpush1.msra.mxu0 0.0
    %1168 = vmatprep.subr.mxu0 0.0
    %1169 = vmatpush1.msra.mxu0 0.0
    %1170 = vmatprep.subr.mxu0 0.0
    %1171 = vmatpush1.msra.mxu0 0.0
    %1172 = vmatprep.subr.mxu0 0.0
    %1173 = vmatpush1.msra.mxu0 0.0
    %1174 = vmatprep.subr.mxu0 0.0
    %1175 = vmatpush1.msra.mxu0 0.0
    %1176 = vmatprep.subr.mxu0 0.0
    %1177 = vmatpush1.msra.mxu0 0.0
    %1178 = vmatprep.subr.mxu0 0.0
    %1179 = vmatpush1.msra.mxu0 0.0
    %1180 = vmatprep.subr.mxu0 0.0
    %1181 = vmatpush1.msra.mxu0 0.0
    %1182 = vmatprep.subr.mxu0 0.0
    %1183 = vmatpush1.msra.mxu0 0.0
    %1184 = vmatprep.mubr.f32.mxu0 0.0
    %1185 = vmatmul.mubr.f32.gmra.mrb[0].mxu0 %v1109
    %v1186 = vpop.f32.mrb[0].mxu0
    %v1187 = vadd.f32 0.0, %v1186
    %v1188 = vpop.f32.mrb[0].mxu0
    %1189 = vmatprep.mubr.f32.mxu0 0.0
    %1190 = vmatmul.mubr.f32.gmra.mrb[0].mxu0 %v1112
    %v1191 = vpop.f32.mrb[0].mxu0
    %v1192 = vadd.f32 0.0, %v1191
    %v1193 = vpop.f32.mrb[0].mxu0
    %1194 = vmatprep.mubr.f32.mxu0 0.0
    %1195 = vmatmul.mubr.f32.gmra.mrb[0].mxu0 %v1115
    %v1196 = vpop.f32.mrb[0].mxu0
    %v1197 = vadd.f32 0.0, %v1196
    %v1198 = vpop.f32.mrb[0].mxu0
    %1199 = vmatprep.mubr.f32.mxu0 0.0
    %1200 = vmatmul.mubr.f32.gmra.mrb[0].mxu0 %v1118
    %v1201 = vpop.f32.mrb[0].mxu0
    %v1202 = vadd.f32 0.0, %v1201
    %v1203 = vpop.f32.mrb[0].mxu0
    %1204 = vdwg.mxu0
    %v1205 = vsub.f32 %v1187, %v190
    %v1206 = vsub.f32 %v1192, %v191
    %v1207 = vsub.f32 %v1197, %v192
    %v1208 = vsub.f32 %v1202, %v193
    %v1209 = vld [vmem:[#allocation2] sm:$0xf]
    %v1210 = vpack.c.bf16 %v604, %v599
    %v1211 = vpack.c.bf16 %v614, %v609
    %v1212 = vld [vmem:[%s23] sm:$0xf]
    %v1213 = vpack.c.bf16 %v191, %v190
    %v1214 = vpack.c.bf16 %v193, %v192
    %v1216 = vsel %vm282, %v1213, 0
    %v1219 = vsel %vm282, %v1214, 0
    %v1222 = vsel %vm286, %v1212, 0
    %1224 = vmatprep.subr.bf16.mxu0 0
    %1225 = vmatpush1.bf16.msra.mxu0 %v1222
    %1226 = vmatprep.subr.bf16.mxu0 0
    %1227 = vmatpush1.bf16.msra.mxu0 0
    %1228 = vmatprep.subr.bf16.mxu0 0
    %1229 = vmatpush1.bf16.msra.mxu0 0
    %1230 = vmatprep.subr.bf16.mxu0 0
    %1231 = vmatpush1.bf16.msra.mxu0 0
    %1232 = vmatprep.subr.bf16.mxu0 0
    %1233 = vmatpush1.bf16.msra.mxu0 0
    %1234 = vmatprep.subr.bf16.mxu0 0
    %1235 = vmatpush1.bf16.msra.mxu0 0
    %1236 = vmatprep.subr.bf16.mxu0 0
    %1237 = vmatpush1.bf16.msra.mxu0 0
    %1238 = vmatprep.subr.bf16.mxu0 0
    %1239 = vmatpush1.bf16.msra.mxu0 0
    %1240 = vmatprep.subr.bf16.mxu0 0
    %1241 = vmatpush1.bf16.msra.mxu0 0
    %1242 = vmatprep.subr.bf16.mxu0 0
    %1243 = vmatpush1.bf16.msra.mxu0 0
    %1244 = vmatprep.subr.bf16.mxu0 0
    %1245 = vmatpush1.bf16.msra.mxu0 0
    %1246 = vmatprep.subr.bf16.mxu0 0
    %1247 = vmatpush1.bf16.msra.mxu0 0
    %1248 = vmatprep.subr.bf16.mxu0 0
    %1249 = vmatpush1.bf16.msra.mxu0 0
    %1250 = vmatprep.subr.bf16.mxu0 0
    %1251 = vmatpush1.bf16.msra.mxu0 0
    %1252 = vmatprep.subr.bf16.mxu0 0
    %1253 = vmatpush1.bf16.msra.mxu0 0
    %1254 = vmatprep.subr.bf16.mxu0 0
    %1255 = vmatpush1.bf16.msra.mxu0 0
    %1256 = vmatprep.mubr.bf16.mxu0 0
    %1257 = vmatmul.mubr.bf16.gmra.mrb[0].mxu0 %v1216
    %v1258 = vpop.f32.mrb[0].mxu0
    %v1259 = vadd.f32 0.0, %v1258
    %v1260 = vpop.f32.mrb[0].mxu0
    %v1261 = vpop.f32.mrb[0].mxu0
    %v1262 = vadd.f32 0.0, %v1261
    %v1263 = vpop.f32.mrb[0].mxu0
    %1264 = vmatprep.mubr.bf16.mxu0 0
    %1265 = vmatmul.mubr.bf16.gmra.mrb[0].mxu0 %v1219
    %v1266 = vpop.f32.mrb[0].mxu0
    %v1267 = vadd.f32 0.0, %v1266
    %v1268 = vpop.f32.mrb[0].mxu0
    %v1269 = vpop.f32.mrb[0].mxu0
    %v1270 = vadd.f32 0.0, %v1269
    %v1271 = vpop.f32.mrb[0].mxu0
    %1272 = vdwg.mxu0
    %v1274 = vsel %vm282, %v1210, 0
    %v1277 = vsel %vm282, %v1211, 0
    %v1280 = vsel %vm286, %v1209, 0
    %1282 = vmatprep.subr.bf16.mxu0 0
    %1283 = vmatpush1.bf16.msra.mxu0 %v1280
    %1284 = vmatprep.subr.bf16.mxu0 0
    %1285 = vmatpush1.bf16.msra.mxu0 0
    %1286 = vmatprep.subr.bf16.mxu0 0
    %1287 = vmatpush1.bf16.msra.mxu0 0
    %1288 = vmatprep.subr.bf16.mxu0 0
    %1289 = vmatpush1.bf16.msra.mxu0 0
    %1290 = vmatprep.subr.bf16.mxu0 0
    %1291 = vmatpush1.bf16.msra.mxu0 0
    %1292 = vmatprep.subr.bf16.mxu0 0
    %1293 = vmatpush1.bf16.msra.mxu0 0
    %1294 = vmatprep.subr.bf16.mxu0 0
    %1295 = vmatpush1.bf16.msra.mxu0 0
    %1296 = vmatprep.subr.bf16.mxu0 0
    %1297 = vmatpush1.bf16.msra.mxu0 0
    %1298 = vmatprep.subr.bf16.mxu0 0
    %1299 = vmatpush1.bf16.msra.mxu0 0
    %1300 = vmatprep.subr.bf16.mxu0 0
    %1301 = vmatpush1.bf16.msra.mxu0 0
    %1302 = vmatprep.subr.bf16.mxu0 0
    %1303 = vmatpush1.bf16.msra.mxu0 0
    %1304 = vmatprep.subr.bf16.mxu0 0
    %1305 = vmatpush1.bf16.msra.mxu0 0
    %1306 = vmatprep.subr.bf16.mxu0 0
    %1307 = vmatpush1.bf16.msra.mxu0 0
    %1308 = vmatprep.subr.bf16.mxu0 0
    %1309 = vmatpush1.bf16.msra.mxu0 0
    %1310 = vmatprep.subr.bf16.mxu0 0
    %1311 = vmatpush1.bf16.msra.mxu0 0
    %1312 = vmatprep.subr.bf16.mxu0 0
    %1313 = vmatpush1.bf16.msra.mxu0 0
    %1314 = vmatprep.mubr.bf16.mxu0 0
    %1315 = vmatmul.mubr.bf16.gmra.mrb[0].mxu0 %v1274
    %v1316 = vpop.f32.mrb[0].mxu0
    %v1317 = vadd.f32 %v1259, %v1316
    %v1318 = vpop.f32.mrb[0].mxu0
    %v1319 = vpop.f32.mrb[0].mxu0
    %v1320 = vadd.f32 %v1262, %v1319
    %v1321 = vpop.f32.mrb[0].mxu0
    %1322 = vmatprep.mubr.bf16.mxu0 0
    %1323 = vmatmul.mubr.bf16.gmra.mrb[0].mxu0 %v1277
    %v1324 = vpop.f32.mrb[0].mxu0
    %v1325 = vadd.f32 %v1267, %v1324
    %v1326 = vpop.f32.mrb[0].mxu0
    %v1327 = vpop.f32.mrb[0].mxu0
    %v1328 = vadd.f32 %v1270, %v1327
    %v1329 = vpop.f32.mrb[0].mxu0
    %1330 = vdwg.mxu0
    %v1331 = vld [vmem:[%s25] sm:$0xf]
    %v1332 = vpack.c.bf16 %v759, %v758
    %v1333 = vpack.c.bf16 %v761, %v760
    %v1334 = vpack.c.bf16 %v908, %v907
    %v1335 = vpack.c.bf16 %v910, %v909
    %v1336 = vpack.c.bf16 %v1057, %v1056
    %v1337 = vpack.c.bf16 %v1059, %v1058
    %v1338 = vpack.c.bf16 %v1206, %v1205
    %v1339 = vpack.c.bf16 %v1208, %v1207
    %v1341 = vsel %vm282, %v1332, 0
    %v1344 = vsel %vm282, %v1333, 0
    %v1347 = vsel %vm282, %v1334, 0
    %v1350 = vsel %vm282, %v1335, 0
    %v1353 = vsel %vm282, %v1336, 0
    %v1356 = vsel %vm282, %v1337, 0
    %v1359 = vsel %vm282, %v1338, 0
    %v1362 = vsel %vm282, %v1339, 0
    %v1365 = vsel %vm286, %v1331, 0
    %1367 = vmatprep.subr.bf16.mxu0 0
    %1368 = vmatpush1.bf16.msra.mxu0 %v1365
    %1369 = vmatprep.subr.bf16.mxu0 0
    %1370 = vmatpush1.bf16.msra.mxu0 0
    %1371 = vmatprep.subr.bf16.mxu0 0
    %1372 = vmatpush1.bf16.msra.mxu0 0
    %1373 = vmatprep.subr.bf16.mxu0 0
    %1374 = vmatpush1.bf16.msra.mxu0 0
    %1375 = vmatprep.subr.bf16.mxu0 0
    %1376 = vmatpush1.bf16.msra.mxu0 0
    %1377 = vmatprep.subr.bf16.mxu0 0
    %1378 = vmatpush1.bf16.msra.mxu0 0
    %1379 = vmatprep.subr.bf16.mxu0 0
    %1380 = vmatpush1.bf16.msra.mxu0 0
    %1381 = vmatprep.subr.bf16.mxu0 0
    %1382 = vmatpush1.bf16.msra.mxu0 0
    %1383 = vmatprep.subr.bf16.mxu0 0
    %1384 = vmatpush1.bf16.msra.mxu0 0
    %1385 = vmatprep.subr.bf16.mxu0 0
    %1386 = vmatpush1.bf16.msra.mxu0 0
    %1387 = vmatprep.subr.bf16.mxu0 0
    %1388 = vmatpush1.bf16.msra.mxu0 0
    %1389 = vmatprep.subr.bf16.mxu0 0
    %1390 = vmatpush1.bf16.msra.mxu0 0
    %1391 = vmatprep.subr.bf16.mxu0 0
    %1392 = vmatpush1.bf16.msra.mxu0 0
    %1393 = vmatprep.subr.bf16.mxu0 0
    %1394 = vmatpush1.bf16.msra.mxu0 0
    %1395 = vmatprep.subr.bf16.mxu0 0
    %1396 = vmatpush1.bf16.msra.mxu0 0
    %1397 = vmatprep.subr.bf16.mxu0 0
    %1398 = vmatpush1.bf16.msra.mxu0 0
    %1399 = vmatprep.mubr.bf16.mxu0 0
    %1400 = vmatmul.mubr.bf16.gmra.mrb[0].mxu0 %v1341
    %v1401 = vpop.f32.mrb[0].mxu0
    %v1402 = vadd.f32 0.0, %v1401
    %v1403 = vpop.f32.mrb[0].mxu0
    %v1404 = vpop.f32.mrb[0].mxu0
    %v1405 = vadd.f32 0.0, %v1404
    %v1406 = vpop.f32.mrb[0].mxu0
    %1407 = vmatprep.mubr.bf16.mxu0 0
    %1408 = vmatmul.mubr.bf16.gmra.mrb[0].mxu0 %v1344
    %v1409 = vpop.f32.mrb[0].mxu0
    %v1410 = vadd.f32 0.0, %v1409
    %v1411 = vpop.f32.mrb[0].mxu0
    %v1412 = vpop.f32.mrb[0].mxu0
    %v1413 = vadd.f32 0.0, %v1412
    %v1414 = vpop.f32.mrb[0].mxu0
    %1415 = vmatprep.mubr.bf16.mxu0 0
    %1416 = vmatmul.mubr.bf16.gmra.mrb[0].mxu0 %v1347
    %v1417 = vpop.f32.mrb[0].mxu0
    %v1418 = vadd.f32 0.0, %v1417
    %v1419 = vpop.f32.mrb[0].mxu0
    %v1420 = vpop.f32.mrb[0].mxu0
    %v1421 = vadd.f32 0.0, %v1420
    %v1422 = vpop.f32.mrb[0].mxu0
    %1423 = vmatprep.mubr.bf16.mxu0 0
    %1424 = vmatmul.mubr.bf16.gmra.mrb[0].mxu0 %v1350
    %v1425 = vpop.f32.mrb[0].mxu0
    %v1426 = vadd.f32 0.0, %v1425
    %v1427 = vpop.f32.mrb[0].mxu0
    %v1428 = vpop.f32.mrb[0].mxu0
    %v1429 = vadd.f32 0.0, %v1428
    %v1430 = vpop.f32.mrb[0].mxu0
    %1431 = vmatprep.mubr.bf16.mxu0 0
    %1432 = vmatmul.mubr.bf16.gmra.mrb[0].mxu0 %v1353
    %v1433 = vpop.f32.mrb[0].mxu0
    %v1434 = vadd.f32 0.0, %v1433
    %v1435 = vpop.f32.mrb[0].mxu0
    %v1436 = vpop.f32.mrb[0].mxu0
    %v1437 = vadd.f32 0.0, %v1436
    %v1438 = vpop.f32.mrb[0].mxu0
    %1439 = vmatprep.mubr.bf16.mxu0 0
    %1440 = vmatmul.mubr.bf16.gmra.mrb[0].mxu0 %v1356
    %v1441 = vpop.f32.mrb[0].mxu0
    %v1442 = vadd.f32 0.0, %v1441
    %v1443 = vpop.f32.mrb[0].mxu0
    %v1444 = vpop.f32.mrb[0].mxu0
    %v1445 = vadd.f32 0.0, %v1444
    %v1446 = vpop.f32.mrb[0].mxu0
    %1447 = vmatprep.mubr.bf16.mxu0 0
    %1448 = vmatmul.mubr.bf16.gmra.mrb[0].mxu0 %v1359
    %v1449 = vpop.f32.mrb[0].mxu0
    %v1450 = vadd.f32 0.0, %v1449
    %v1451 = vpop.f32.mrb[0].mxu0
    %v1452 = vpop.f32.mrb[0].mxu0
    %v1453 = vadd.f32 0.0, %v1452
    %v1454 = vpop.f32.mrb[0].mxu0
    %1455 = vmatprep.mubr.bf16.mxu0 0
    %1456 = vmatmul.mubr.bf16.gmra.mrb[0].mxu0 %v1362
    %v1457 = vpop.f32.mrb[0].mxu0
    %v1458 = vadd.f32 0.0, %v1457
    %v1459 = vpop.f32.mrb[0].mxu0
    %v1460 = vpop.f32.mrb[0].mxu0
    %v1461 = vadd.f32 0.0, %v1460
    %v1462 = vpop.f32.mrb[0].mxu0
    %1463 = vdwg.mxu0
    %v1464 = vadd.f32 %v1317, %v1402
    %v1465 = vadd.f32 %v1320, %v1405
    %v1466 = vadd.f32 %v1325, %v1410
    %v1467 = vadd.f32 %v1328, %v1413
    %v1468 = vadd.f32 %v1317, %v1418
    %v1469 = vadd.f32 %v1320, %v1421
    %v1470 = vadd.f32 %v1325, %v1426
    %v1471 = vadd.f32 %v1328, %v1429
    %v1472 = vadd.f32 %v1317, %v1434
    %v1473 = vadd.f32 %v1320, %v1437
    %v1474 = vadd.f32 %v1325, %v1442
    %v1475 = vadd.f32 %v1328, %v1445
    %v1476 = vadd.f32 %v1317, %v1450
    %v1477 = vadd.f32 %v1320, %v1453
    %v1478 = vadd.f32 %v1325, %v1458
    %v1479 = vadd.f32 %v1328, %v1461
    %v1480 = vmax.f32 %v1464, 0.0
    %v1481 = vmax.f32 %v1465, 0.0
    %v1482 = vmax.f32 %v1466, 0.0
    %v1483 = vmax.f32 %v1467, 0.0
    %v1484 = vmax.f32 %v1468, 0.0
    %v1485 = vmax.f32 %v1469, 0.0
    %v1486 = vmax.f32 %v1470, 0.0
    %v1487 = vmax.f32 %v1471, 0.0
    %v1488 = vmax.f32 %v1472, 0.0
    %v1489 = vmax.f32 %v1473, 0.0
    %v1490 = vmax.f32 %v1474, 0.0
    %v1491 = vmax.f32 %v1475, 0.0
    %v1492 = vmax.f32 %v1476, 0.0
    %v1493 = vmax.f32 %v1477, 0.0
    %v1494 = vmax.f32 %v1478, 0.0
    %v1495 = vmax.f32 %v1479, 0.0
    %v1496 = vld [vmem:[%s27] sm:$0xf]
    %v1497 = vld [vmem:[%s27 + $0x4] sm:$0xf]
    %v1498 = vpack.c.bf16 %v1481, %v1480
    %v1499 = vpack.c.bf16 %v1483, %v1482
    %v1500 = vpack.c.bf16 %v1485, %v1484
    %v1501 = vpack.c.bf16 %v1487, %v1486
    %v1502 = vpack.c.bf16 %v1489, %v1488
    %v1503 = vpack.c.bf16 %v1491, %v1490
    %v1504 = vpack.c.bf16 %v1493, %v1492
    %v1505 = vpack.c.bf16 %v1495, %v1494
    %v1508 = vunpack.c.l.b16 %v1496
    %v1509 = vunpack.c.l.b16 %v1497
    %v1510 = vpack.c.b16 %v1509, %v1508
    %vm1512 = vcmask 130048
    %v1514 = vsel %vm1512, %v1498, 0
    %v1517 = vsel %vm1512, %v1499, 0
    %v1520 = vsel %vm1512, %v1500, 0
    %v1523 = vsel %vm1512, %v1501, 0
    %v1526 = vsel %vm1512, %v1502, 0
    %v1529 = vsel %vm1512, %v1503, 0
    %v1532 = vsel %vm1512, %v1504, 0
    %v1535 = vsel %vm1512, %v1505, 0
    %1537 = vmatprep.subr.bf16.mxu0 0
    %1538 = vmatpush1.bf16.msra.mxu0 %v1510
    %1539 = vmatprep.subr.bf16.mxu0 0
    %1540 = vmatpush1.bf16.msra.mxu0 0
    %1541 = vmatprep.subr.bf16.mxu0 0
    %1542 = vmatpush1.bf16.msra.mxu0 0
    %1543 = vmatprep.subr.bf16.mxu0 0
    %1544 = vmatpush1.bf16.msra.mxu0 0
    %1545 = vmatprep.subr.bf16.mxu0 0
    %1546 = vmatpush1.bf16.msra.mxu0 0
    %1547 = vmatprep.subr.bf16.mxu0 0
    %1548 = vmatpush1.bf16.msra.mxu0 0
    %1549 = vmatprep.subr.bf16.mxu0 0
    %1550 = vmatpush1.bf16.msra.mxu0 0
    %1551 = vmatprep.subr.bf16.mxu0 0
    %1552 = vmatpush1.bf16.msra.mxu0 0
    %1553 = vmatprep.subr.bf16.mxu0 0
    %1554 = vmatpush1.bf16.msra.mxu0 0
    %1555 = vmatprep.subr.bf16.mxu0 0
    %1556 = vmatpush1.bf16.msra.mxu0 0
    %1557 = vmatprep.subr.bf16.mxu0 0
    %1558 = vmatpush1.bf16.msra.mxu0 0
    %1559 = vmatprep.subr.bf16.mxu0 0
    %1560 = vmatpush1.bf16.msra.mxu0 0
    %1561 = vmatprep.subr.bf16.mxu0 0
    %1562 = vmatpush1.bf16.msra.mxu0 0
    %1563 = vmatprep.subr.bf16.mxu0 0
    %1564 = vmatpush1.bf16.msra.mxu0 0
    %1565 = vmatprep.subr.bf16.mxu0 0
    %1566 = vmatpush1.bf16.msra.mxu0 0
    %1567 = vmatprep.subr.bf16.mxu0 0
    %1568 = vmatpush1.bf16.msra.mxu0 0
    %1569 = vmatprep.mubr.bf16.mxu0 0
    %1570 = vmatmul.mubr.bf16.gmra.mrb[0].mxu0 %v1514
    %v1571 = vpop.f32.mrb[0].mxu0
    %v1572 = vadd.f32 0.0, %v1571
    %v1573 = vpop.f32.mrb[0].mxu0
    %v1574 = vpop.f32.mrb[0].mxu0
    %v1575 = vadd.f32 0.0, %v1574
    %v1576 = vpop.f32.mrb[0].mxu0
    %1577 = vmatprep.mubr.bf16.mxu0 0
    %1578 = vmatmul.mubr.bf16.gmra.mrb[0].mxu0 %v1517
    %v1579 = vpop.f32.mrb[0].mxu0
    %v1580 = vadd.f32 0.0, %v1579
    %v1581 = vpop.f32.mrb[0].mxu0
    %v1582 = vpop.f32.mrb[0].mxu0
    %v1583 = vadd.f32 0.0, %v1582
    %v1584 = vpop.f32.mrb[0].mxu0
    %1585 = vmatprep.mubr.bf16.mxu0 0
    %1586 = vmatmul.mubr.bf16.gmra.mrb[0].mxu0 %v1520
    %v1587 = vpop.f32.mrb[0].mxu0
    %v1588 = vadd.f32 0.0, %v1587
    %v1589 = vpop.f32.mrb[0].mxu0
    %v1590 = vpop.f32.mrb[0].mxu0
    %v1591 = vadd.f32 0.0, %v1590
    %v1592 = vpop.f32.mrb[0].mxu0
    %1593 = vmatprep.mubr.bf16.mxu0 0
    %1594 = vmatmul.mubr.bf16.gmra.mrb[0].mxu0 %v1523
    %v1595 = vpop.f32.mrb[0].mxu0
    %v1596 = vadd.f32 0.0, %v1595
    %v1597 = vpop.f32.mrb[0].mxu0
    %v1598 = vpop.f32.mrb[0].mxu0
    %v1599 = vadd.f32 0.0, %v1598
    %v1600 = vpop.f32.mrb[0].mxu0
    %1601 = vmatprep.mubr.bf16.mxu0 0
    %1602 = vmatmul.mubr.bf16.gmra.mrb[0].mxu0 %v1526
    %v1603 = vpop.f32.mrb[0].mxu0
    %v1604 = vadd.f32 0.0, %v1603
    %v1605 = vpop.f32.mrb[0].mxu0
    %v1606 = vpop.f32.mrb[0].mxu0
    %v1607 = vadd.f32 0.0, %v1606
    %v1608 = vpop.f32.mrb[0].mxu0
    %1609 = vmatprep.mubr.bf16.mxu0 0
    %1610 = vmatmul.mubr.bf16.gmra.mrb[0].mxu0 %v1529
    %v1611 = vpop.f32.mrb[0].mxu0
    %v1612 = vadd.f32 0.0, %v1611
    %v1613 = vpop.f32.mrb[0].mxu0
    %v1614 = vpop.f32.mrb[0].mxu0
    %v1615 = vadd.f32 0.0, %v1614
    %v1616 = vpop.f32.mrb[0].mxu0
    %1617 = vmatprep.mubr.bf16.mxu0 0
    %1618 = vmatmul.mubr.bf16.gmra.mrb[0].mxu0 %v1532
    %v1619 = vpop.f32.mrb[0].mxu0
    %v1620 = vadd.f32 0.0, %v1619
    %v1621 = vpop.f32.mrb[0].mxu0
    %v1622 = vpop.f32.mrb[0].mxu0
    %v1623 = vadd.f32 0.0, %v1622
    %v1624 = vpop.f32.mrb[0].mxu0
    %1625 = vmatprep.mubr.bf16.mxu0 0
    %1626 = vmatmul.mubr.bf16.gmra.mrb[0].mxu0 %v1535
    %v1627 = vpop.f32.mrb[0].mxu0
    %v1628 = vadd.f32 0.0, %v1627
    %v1629 = vpop.f32.mrb[0].mxu0
    %v1630 = vpop.f32.mrb[0].mxu0
    %v1631 = vadd.f32 0.0, %v1630
    %v1632 = vpop.f32.mrb[0].mxu0
    %1633 = vdwg.mxu0
    %v1634 = vmax.f32 %v1572, 0.0
    %v1635 = vmax.f32 %v1575, 0.0
    %v1636 = vmax.f32 %v1580, 0.0
    %v1637 = vmax.f32 %v1583, 0.0
    %v1638 = vmax.f32 %v1588, 0.0
    %v1639 = vmax.f32 %v1591, 0.0
    %v1640 = vmax.f32 %v1596, 0.0
    %v1641 = vmax.f32 %v1599, 0.0
    %v1642 = vmax.f32 %v1604, 0.0
    %v1643 = vmax.f32 %v1607, 0.0
    %v1644 = vmax.f32 %v1612, 0.0
    %v1645 = vmax.f32 %v1615, 0.0
    %v1646 = vmax.f32 %v1620, 0.0
    %v1647 = vmax.f32 %v1623, 0.0
    %v1648 = vmax.f32 %v1628, 0.0
    %v1649 = vmax.f32 %v1631, 0.0
    %v1650 = vld [vmem:[%s29] sm:$0xf]
    %v1651 = vld [vmem:[%s29 + $0x4] sm:$0xf]
    %v1652 = vpack.c.bf16 %v1635, %v1634
    %v1653 = vpack.c.bf16 %v1637, %v1636
    %v1654 = vpack.c.bf16 %v1639, %v1638
    %v1655 = vpack.c.bf16 %v1641, %v1640
    %v1656 = vpack.c.bf16 %v1643, %v1642
    %v1657 = vpack.c.bf16 %v1645, %v1644
    %v1658 = vpack.c.bf16 %v1647, %v1646
    %v1659 = vpack.c.bf16 %v1649, %v1648
    %v1662 = vunpack.c.l.b16 %v1650
    %v1663 = vunpack.c.l.b16 %v1651
    %v1664 = vpack.c.b16 %v1663, %v1662
    %v1667 = vsel %vm1512, %v1652, 0
    %v1670 = vsel %vm1512, %v1653, 0
    %v1673 = vsel %vm1512, %v1654, 0
    %v1676 = vsel %vm1512, %v1655, 0
    %v1679 = vsel %vm1512, %v1656, 0
    %v1682 = vsel %vm1512, %v1657, 0
    %v1685 = vsel %vm1512, %v1658, 0
    %v1688 = vsel %vm1512, %v1659, 0
    %1690 = vmatprep.subr.bf16.mxu0 0
    %1691 = vmatpush1.bf16.msra.mxu0 %v1664
    %1692 = vmatprep.subr.bf16.mxu0 0
    %1693 = vmatpush1.bf16.msra.mxu0 0
    %1694 = vmatprep.subr.bf16.mxu0 0
    %1695 = vmatpush1.bf16.msra.mxu0 0
    %1696 = vmatprep.subr.bf16.mxu0 0
    %1697 = vmatpush1.bf16.msra.mxu0 0
    %1698 = vmatprep.subr.bf16.mxu0 0
    %1699 = vmatpush1.bf16.msra.mxu0 0
    %1700 = vmatprep.subr.bf16.mxu0 0
    %1701 = vmatpush1.bf16.msra.mxu0 0
    %1702 = vmatprep.subr.bf16.mxu0 0
    %1703 = vmatpush1.bf16.msra.mxu0 0
    %1704 = vmatprep.subr.bf16.mxu0 0
    %1705 = vmatpush1.bf16.msra.mxu0 0
    %1706 = vmatprep.subr.bf16.mxu0 0
    %1707 = vmatpush1.bf16.msra.mxu0 0
    %1708 = vmatprep.subr.bf16.mxu0 0
    %1709 = vmatpush1.bf16.msra.mxu0 0
    %1710 = vmatprep.subr.bf16.mxu0 0
    %1711 = vmatpush1.bf16.msra.mxu0 0
    %1712 = vmatprep.subr.bf16.mxu0 0
    %1713 = vmatpush1.bf16.msra.mxu0 0
    %1714 = vmatprep.subr.bf16.mxu0 0
    %1715 = vmatpush1.bf16.msra.mxu0 0
    %1716 = vmatprep.subr.bf16.mxu0 0
    %1717 = vmatpush1.bf16.msra.mxu0 0
    %1718 = vmatprep.subr.bf16.mxu0 0
    %1719 = vmatpush1.bf16.msra.mxu0 0
    %1720 = vmatprep.subr.bf16.mxu0 0
    %1721 = vmatpush1.bf16.msra.mxu0 0
    %1722 = vmatprep.mubr.bf16.mxu0 0
    %1723 = vmatmul.mubr.bf16.gmra.mrb[0].mxu0 %v1667
    %v1724 = vpop.f32.mrb[0].mxu0
    %v1725 = vadd.f32 0.0, %v1724
    %v1726 = vpop.f32.mrb[0].mxu0
    %v1727 = vpop.f32.mrb[0].mxu0
    %v1728 = vadd.f32 0.0, %v1727
    %v1729 = vpop.f32.mrb[0].mxu0
    %1730 = vmatprep.mubr.bf16.mxu0 0
    %1731 = vmatmul.mubr.bf16.gmra.mrb[0].mxu0 %v1670
    %v1732 = vpop.f32.mrb[0].mxu0
    %v1733 = vadd.f32 0.0, %v1732
    %v1734 = vpop.f32.mrb[0].mxu0
    %v1735 = vpop.f32.mrb[0].mxu0
    %v1736 = vadd.f32 0.0, %v1735
    %v1737 = vpop.f32.mrb[0].mxu0
    %1738 = vmatprep.mubr.bf16.mxu0 0
    %1739 = vmatmul.mubr.bf16.gmra.mrb[0].mxu0 %v1673
    %v1740 = vpop.f32.mrb[0].mxu0
    %v1741 = vadd.f32 0.0, %v1740
    %v1742 = vpop.f32.mrb[0].mxu0
    %v1743 = vpop.f32.mrb[0].mxu0
    %v1744 = vadd.f32 0.0, %v1743
    %v1745 = vpop.f32.mrb[0].mxu0
    %1746 = vmatprep.mubr.bf16.mxu0 0
    %1747 = vmatmul.mubr.bf16.gmra.mrb[0].mxu0 %v1676
    %v1748 = vpop.f32.mrb[0].mxu0
    %v1749 = vadd.f32 0.0, %v1748
    %v1750 = vpop.f32.mrb[0].mxu0
    %v1751 = vpop.f32.mrb[0].mxu0
    %v1752 = vadd.f32 0.0, %v1751
    %v1753 = vpop.f32.mrb[0].mxu0
    %1754 = vmatprep.mubr.bf16.mxu0 0
    %1755 = vmatmul.mubr.bf16.gmra.mrb[0].mxu0 %v1679
    %v1756 = vpop.f32.mrb[0].mxu0
    %v1757 = vadd.f32 0.0, %v1756
    %v1758 = vpop.f32.mrb[0].mxu0
    %v1759 = vpop.f32.mrb[0].mxu0
    %v1760 = vadd.f32 0.0, %v1759
    %v1761 = vpop.f32.mrb[0].mxu0
    %1762 = vmatprep.mubr.bf16.mxu0 0
    %1763 = vmatmul.mubr.bf16.gmra.mrb[0].mxu0 %v1682
    %v1764 = vpop.f32.mrb[0].mxu0
    %v1765 = vadd.f32 0.0, %v1764
    %v1766 = vpop.f32.mrb[0].mxu0
    %v1767 = vpop.f32.mrb[0].mxu0
    %v1768 = vadd.f32 0.0, %v1767
    %v1769 = vpop.f32.mrb[0].mxu0
    %1770 = vmatprep.mubr.bf16.mxu0 0
    %1771 = vmatmul.mubr.bf16.gmra.mrb[0].mxu0 %v1685
    %v1772 = vpop.f32.mrb[0].mxu0
    %v1773 = vadd.f32 0.0, %v1772
    %v1774 = vpop.f32.mrb[0].mxu0
    %v1775 = vpop.f32.mrb[0].mxu0
    %v1776 = vadd.f32 0.0, %v1775
    %v1777 = vpop.f32.mrb[0].mxu0
    %1778 = vmatprep.mubr.bf16.mxu0 0
    %1779 = vmatmul.mubr.bf16.gmra.mrb[0].mxu0 %v1688
    %v1780 = vpop.f32.mrb[0].mxu0
    %v1781 = vadd.f32 0.0, %v1780
    %v1782 = vpop.f32.mrb[0].mxu0
    %v1783 = vpop.f32.mrb[0].mxu0
    %v1784 = vadd.f32 0.0, %v1783
    %v1785 = vpop.f32.mrb[0].mxu0
    %1786 = vdwg.mxu0
    %v1787 = vmax.f32 %v1725, 0.0
    %v1788 = vmax.f32 %v1728, 0.0
    %v1789 = vmax.f32 %v1733, 0.0
    %v1790 = vmax.f32 %v1736, 0.0
    %v1791 = vmax.f32 %v1741, 0.0
    %v1792 = vmax.f32 %v1744, 0.0
    %v1793 = vmax.f32 %v1749, 0.0
    %v1794 = vmax.f32 %v1752, 0.0
    %v1795 = vmax.f32 %v1757, 0.0
    %v1796 = vmax.f32 %v1760, 0.0
    %v1797 = vmax.f32 %v1765, 0.0
    %v1798 = vmax.f32 %v1768, 0.0
    %v1799 = vmax.f32 %v1773, 0.0
    %v1800 = vmax.f32 %v1776, 0.0
    %v1801 = vmax.f32 %v1781, 0.0
    %v1802 = vmax.f32 %v1784, 0.0
    %v1803 = vmax.f32 %v1787, %v1791
    %v1804 = vmax.f32 %v1788, %v1792
    %v1805 = vmax.f32 %v1789, %v1793
    %v1806 = vmax.f32 %v1790, %v1794
    %v1807 = vmax.f32 %v1803, %v1795
    %v1808 = vmax.f32 %v1804, %v1796
    %v1809 = vmax.f32 %v1805, %v1797
    %v1810 = vmax.f32 %v1806, %v1798
    %v1811 = vmax.f32 %v1807, %v1799
    %v1812 = vmax.f32 %v1808, %v1800
    %v1813 = vmax.f32 %v1809, %v1801
    %v1814 = vmax.f32 %v1810, %v1802
    %v1815 = vld [vmem:[%s31] sm:$0xf]
    %v1817 = vsel %vm286, %v1815, 0
    %1819 = vmatprep.subr.bf16.mxu0 0
    %1820 = vmatpush1.bf16.msra.mxu0 %v1817
    %1821 = vmatprep.subr.bf16.mxu0 0
    %1822 = vmatpush1.bf16.msra.mxu0 0
    %1823 = vmatprep.subr.bf16.mxu0 0
    %1824 = vmatpush1.bf16.msra.mxu0 0
    %1825 = vmatprep.subr.bf16.mxu0 0
    %1826 = vmatpush1.bf16.msra.mxu0 0
    %1827 = vmatprep.subr.bf16.mxu0 0
    %1828 = vmatpush1.bf16.msra.mxu0 0
    %1829 = vmatprep.subr.bf16.mxu0 0
    %1830 = vmatpush1.bf16.msra.mxu0 0
    %1831 = vmatprep.subr.bf16.mxu0 0
    %1832 = vmatpush1.bf16.msra.mxu0 0
    %1833 = vmatprep.subr.bf16.mxu0 0
    %1834 = vmatpush1.bf16.msra.mxu0 0
    %1835 = vmatprep.subr.bf16.mxu0 0
    %1836 = vmatpush1.bf16.msra.mxu0 0
    %1837 = vmatprep.subr.bf16.mxu0 0
    %1838 = vmatpush1.bf16.msra.mxu0 0
    %1839 = vmatprep.subr.bf16.mxu0 0
    %1840 = vmatpush1.bf16.msra.mxu0 0
    %1841 = vmatprep.subr.bf16.mxu0 0
    %1842 = vmatpush1.bf16.msra.mxu0 0
    %1843 = vmatprep.subr.bf16.mxu0 0
    %1844 = vmatpush1.bf16.msra.mxu0 0
    %1845 = vmatprep.subr.bf16.mxu0 0
    %1846 = vmatpush1.bf16.msra.mxu0 0
    %1847 = vmatprep.subr.bf16.mxu0 0
    %1848 = vmatpush1.bf16.msra.mxu0 0
    %1849 = vmatprep.subr.bf16.mxu0 0
    %1850 = vmatpush1.bf16.msra.mxu0 0
    %1851 = vmatprep.mubr.bf16.mxu0 0
    %1852 = vmatmul.mubr.bf16.gmra.mrb[0].mxu0 %v1216
    %v1853 = vpop.f32.mrb[0].mxu0
    %v1854 = vadd.f32 0.0, %v1853
    %v1855 = vpop.f32.mrb[0].mxu0
    %v1856 = vpop.f32.mrb[0].mxu0
    %v1857 = vadd.f32 0.0, %v1856
    %v1858 = vpop.f32.mrb[0].mxu0
    %1859 = vmatprep.mubr.bf16.mxu0 0
    %1860 = vmatmul.mubr.bf16.gmra.mrb[0].mxu0 %v1219
    %v1861 = vpop.f32.mrb[0].mxu0
    %v1862 = vadd.f32 0.0, %v1861
    %v1863 = vpop.f32.mrb[0].mxu0
    %v1864 = vpop.f32.mrb[0].mxu0
    %v1865 = vadd.f32 0.0, %v1864
    %v1866 = vpop.f32.mrb[0].mxu0
    %1867 = vdwg.mxu0
    %v1868 = vadd.f32 %v1811, %v1854
    %v1869 = vadd.f32 %v1812, %v1857
    %v1870 = vadd.f32 %v1813, %v1862
    %v1871 = vadd.f32 %v1814, %v1865
    %v1872 = vmax.f32 %v1868, 0.0
    %v1873 = vmax.f32 %v1869, 0.0
    %v1874 = vmax.f32 %v1870, 0.0
    %v1875 = vmax.f32 %v1871, 0.0
    %1876 = vmatprep.subr.mxu0 0.0
    %1877 = vmatpush1.msra.mxu0 %v1872
    %1878 = vmatprep.subr.mxu0 0.0
    %1879 = vmatpush1.msra.mxu0 %v1873
    %1880 = vmatprep.subr.mxu0 0.0
    %1881 = vmatpush1.msra.mxu0 %v1874
    %1882 = vmatprep.subr.mxu0 0.0
    %1883 = vmatpush1.msra.mxu0 %v1875
    %1884 = vmatprep.subr.mxu0 0.0
    %1885 = vmatpush1.msra.mxu0 0.0
    %1886 = vmatprep.subr.mxu0 0.0
    %1887 = vmatpush1.msra.mxu0 0.0
    %1888 = vmatprep.subr.mxu0 0.0
    %1889 = vmatpush1.msra.mxu0 0.0
    %1890 = vmatprep.subr.mxu0 0.0
    %1891 = vmatpush1.msra.mxu0 0.0
    %1892 = vmatprep.subr.mxu0 0.0
    %1893 = vmatpush1.msra.mxu0 0.0
    %1894 = vmatprep.subr.mxu0 0.0
    %1895 = vmatpush1.msra.mxu0 0.0
    %1896 = vmatprep.subr.mxu0 0.0
    %1897 = vmatpush1.msra.mxu0 0.0
    %1898 = vmatprep.subr.mxu0 0.0
    %1899 = vmatpush1.msra.mxu0 0.0
    %1900 = vmatprep.subr.mxu0 0.0
    %1901 = vmatpush1.msra.mxu0 0.0
    %1902 = vmatprep.subr.mxu0 0.0
    %1903 = vmatpush1.msra.mxu0 0.0
    %1904 = vmatprep.subr.mxu0 0.0
    %1905 = vmatpush1.msra.mxu0 0.0
    %1906 = vmatprep.subr.mxu0 0.0
    %1907 = vmatpush1.msra.mxu0 0.0
    %1908 = vmatprep.subr.mxu0 0.0
    %1909 = vmatpush1.msra.mxu0 0.0
    %1910 = vmatprep.subr.mxu0 0.0
    %1911 = vmatpush1.msra.mxu0 0.0
    %1912 = vmatprep.subr.mxu0 0.0
    %1913 = vmatpush1.msra.mxu0 0.0
    %1914 = vmatprep.subr.mxu0 0.0
    %1915 = vmatpush1.msra.mxu0 0.0
    %1916 = vmatprep.subr.mxu0 0.0
    %1917 = vmatpush1.msra.mxu0 0.0
    %1918 = vmatprep.subr.mxu0 0.0
    %1919 = vmatpush1.msra.mxu0 0.0
    %1920 = vmatprep.subr.mxu0 0.0
    %1921 = vmatpush1.msra.mxu0 0.0
    %1922 = vmatprep.subr.mxu0 0.0
    %1923 = vmatpush1.msra.mxu0 0.0
    %1924 = vmatprep.subr.mxu0 0.0
    %1925 = vmatpush1.msra.mxu0 0.0
    %1926 = vmatprep.subr.mxu0 0.0
    %1927 = vmatpush1.msra.mxu0 0.0
    %1928 = vmatprep.subr.mxu0 0.0
    %1929 = vmatpush1.msra.mxu0 0.0
    %1930 = vmatprep.subr.mxu0 0.0
    %1931 = vmatpush1.msra.mxu0 0.0
    %1932 = vmatprep.subr.mxu0 0.0
    %1933 = vmatpush1.msra.mxu0 0.0
    %1934 = vmatprep.subr.mxu0 0.0
    %1935 = vmatpush1.msra.mxu0 0.0
    %1936 = vmatprep.subr.mxu0 0.0
    %1937 = vmatpush1.msra.mxu0 0.0
    %1938 = vmatprep.subr.mxu0 0.0
    %1939 = vmatpush1.msra.mxu0 0.0
    %1940 = vmatprep.mubr.f32.mxu0 0.0
    %1941 = vmatmul.mubr.f32.gmra.mrb[0].mxu0 %v201
    %v1942 = vpop.f32.mrb[0].mxu0
    %v1943 = vadd.f32 0.0, %v1942
    %v1944 = vpop.f32.mrb[0].mxu0
    %1945 = vdwg.mxu0
    %v1946 = vld [vmem:[%s33] sm:$0xf]
    %v1947 = vpack.c.bf16 %v330, %v330
    %v1948 = vld [vmem:[%s35] sm:$0xf]
    %v1949 = vld [vmem:[%s35 + $0x4] sm:$0xf]
    %v1950 = vld [vmem:[%s35 + $0x8] sm:$0xf]
    %v1951 = vld [vmem:[%s35 + $0xc] sm:$0xf]
    %v1952 = vpack.c.bf16 %v1943, %v1943
    %v1957 = vunpack.c.l.b16 %v1948
    %v1958 = vunpack.c.l.b16 %v1949
    %v1959 = vunpack.c.l.b16 %v1950
    %v1960 = vunpack.c.l.b16 %v1951
    %v1961 = vpack.c.b16 %v1958, %v1957
    %v1962 = vpack.c.b16 %v1960, %v1959
    %v1966 = vsel %vm199, %v1952, 0
    %1968 = vmatprep.subr.bf16.mxu0 0
    %1969 = vmatpush1.bf16.msra.mxu0 %v1961
    %1970 = vmatprep.subr.bf16.mxu0 0
    %1971 = vmatpush1.bf16.msra.mxu0 %v1962
    %1972 = vmatprep.subr.bf16.mxu0 0
    %1973 = vmatpush1.bf16.msra.mxu0 0
    %1974 = vmatprep.subr.bf16.mxu0 0
    %1975 = vmatpush1.bf16.msra.mxu0 0
    %1976 = vmatprep.subr.bf16.mxu0 0
    %1977 = vmatpush1.bf16.msra.mxu0 0
    %1978 = vmatprep.subr.bf16.mxu0 0
    %1979 = vmatpush1.bf16.msra.mxu0 0
    %1980 = vmatprep.subr.bf16.mxu0 0
    %1981 = vmatpush1.bf16.msra.mxu0 0
    %1982 = vmatprep.subr.bf16.mxu0 0
    %1983 = vmatpush1.bf16.msra.mxu0 0
    %1984 = vmatprep.subr.bf16.mxu0 0
    %1985 = vmatpush1.bf16.msra.mxu0 0
    %1986 = vmatprep.subr.bf16.mxu0 0
    %1987 = vmatpush1.bf16.msra.mxu0 0
    %1988 = vmatprep.subr.bf16.mxu0 0
    %1989 = vmatpush1.bf16.msra.mxu0 0
    %1990 = vmatprep.subr.bf16.mxu0 0
    %1991 = vmatpush1.bf16.msra.mxu0 0
    %1992 = vmatprep.subr.bf16.mxu0 0
    %1993 = vmatpush1.bf16.msra.mxu0 0
    %1994 = vmatprep.subr.bf16.mxu0 0
    %1995 = vmatpush1.bf16.msra.mxu0 0
    %1996 = vmatprep.subr.bf16.mxu0 0
    %1997 = vmatpush1.bf16.msra.mxu0 0
    %1998 = vmatprep.subr.bf16.mxu0 0
    %1999 = vmatpush1.bf16.msra.mxu0 0
    %2000 = vmatprep.mubr.bf16.mxu0 0
    %2001 = vmatmul.mubr.bf16.gmra.mrb[0].mxu0 %v1966
    %v2002 = vpop.f32.mrb[0].mxu0
    %v2003 = vadd.f32 0.0, %v2002
    %v2004 = vpop.f32.mrb[0].mxu0
    %v2005 = vpop.f32.mrb[0].mxu0
    %v2006 = vpop.f32.mrb[0].mxu0
    %2007 = vdwg.mxu0
    %v2009 = vsel %vm282, %v1947, 0
    %v2012 = vsel %vm286, %v1946, 0
    %2014 = vmatprep.subr.bf16.mxu0 0
    %2015 = vmatpush1.bf16.msra.mxu0 %v2012
    %2016 = vmatprep.subr.bf16.mxu0 0
    %2017 = vmatpush1.bf16.msra.mxu0 0
    %2018 = vmatprep.subr.bf16.mxu0 0
    %2019 = vmatpush1.bf16.msra.mxu0 0
    %2020 = vmatprep.subr.bf16.mxu0 0
    %2021 = vmatpush1.bf16.msra.mxu0 0
    %2022 = vmatprep.subr.bf16.mxu0 0
    %2023 = vmatpush1.bf16.msra.mxu0 0
    %2024 = vmatprep.subr.bf16.mxu0 0
    %2025 = vmatpush1.bf16.msra.mxu0 0
    %2026 = vmatprep.subr.bf16.mxu0 0
    %2027 = vmatpush1.bf16.msra.mxu0 0
    %2028 = vmatprep.subr.bf16.mxu0 0
    %2029 = vmatpush1.bf16.msra.mxu0 0
    %2030 = vmatprep.subr.bf16.mxu0 0
    %2031 = vmatpush1.bf16.msra.mxu0 0
    %2032 = vmatprep.subr.bf16.mxu0 0
    %2033 = vmatpush1.bf16.msra.mxu0 0
    %2034 = vmatprep.subr.bf16.mxu0 0
    %2035 = vmatpush1.bf16.msra.mxu0 0
    %2036 = vmatprep.subr.bf16.mxu0 0
    %2037 = vmatpush1.bf16.msra.mxu0 0
    %2038 = vmatprep.subr.bf16.mxu0 0
    %2039 = vmatpush1.bf16.msra.mxu0 0
    %2040 = vmatprep.subr.bf16.mxu0 0
    %2041 = vmatpush1.bf16.msra.mxu0 0
    %2042 = vmatprep.subr.bf16.mxu0 0
    %2043 = vmatpush1.bf16.msra.mxu0 0
    %2044 = vmatprep.subr.bf16.mxu0 0
    %2045 = vmatpush1.bf16.msra.mxu0 0
    %2046 = vmatprep.mubr.bf16.mxu0 0
    %2047 = vmatmul.mubr.bf16.gmra.mrb[0].mxu0 %v2009
    %v2048 = vpop.f32.mrb[0].mxu0
    %v2049 = vadd.f32 %v2003, %v2048
    %v2050 = vpop.f32.mrb[0].mxu0
    %v2051 = vpop.f32.mrb[0].mxu0
    %v2052 = vpop.f32.mrb[0].mxu0
    %2053 = vdwg.mxu0
    %v2054 = vld [vmem:[#allocation5] sm:$0x1]
    %v2056 = vlaneseq
    %v2057 = vshrl.u32 %v2056, 7
    %v2058 = vsub.s32 0, %v2057
    %v2059 = vrot.slane %v2054, %v2058
    %v2061 = vadd.f32 %v2049, %v2059
    %v2062 = vmax.f32 %v2061, 0.0
    %v2064 = vsel %vm199, %v1872, 0
    %v2067 = vsel %vm199, %v1873, 0
    %v2070 = vsel %vm199, %v1874, 0
    %v2073 = vsel %vm199, %v1875, 0
    %2075 = vmatprep.subr.mxu0 0.0
    %2076 = vmatpush1.xpose.msra.mxu0 %v2064
    %2077 = vmatprep.subr.mxu0 0.0
    %2078 = vmatpush1.xpose.msra.mxu0 %v2067
    %2079 = vmatprep.subr.mxu0 0.0
    %2080 = vmatpush1.xpose.msra.mxu0 %v2070
    %2081 = vmatprep.subr.mxu0 0.0
    %2082 = vmatpush1.xpose.msra.mxu0 %v2073
    %2083 = vmatprep.subr.mxu0 0.0
    %2084 = vmatpush1.xpose.msra.mxu0 0.0
    %2085 = vmatprep.subr.mxu0 0.0
    %2086 = vmatpush1.xpose.msra.mxu0 0.0
    %2087 = vmatprep.subr.mxu0 0.0
    %2088 = vmatpush1.xpose.msra.mxu0 0.0
    %2089 = vmatprep.subr.mxu0 0.0
    %2090 = vmatpush1.xpose.msra.mxu0 0.0
    %2091 = vmatprep.subr.mxu0 0.0
    %2092 = vmatpush1.xpose.msra.mxu0 0.0
    %2093 = vmatprep.subr.mxu0 0.0
    %2094 = vmatpush1.xpose.msra.mxu0 0.0
    %2095 = vmatprep.subr.mxu0 0.0
    %2096 = vmatpush1.xpose.msra.mxu0 0.0
    %2097 = vmatprep.subr.mxu0 0.0
    %2098 = vmatpush1.xpose.msra.mxu0 0.0
    %2099 = vmatprep.subr.mxu0 0.0
    %2100 = vmatpush1.xpose.msra.mxu0 0.0
    %2101 = vmatprep.subr.mxu0 0.0
    %2102 = vmatpush1.xpose.msra.mxu0 0.0
    %2103 = vmatprep.subr.mxu0 0.0
    %2104 = vmatpush1.xpose.msra.mxu0 0.0
    %2105 = vmatprep.subr.mxu0 0.0
    %2106 = vmatpush1.xpose.msra.mxu0 0.0
    %2107 = vmatprep.subr.mxu0 0.0
    %2108 = vmatpush1.xpose.msra.mxu0 0.0
    %2109 = vmatprep.subr.mxu0 0.0
    %2110 = vmatpush1.xpose.msra.mxu0 0.0
    %2111 = vmatprep.subr.mxu0 0.0
    %2112 = vmatpush1.xpose.msra.mxu0 0.0
    %2113 = vmatprep.subr.mxu0 0.0
    %2114 = vmatpush1.xpose.msra.mxu0 0.0
    %2115 = vmatprep.subr.mxu0 0.0
    %2116 = vmatpush1.xpose.msra.mxu0 0.0
    %2117 = vmatprep.subr.mxu0 0.0
    %2118 = vmatpush1.xpose.msra.mxu0 0.0
    %2119 = vmatprep.subr.mxu0 0.0
    %2120 = vmatpush1.xpose.msra.mxu0 0.0
    %2121 = vmatprep.subr.mxu0 0.0
    %2122 = vmatpush1.xpose.msra.mxu0 0.0
    %2123 = vmatprep.subr.mxu0 0.0
    %2124 = vmatpush1.xpose.msra.mxu0 0.0
    %2125 = vmatprep.subr.mxu0 0.0
    %2126 = vmatpush1.xpose.msra.mxu0 0.0
    %2127 = vmatprep.subr.mxu0 0.0
    %2128 = vmatpush1.xpose.msra.mxu0 0.0
    %2129 = vmatprep.subr.mxu0 0.0
    %2130 = vmatpush1.xpose.msra.mxu0 0.0
    %2131 = vmatprep.subr.mxu0 0.0
    %2132 = vmatpush1.xpose.msra.mxu0 0.0
    %2133 = vmatprep.subr.mxu0 0.0
    %2134 = vmatpush1.xpose.msra.mxu0 0.0
    %2135 = vmatprep.subr.mxu0 0.0
    %2136 = vmatpush1.xpose.msra.mxu0 0.0
    %2137 = vmatprep.subr.mxu0 0.0
    %2138 = vmatpush1.xpose.msra.mxu0 0.0
    %2139 = vmatprep.mubr.f32.mxu0 0.0
    %2140 = vmatmul.mubr.f32.gmra.mrb[0].mxu0 %v2064
    %v2141 = vpop.f32.mrb[0].mxu0
    %v2142 = vadd.f32 0.0, %v2141
    %v2143 = vpop.f32.mrb[0].mxu0
    %2144 = vmatprep.mubr.f32.mxu0 0.0
    %2145 = vmatmul.mubr.f32.gmra.mrb[0].mxu0 %v2067
    %v2146 = vpop.f32.mrb[0].mxu0
    %v2147 = vadd.f32 0.0, %v2146
    %v2148 = vpop.f32.mrb[0].mxu0
    %2149 = vmatprep.mubr.f32.mxu0 0.0
    %2150 = vmatmul.mubr.f32.gmra.mrb[0].mxu0 %v2070
    %v2151 = vpop.f32.mrb[0].mxu0
    %v2152 = vadd.f32 0.0, %v2151
    %v2153 = vpop.f32.mrb[0].mxu0
    %2154 = vmatprep.mubr.f32.mxu0 0.0
    %2155 = vmatmul.mubr.f32.gmra.mrb[0].mxu0 %v2073
    %v2156 = vpop.f32.mrb[0].mxu0
    %v2157 = vadd.f32 0.0, %v2156
    %v2158 = vpop.f32.mrb[0].mxu0
    %2159 = vdwg.mxu0
    %v2160 = vmul.f32 %v2142, %v347
    %v2161 = vmul.f32 %v2147, %v348
    %v2162 = vmul.f32 %v2152, %v349
    %v2163 = vmul.f32 %v2157, %v350
    %v2164 = vsel %vm199, %v2160, 0.0
    %v2165 = vsel %vm199, %v2161, 0.0
    %v2166 = vadd.f32 %v2164, %v2165
    %v2167 = vsel %vm199, %v2162, 0.0
    %v2168 = vadd.f32 %v2166, %v2167
    %v2169 = vsel %vm199, %v2163, 0.0
    %v2170 = vadd.f32 %v2168, %v2169
    %v2171 = vrot.slane %v2170, 4
    %v2172 = vadd.f32 %v2170, %v2171
    %v2173 = vrot.slane %v2172, 2
    %v2174 = vadd.f32 %v2172, %v2173
    %v2175 = vrot.slane %v2174, 1
    %v2176 = vadd.f32 %v2174, %v2175
    %v2177 = vmul.f32 %v2142, 2.0
    %v2178 = vmul.f32 %v2147, 2.0
    %v2179 = vmul.f32 %v2152, 2.0
    %v2180 = vmul.f32 %v2157, 2.0
    %v2181 = vsub.f32 %v2176, %v2177
    %v2182 = vsub.f32 %v2176, %v2178
    %v2183 = vsub.f32 %v2176, %v2179
    %v2184 = vsub.f32 %v2176, %v2180
    %v2185 = vsel %vm380, %v2181, 1e+30
    %v2186 = vsel %vm381, %v2182, 1e+30
    %v2187 = vsel %vm382, %v2183, 1e+30
    %v2188 = vsel %vm383, %v2184, 1e+30
    %v2190 = vsel %vm528, %v2062, 0
    %2192 = vmatprep.subr.mxu0 0.0
    %2193 = vmatpush1.msra.mxu0 %v2190
    %2194 = vmatprep.subr.mxu0 0.0
    %2195 = vmatpush1.msra.mxu0 0.0
    %2196 = vmatprep.subr.mxu0 0.0
    %2197 = vmatpush1.msra.mxu0 0.0
    %2198 = vmatprep.subr.mxu0 0.0
    %2199 = vmatpush1.msra.mxu0 0.0
    %2200 = vmatprep.subr.mxu0 0.0
    %2201 = vmatpush1.msra.mxu0 0.0
    %2202 = vmatprep.subr.mxu0 0.0
    %2203 = vmatpush1.msra.mxu0 0.0
    %2204 = vmatprep.subr.mxu0 0.0
    %2205 = vmatpush1.msra.mxu0 0.0
    %2206 = vmatprep.subr.mxu0 0.0
    %2207 = vmatpush1.msra.mxu0 0.0
    %2208 = vmatprep.subr.mxu0 0.0
    %2209 = vmatpush1.msra.mxu0 0.0
    %2210 = vmatprep.subr.mxu0 0.0
    %2211 = vmatpush1.msra.mxu0 0.0
    %2212 = vmatprep.subr.mxu0 0.0
    %2213 = vmatpush1.msra.mxu0 0.0
    %2214 = vmatprep.subr.mxu0 0.0
    %2215 = vmatpush1.msra.mxu0 0.0
    %2216 = vmatprep.subr.mxu0 0.0
    %2217 = vmatpush1.msra.mxu0 0.0
    %2218 = vmatprep.subr.mxu0 0.0
    %2219 = vmatpush1.msra.mxu0 0.0
    %2220 = vmatprep.subr.mxu0 0.0
    %2221 = vmatpush1.msra.mxu0 0.0
    %2222 = vmatprep.subr.mxu0 0.0
    %2223 = vmatpush1.msra.mxu0 0.0
    %2224 = vmatprep.subr.mxu0 0.0
    %2225 = vmatpush1.msra.mxu0 0.0
    %2226 = vmatprep.subr.mxu0 0.0
    %2227 = vmatpush1.msra.mxu0 0.0
    %2228 = vmatprep.subr.mxu0 0.0
    %2229 = vmatpush1.msra.mxu0 0.0
    %2230 = vmatprep.subr.mxu0 0.0
    %2231 = vmatpush1.msra.mxu0 0.0
    %2232 = vmatprep.subr.mxu0 0.0
    %2233 = vmatpush1.msra.mxu0 0.0
    %2234 = vmatprep.subr.mxu0 0.0
    %2235 = vmatpush1.msra.mxu0 0.0
    %2236 = vmatprep.subr.mxu0 0.0
    %2237 = vmatpush1.msra.mxu0 0.0
    %2238 = vmatprep.subr.mxu0 0.0
    %2239 = vmatpush1.msra.mxu0 0.0
    %2240 = vmatprep.subr.mxu0 0.0
    %2241 = vmatpush1.msra.mxu0 0.0
    %2242 = vmatprep.subr.mxu0 0.0
    %2243 = vmatpush1.msra.mxu0 0.0
    %2244 = vmatprep.subr.mxu0 0.0
    %2245 = vmatpush1.msra.mxu0 0.0
    %2246 = vmatprep.subr.mxu0 0.0
    %2247 = vmatpush1.msra.mxu0 0.0
    %2248 = vmatprep.subr.mxu0 0.0
    %2249 = vmatpush1.msra.mxu0 0.0
    %2250 = vmatprep.subr.mxu0 0.0
    %2251 = vmatpush1.msra.mxu0 0.0
    %2252 = vmatprep.subr.mxu0 0.0
    %2253 = vmatpush1.msra.mxu0 0.0
    %2254 = vmatprep.subr.mxu0 0.0
    %2255 = vmatpush1.msra.mxu0 0.0
    %2256 = vmatprep.mubr.f32.mxu0 0.0
    %2257 = vmatmul.mubr.f32.gmra.mrb[0].mxu0 %v517
    %v2258 = vpop.f32.mrb[0].mxu0
    %v2259 = vadd.f32 0.0, %v2258
    %v2260 = vpop.f32.mrb[0].mxu0
    %2261 = vmatprep.mubr.f32.mxu0 0.0
    %2262 = vmatmul.mubr.f32.gmra.mrb[0].mxu0 %v520
    %v2263 = vpop.f32.mrb[0].mxu0
    %v2264 = vadd.f32 0.0, %v2263
    %v2265 = vpop.f32.mrb[0].mxu0
    %2266 = vmatprep.mubr.f32.mxu0 0.0
    %2267 = vmatmul.mubr.f32.gmra.mrb[0].mxu0 %v523
    %v2268 = vpop.f32.mrb[0].mxu0
    %v2269 = vadd.f32 0.0, %v2268
    %v2270 = vpop.f32.mrb[0].mxu0
    %2271 = vmatprep.mubr.f32.mxu0 0.0
    %2272 = vmatmul.mubr.f32.gmra.mrb[0].mxu0 %v526
    %v2273 = vpop.f32.mrb[0].mxu0
    %v2274 = vadd.f32 0.0, %v2273
    %v2275 = vpop.f32.mrb[0].mxu0
    %2276 = vdwg.mxu0
    %v2277 = vsel %vm199, %v2185, inf
    %2278 = vmin.xlane.f32.xlu0 %v2277
    %v2279 = vpop.xlane.xlu0 %2278
    %v2280 = vsel %vm199, %v2186, inf
    %2281 = vmin.xlane.f32.xlu0 %v2280
    %v2282 = vpop.xlane.xlu0 %2281
    %v2283 = vsel %vm199, %v2187, inf
    %2284 = vmin.xlane.f32.xlu0 %v2283
    %v2285 = vpop.xlane.xlu0 %2284
    %v2286 = vsel %vm199, %v2188, inf
    %2287 = vmin.xlane.f32.xlu0 %v2286
    %v2288 = vpop.xlane.xlu0 %2287
    %vm2289 = vcmp.eq.f32.partialorder %v2185, %v2279
    %vm2290 = vcmp.eq.f32.partialorder %v2186, %v2282
    %vm2291 = vcmp.eq.f32.partialorder %v2187, %v2285
    %vm2292 = vcmp.eq.f32.partialorder %v2188, %v2288
    %v2293 = vsel %vm2289, %v338, 1e+09
    %v2294 = vsel %vm2290, %v338, 1e+09
    %v2295 = vsel %vm2291, %v338, 1e+09
    %v2296 = vsel %vm2292, %v338, 1e+09
    %v2297 = vsel %vm199, %v2293, inf
    %2298 = vmin.xlane.f32.xlu0 %v2297
    %v2299 = vpop.xlane.xlu0 %2298
    %v2300 = vsel %vm199, %v2294, inf
    %2301 = vmin.xlane.f32.xlu0 %v2300
    %v2302 = vpop.xlane.xlu0 %2301
    %v2303 = vsel %vm199, %v2295, inf
    %2304 = vmin.xlane.f32.xlu0 %v2303
    %v2305 = vpop.xlane.xlu0 %2304
    %v2306 = vsel %vm199, %v2296, inf
    %2307 = vmin.xlane.f32.xlu0 %v2306
    %v2308 = vpop.xlane.xlu0 %2307
    %vm2309 = vcmp.eq.f32.partialorder %v338, %v2299
    %vm2310 = vcmp.eq.f32.partialorder %v338, %v2302
    %vm2311 = vcmp.eq.f32.partialorder %v338, %v2305
    %vm2312 = vcmp.eq.f32.partialorder %v338, %v2308
    %v2313 = vsel %vm2309, 1, 0
    %v2314 = vsel %vm2310, 1, 0
    %v2315 = vsel %vm2311, 1, 0
    %v2316 = vsel %vm2312, 1, 0
    %v2317 = vcvt.s32.f32 %v2313
    %v2318 = vcvt.s32.f32 %v2314
    %v2319 = vcvt.s32.f32 %v2315
    %v2320 = vcvt.s32.f32 %v2316
    %v2322 = vsel %vm199, %v2317, 0
    %v2325 = vsel %vm199, %v2318, 0
    %v2328 = vsel %vm199, %v2319, 0
    %v2331 = vsel %vm199, %v2320, 0
    %2333 = vmatprep.subr.mxu0 0.0
    %2334 = vmatpush1.msra.mxu0 %v1872
    %2335 = vmatprep.subr.mxu0 0.0
    %2336 = vmatpush1.msra.mxu0 %v1873
    %2337 = vmatprep.subr.mxu0 0.0
    %2338 = vmatpush1.msra.mxu0 %v1874
    %2339 = vmatprep.subr.mxu0 0.0
    %2340 = vmatpush1.msra.mxu0 %v1875
    %2341 = vmatprep.subr.mxu0 0.0
    %2342 = vmatpush1.msra.mxu0 0.0
    %2343 = vmatprep.subr.mxu0 0.0
    %2344 = vmatpush1.msra.mxu0 0.0
    %2345 = vmatprep.subr.mxu0 0.0
    %2346 = vmatpush1.msra.mxu0 0.0
    %2347 = vmatprep.subr.mxu0 0.0
    %2348 = vmatpush1.msra.mxu0 0.0
    %2349 = vmatprep.subr.mxu0 0.0
    %2350 = vmatpush1.msra.mxu0 0.0
    %2351 = vmatprep.subr.mxu0 0.0
    %2352 = vmatpush1.msra.mxu0 0.0
    %2353 = vmatprep.subr.mxu0 0.0
    %2354 = vmatpush1.msra.mxu0 0.0
    %2355 = vmatprep.subr.mxu0 0.0
    %2356 = vmatpush1.msra.mxu0 0.0
    %2357 = vmatprep.subr.mxu0 0.0
    %2358 = vmatpush1.msra.mxu0 0.0
    %2359 = vmatprep.subr.mxu0 0.0
    %2360 = vmatpush1.msra.mxu0 0.0
    %2361 = vmatprep.subr.mxu0 0.0
    %2362 = vmatpush1.msra.mxu0 0.0
    %2363 = vmatprep.subr.mxu0 0.0
    %2364 = vmatpush1.msra.mxu0 0.0
    %2365 = vmatprep.subr.mxu0 0.0
    %2366 = vmatpush1.msra.mxu0 0.0
    %2367 = vmatprep.subr.mxu0 0.0
    %2368 = vmatpush1.msra.mxu0 0.0
    %2369 = vmatprep.subr.mxu0 0.0
    %2370 = vmatpush1.msra.mxu0 0.0
    %2371 = vmatprep.subr.mxu0 0.0
    %2372 = vmatpush1.msra.mxu0 0.0
    %2373 = vmatprep.subr.mxu0 0.0
    %2374 = vmatpush1.msra.mxu0 0.0
    %2375 = vmatprep.subr.mxu0 0.0
    %2376 = vmatpush1.msra.mxu0 0.0
    %2377 = vmatprep.subr.mxu0 0.0
    %2378 = vmatpush1.msra.mxu0 0.0
    %2379 = vmatprep.subr.mxu0 0.0
    %2380 = vmatpush1.msra.mxu0 0.0
    %2381 = vmatprep.subr.mxu0 0.0
    %2382 = vmatpush1.msra.mxu0 0.0
    %2383 = vmatprep.subr.mxu0 0.0
    %2384 = vmatpush1.msra.mxu0 0.0
    %2385 = vmatprep.subr.mxu0 0.0
    %2386 = vmatpush1.msra.mxu0 0.0
    %2387 = vmatprep.subr.mxu0 0.0
    %2388 = vmatpush1.msra.mxu0 0.0
    %2389 = vmatprep.subr.mxu0 0.0
    %2390 = vmatpush1.msra.mxu0 0.0
    %2391 = vmatprep.subr.mxu0 0.0
    %2392 = vmatpush1.msra.mxu0 0.0
    %2393 = vmatprep.subr.mxu0 0.0
    %2394 = vmatpush1.msra.mxu0 0.0
    %2395 = vmatprep.subr.mxu0 0.0
    %2396 = vmatpush1.msra.mxu0 0.0
    %2397 = vmatprep.mubr.f32.mxu0 0.0
    %2398 = vmatmul.mubr.f32.gmra.mrb[0].mxu0 %v2322
    %v2399 = vpop.f32.mrb[0].mxu0
    %v2400 = vadd.f32 0.0, %v2399
    %v2401 = vpop.f32.mrb[0].mxu0
    %2402 = vmatprep.mubr.f32.mxu0 0.0
    %2403 = vmatmul.mubr.f32.gmra.mrb[0].mxu0 %v2325
    %v2404 = vpop.f32.mrb[0].mxu0
    %v2405 = vadd.f32 0.0, %v2404
    %v2406 = vpop.f32.mrb[0].mxu0
    %2407 = vmatprep.mubr.f32.mxu0 0.0
    %2408 = vmatmul.mubr.f32.gmra.mrb[0].mxu0 %v2328
    %v2409 = vpop.f32.mrb[0].mxu0
    %v2410 = vadd.f32 0.0, %v2409
    %v2411 = vpop.f32.mrb[0].mxu0
    %2412 = vmatprep.mubr.f32.mxu0 0.0
    %2413 = vmatmul.mubr.f32.gmra.mrb[0].mxu0 %v2331
    %v2414 = vpop.f32.mrb[0].mxu0
    %v2415 = vadd.f32 0.0, %v2414
    %v2416 = vpop.f32.mrb[0].mxu0
    %2417 = vdwg.mxu0
    %v2418 = vsub.f32 %v2400, %v1872
    %v2419 = vsub.f32 %v2405, %v1873
    %v2420 = vsub.f32 %v2410, %v1874
    %v2421 = vsub.f32 %v2415, %v1875
    %v2422 = vsel %vm2309, 1e+30, %v2185
    %v2423 = vsel %vm2310, 1e+30, %v2186
    %v2424 = vsel %vm2311, 1e+30, %v2187
    %v2425 = vsel %vm2312, 1e+30, %v2188
    %v2426 = vsel %vm199, %v2422, inf
    %2427 = vmin.xlane.f32.xlu0 %v2426
    %v2428 = vpop.xlane.xlu0 %2427
    %v2429 = vsel %vm199, %v2423, inf
    %2430 = vmin.xlane.f32.xlu0 %v2429
    %v2431 = vpop.xlane.xlu0 %2430
    %v2432 = vsel %vm199, %v2424, inf
    %2433 = vmin.xlane.f32.xlu0 %v2432
    %v2434 = vpop.xlane.xlu0 %2433
    %v2435 = vsel %vm199, %v2425, inf
    %2436 = vmin.xlane.f32.xlu0 %v2435
    %v2437 = vpop.xlane.xlu0 %2436
    %vm2438 = vcmp.eq.f32.partialorder %v2422, %v2428
    %vm2439 = vcmp.eq.f32.partialorder %v2423, %v2431
    %vm2440 = vcmp.eq.f32.partialorder %v2424, %v2434
    %vm2441 = vcmp.eq.f32.partialorder %v2425, %v2437
    %v2442 = vsel %vm2438, %v338, 1e+09
    %v2443 = vsel %vm2439, %v338, 1e+09
    %v2444 = vsel %vm2440, %v338, 1e+09
    %v2445 = vsel %vm2441, %v338, 1e+09
    %v2446 = vsel %vm199, %v2442, inf
    %2447 = vmin.xlane.f32.xlu0 %v2446
    %v2448 = vpop.xlane.xlu0 %2447
    %v2449 = vsel %vm199, %v2443, inf
    %2450 = vmin.xlane.f32.xlu0 %v2449
    %v2451 = vpop.xlane.xlu0 %2450
    %v2452 = vsel %vm199, %v2444, inf
    %2453 = vmin.xlane.f32.xlu0 %v2452
    %v2454 = vpop.xlane.xlu0 %2453
    %v2455 = vsel %vm199, %v2445, inf
    %2456 = vmin.xlane.f32.xlu0 %v2455
    %v2457 = vpop.xlane.xlu0 %2456
    %vm2458 = vcmp.eq.f32.partialorder %v338, %v2448
    %vm2459 = vcmp.eq.f32.partialorder %v338, %v2451
    %vm2460 = vcmp.eq.f32.partialorder %v338, %v2454
    %vm2461 = vcmp.eq.f32.partialorder %v338, %v2457
    %v2462 = vsel %vm2458, 1, 0
    %v2463 = vsel %vm2459, 1, 0
    %v2464 = vsel %vm2460, 1, 0
    %v2465 = vsel %vm2461, 1, 0
    %v2466 = vcvt.s32.f32 %v2462
    %v2467 = vcvt.s32.f32 %v2463
    %v2468 = vcvt.s32.f32 %v2464
    %v2469 = vcvt.s32.f32 %v2465
    %v2471 = vsel %vm199, %v2466, 0
    %v2474 = vsel %vm199, %v2467, 0
    %v2477 = vsel %vm199, %v2468, 0
    %v2480 = vsel %vm199, %v2469, 0
    %2482 = vmatprep.subr.mxu0 0.0
    %2483 = vmatpush1.msra.mxu0 %v1872
    %2484 = vmatprep.subr.mxu0 0.0
    %2485 = vmatpush1.msra.mxu0 %v1873
    %2486 = vmatprep.subr.mxu0 0.0
    %2487 = vmatpush1.msra.mxu0 %v1874
    %2488 = vmatprep.subr.mxu0 0.0
    %2489 = vmatpush1.msra.mxu0 %v1875
    %2490 = vmatprep.subr.mxu0 0.0
    %2491 = vmatpush1.msra.mxu0 0.0
    %2492 = vmatprep.subr.mxu0 0.0
    %2493 = vmatpush1.msra.mxu0 0.0
    %2494 = vmatprep.subr.mxu0 0.0
    %2495 = vmatpush1.msra.mxu0 0.0
    %2496 = vmatprep.subr.mxu0 0.0
    %2497 = vmatpush1.msra.mxu0 0.0
    %2498 = vmatprep.subr.mxu0 0.0
    %2499 = vmatpush1.msra.mxu0 0.0
    %2500 = vmatprep.subr.mxu0 0.0
    %2501 = vmatpush1.msra.mxu0 0.0
    %2502 = vmatprep.subr.mxu0 0.0
    %2503 = vmatpush1.msra.mxu0 0.0
    %2504 = vmatprep.subr.mxu0 0.0
    %2505 = vmatpush1.msra.mxu0 0.0
    %2506 = vmatprep.subr.mxu0 0.0
    %2507 = vmatpush1.msra.mxu0 0.0
    %2508 = vmatprep.subr.mxu0 0.0
    %2509 = vmatpush1.msra.mxu0 0.0
    %2510 = vmatprep.subr.mxu0 0.0
    %2511 = vmatpush1.msra.mxu0 0.0
    %2512 = vmatprep.subr.mxu0 0.0
    %2513 = vmatpush1.msra.mxu0 0.0
    %2514 = vmatprep.subr.mxu0 0.0
    %2515 = vmatpush1.msra.mxu0 0.0
    %2516 = vmatprep.subr.mxu0 0.0
    %2517 = vmatpush1.msra.mxu0 0.0
    %2518 = vmatprep.subr.mxu0 0.0
    %2519 = vmatpush1.msra.mxu0 0.0
    %2520 = vmatprep.subr.mxu0 0.0
    %2521 = vmatpush1.msra.mxu0 0.0
    %2522 = vmatprep.subr.mxu0 0.0
    %2523 = vmatpush1.msra.mxu0 0.0
    %2524 = vmatprep.subr.mxu0 0.0
    %2525 = vmatpush1.msra.mxu0 0.0
    %2526 = vmatprep.subr.mxu0 0.0
    %2527 = vmatpush1.msra.mxu0 0.0
    %2528 = vmatprep.subr.mxu0 0.0
    %2529 = vmatpush1.msra.mxu0 0.0
    %2530 = vmatprep.subr.mxu0 0.0
    %2531 = vmatpush1.msra.mxu0 0.0
    %2532 = vmatprep.subr.mxu0 0.0
    %2533 = vmatpush1.msra.mxu0 0.0
    %2534 = vmatprep.subr.mxu0 0.0
    %2535 = vmatpush1.msra.mxu0 0.0
    %2536 = vmatprep.subr.mxu0 0.0
    %2537 = vmatpush1.msra.mxu0 0.0
    %2538 = vmatprep.subr.mxu0 0.0
    %2539 = vmatpush1.msra.mxu0 0.0
    %2540 = vmatprep.subr.mxu0 0.0
    %2541 = vmatpush1.msra.mxu0 0.0
    %2542 = vmatprep.subr.mxu0 0.0
    %2543 = vmatpush1.msra.mxu0 0.0
    %2544 = vmatprep.subr.mxu0 0.0
    %2545 = vmatpush1.msra.mxu0 0.0
    %2546 = vmatprep.mubr.f32.mxu0 0.0
    %2547 = vmatmul.mubr.f32.gmra.mrb[0].mxu0 %v2471
    %v2548 = vpop.f32.mrb[0].mxu0
    %v2549 = vadd.f32 0.0, %v2548
    %v2550 = vpop.f32.mrb[0].mxu0
    %2551 = vmatprep.mubr.f32.mxu0 0.0
    %2552 = vmatmul.mubr.f32.gmra.mrb[0].mxu0 %v2474
    %v2553 = vpop.f32.mrb[0].mxu0
    %v2554 = vadd.f32 0.0, %v2553
    %v2555 = vpop.f32.mrb[0].mxu0
    %2556 = vmatprep.mubr.f32.mxu0 0.0
    %2557 = vmatmul.mubr.f32.gmra.mrb[0].mxu0 %v2477
    %v2558 = vpop.f32.mrb[0].mxu0
    %v2559 = vadd.f32 0.0, %v2558
    %v2560 = vpop.f32.mrb[0].mxu0
    %2561 = vmatprep.mubr.f32.mxu0 0.0
    %2562 = vmatmul.mubr.f32.gmra.mrb[0].mxu0 %v2480
    %v2563 = vpop.f32.mrb[0].mxu0
    %v2564 = vadd.f32 0.0, %v2563
    %v2565 = vpop.f32.mrb[0].mxu0
    %2566 = vdwg.mxu0
    %v2567 = vsub.f32 %v2549, %v1872
    %v2568 = vsub.f32 %v2554, %v1873
    %v2569 = vsub.f32 %v2559, %v1874
    %v2570 = vsub.f32 %v2564, %v1875
    %v2571 = vsel %vm2458, 1e+30, %v2422
    %v2572 = vsel %vm2459, 1e+30, %v2423
    %v2573 = vsel %vm2460, 1e+30, %v2424
    %v2574 = vsel %vm2461, 1e+30, %v2425
    %v2575 = vsel %vm199, %v2571, inf
    %2576 = vmin.xlane.f32.xlu0 %v2575
    %v2577 = vpop.xlane.xlu0 %2576
    %v2578 = vsel %vm199, %v2572, inf
    %2579 = vmin.xlane.f32.xlu0 %v2578
    %v2580 = vpop.xlane.xlu0 %2579
    %v2581 = vsel %vm199, %v2573, inf
    %2582 = vmin.xlane.f32.xlu0 %v2581
    %v2583 = vpop.xlane.xlu0 %2582
    %v2584 = vsel %vm199, %v2574, inf
    %2585 = vmin.xlane.f32.xlu0 %v2584
    %v2586 = vpop.xlane.xlu0 %2585
    %vm2587 = vcmp.eq.f32.partialorder %v2571, %v2577
    %vm2588 = vcmp.eq.f32.partialorder %v2572, %v2580
    %vm2589 = vcmp.eq.f32.partialorder %v2573, %v2583
    %vm2590 = vcmp.eq.f32.partialorder %v2574, %v2586
    %v2591 = vsel %vm2587, %v338, 1e+09
    %v2592 = vsel %vm2588, %v338, 1e+09
    %v2593 = vsel %vm2589, %v338, 1e+09
    %v2594 = vsel %vm2590, %v338, 1e+09
    %v2595 = vsel %vm199, %v2591, inf
    %2596 = vmin.xlane.f32.xlu0 %v2595
    %v2597 = vpop.xlane.xlu0 %2596
    %v2598 = vsel %vm199, %v2592, inf
    %2599 = vmin.xlane.f32.xlu0 %v2598
    %v2600 = vpop.xlane.xlu0 %2599
    %v2601 = vsel %vm199, %v2593, inf
    %2602 = vmin.xlane.f32.xlu0 %v2601
    %v2603 = vpop.xlane.xlu0 %2602
    %v2604 = vsel %vm199, %v2594, inf
    %2605 = vmin.xlane.f32.xlu0 %v2604
    %v2606 = vpop.xlane.xlu0 %2605
    %vm2607 = vcmp.eq.f32.partialorder %v338, %v2597
    %vm2608 = vcmp.eq.f32.partialorder %v338, %v2600
    %vm2609 = vcmp.eq.f32.partialorder %v338, %v2603
    %vm2610 = vcmp.eq.f32.partialorder %v338, %v2606
    %v2611 = vsel %vm2607, 1, 0
    %v2612 = vsel %vm2608, 1, 0
    %v2613 = vsel %vm2609, 1, 0
    %v2614 = vsel %vm2610, 1, 0
    %v2615 = vcvt.s32.f32 %v2611
    %v2616 = vcvt.s32.f32 %v2612
    %v2617 = vcvt.s32.f32 %v2613
    %v2618 = vcvt.s32.f32 %v2614
    %v2620 = vsel %vm199, %v2615, 0
    %v2623 = vsel %vm199, %v2616, 0
    %v2626 = vsel %vm199, %v2617, 0
    %v2629 = vsel %vm199, %v2618, 0
    %2631 = vmatprep.subr.mxu0 0.0
    %2632 = vmatpush1.msra.mxu0 %v1872
    %2633 = vmatprep.subr.mxu0 0.0
    %2634 = vmatpush1.msra.mxu0 %v1873
    %2635 = vmatprep.subr.mxu0 0.0
    %2636 = vmatpush1.msra.mxu0 %v1874
    %2637 = vmatprep.subr.mxu0 0.0
    %2638 = vmatpush1.msra.mxu0 %v1875
    %2639 = vmatprep.subr.mxu0 0.0
    %2640 = vmatpush1.msra.mxu0 0.0
    %2641 = vmatprep.subr.mxu0 0.0
    %2642 = vmatpush1.msra.mxu0 0.0
    %2643 = vmatprep.subr.mxu0 0.0
    %2644 = vmatpush1.msra.mxu0 0.0
    %2645 = vmatprep.subr.mxu0 0.0
    %2646 = vmatpush1.msra.mxu0 0.0
    %2647 = vmatprep.subr.mxu0 0.0
    %2648 = vmatpush1.msra.mxu0 0.0
    %2649 = vmatprep.subr.mxu0 0.0
    %2650 = vmatpush1.msra.mxu0 0.0
    %2651 = vmatprep.subr.mxu0 0.0
    %2652 = vmatpush1.msra.mxu0 0.0
    %2653 = vmatprep.subr.mxu0 0.0
    %2654 = vmatpush1.msra.mxu0 0.0
    %2655 = vmatprep.subr.mxu0 0.0
    %2656 = vmatpush1.msra.mxu0 0.0
    %2657 = vmatprep.subr.mxu0 0.0
    %2658 = vmatpush1.msra.mxu0 0.0
    %2659 = vmatprep.subr.mxu0 0.0
    %2660 = vmatpush1.msra.mxu0 0.0
    %2661 = vmatprep.subr.mxu0 0.0
    %2662 = vmatpush1.msra.mxu0 0.0
    %2663 = vmatprep.subr.mxu0 0.0
    %2664 = vmatpush1.msra.mxu0 0.0
    %2665 = vmatprep.subr.mxu0 0.0
    %2666 = vmatpush1.msra.mxu0 0.0
    %2667 = vmatprep.subr.mxu0 0.0
    %2668 = vmatpush1.msra.mxu0 0.0
    %2669 = vmatprep.subr.mxu0 0.0
    %2670 = vmatpush1.msra.mxu0 0.0
    %2671 = vmatprep.subr.mxu0 0.0
    %2672 = vmatpush1.msra.mxu0 0.0
    %2673 = vmatprep.subr.mxu0 0.0
    %2674 = vmatpush1.msra.mxu0 0.0
    %2675 = vmatprep.subr.mxu0 0.0
    %2676 = vmatpush1.msra.mxu0 0.0
    %2677 = vmatprep.subr.mxu0 0.0
    %2678 = vmatpush1.msra.mxu0 0.0
    %2679 = vmatprep.subr.mxu0 0.0
    %2680 = vmatpush1.msra.mxu0 0.0
    %2681 = vmatprep.subr.mxu0 0.0
    %2682 = vmatpush1.msra.mxu0 0.0
    %2683 = vmatprep.subr.mxu0 0.0
    %2684 = vmatpush1.msra.mxu0 0.0
    %2685 = vmatprep.subr.mxu0 0.0
    %2686 = vmatpush1.msra.mxu0 0.0
    %2687 = vmatprep.subr.mxu0 0.0
    %2688 = vmatpush1.msra.mxu0 0.0
    %2689 = vmatprep.subr.mxu0 0.0
    %2690 = vmatpush1.msra.mxu0 0.0
    %2691 = vmatprep.subr.mxu0 0.0
    %2692 = vmatpush1.msra.mxu0 0.0
    %2693 = vmatprep.subr.mxu0 0.0
    %2694 = vmatpush1.msra.mxu0 0.0
    %2695 = vmatprep.mubr.f32.mxu0 0.0
    %2696 = vmatmul.mubr.f32.gmra.mrb[0].mxu0 %v2620
    %v2697 = vpop.f32.mrb[0].mxu0
    %v2698 = vadd.f32 0.0, %v2697
    %v2699 = vpop.f32.mrb[0].mxu0
    %2700 = vmatprep.mubr.f32.mxu0 0.0
    %2701 = vmatmul.mubr.f32.gmra.mrb[0].mxu0 %v2623
    %v2702 = vpop.f32.mrb[0].mxu0
    %v2703 = vadd.f32 0.0, %v2702
    %v2704 = vpop.f32.mrb[0].mxu0
    %2705 = vmatprep.mubr.f32.mxu0 0.0
    %2706 = vmatmul.mubr.f32.gmra.mrb[0].mxu0 %v2626
    %v2707 = vpop.f32.mrb[0].mxu0
    %v2708 = vadd.f32 0.0, %v2707
    %v2709 = vpop.f32.mrb[0].mxu0
    %2710 = vmatprep.mubr.f32.mxu0 0.0
    %2711 = vmatmul.mubr.f32.gmra.mrb[0].mxu0 %v2629
    %v2712 = vpop.f32.mrb[0].mxu0
    %v2713 = vadd.f32 0.0, %v2712
    %v2714 = vpop.f32.mrb[0].mxu0
    %2715 = vdwg.mxu0
    %v2716 = vsub.f32 %v2698, %v1872
    %v2717 = vsub.f32 %v2703, %v1873
    %v2718 = vsub.f32 %v2708, %v1874
    %v2719 = vsub.f32 %v2713, %v1875
    %v2720 = vsel %vm2607, 1e+30, %v2571
    %v2721 = vsel %vm2608, 1e+30, %v2572
    %v2722 = vsel %vm2609, 1e+30, %v2573
    %v2723 = vsel %vm2610, 1e+30, %v2574
    %v2724 = vsel %vm199, %v2720, inf
    %2725 = vmin.xlane.f32.xlu0 %v2724
    %v2726 = vpop.xlane.xlu0 %2725
    %v2727 = vsel %vm199, %v2721, inf
    %2728 = vmin.xlane.f32.xlu0 %v2727
    %v2729 = vpop.xlane.xlu0 %2728
    %v2730 = vsel %vm199, %v2722, inf
    %2731 = vmin.xlane.f32.xlu0 %v2730
    %v2732 = vpop.xlane.xlu0 %2731
    %v2733 = vsel %vm199, %v2723, inf
    %2734 = vmin.xlane.f32.xlu0 %v2733
    %v2735 = vpop.xlane.xlu0 %2734
    %vm2736 = vcmp.eq.f32.partialorder %v2720, %v2726
    %vm2737 = vcmp.eq.f32.partialorder %v2721, %v2729
    %vm2738 = vcmp.eq.f32.partialorder %v2722, %v2732
    %vm2739 = vcmp.eq.f32.partialorder %v2723, %v2735
    %v2740 = vsel %vm2736, %v338, 1e+09
    %v2741 = vsel %vm2737, %v338, 1e+09
    %v2742 = vsel %vm2738, %v338, 1e+09
    %v2743 = vsel %vm2739, %v338, 1e+09
    %v2744 = vsel %vm199, %v2740, inf
    %2745 = vmin.xlane.f32.xlu0 %v2744
    %v2746 = vpop.xlane.xlu0 %2745
    %v2747 = vsel %vm199, %v2741, inf
    %2748 = vmin.xlane.f32.xlu0 %v2747
    %v2749 = vpop.xlane.xlu0 %2748
    %v2750 = vsel %vm199, %v2742, inf
    %2751 = vmin.xlane.f32.xlu0 %v2750
    %v2752 = vpop.xlane.xlu0 %2751
    %v2753 = vsel %vm199, %v2743, inf
    %2754 = vmin.xlane.f32.xlu0 %v2753
    %v2755 = vpop.xlane.xlu0 %2754
    %vm2756 = vcmp.eq.f32.partialorder %v338, %v2746
    %vm2757 = vcmp.eq.f32.partialorder %v338, %v2749
    %vm2758 = vcmp.eq.f32.partialorder %v338, %v2752
    %vm2759 = vcmp.eq.f32.partialorder %v338, %v2755
    %v2760 = vsel %vm2756, 1, 0
    %v2761 = vsel %vm2757, 1, 0
    %v2762 = vsel %vm2758, 1, 0
    %v2763 = vsel %vm2759, 1, 0
    %v2764 = vcvt.s32.f32 %v2760
    %v2765 = vcvt.s32.f32 %v2761
    %v2766 = vcvt.s32.f32 %v2762
    %v2767 = vcvt.s32.f32 %v2763
    %v2769 = vsel %vm199, %v2764, 0
    %v2772 = vsel %vm199, %v2765, 0
    %v2775 = vsel %vm199, %v2766, 0
    %v2778 = vsel %vm199, %v2767, 0
    %2780 = vmatprep.subr.mxu0 0.0
    %2781 = vmatpush1.msra.mxu0 %v1872
    %2782 = vmatprep.subr.mxu0 0.0
    %2783 = vmatpush1.msra.mxu0 %v1873
    %2784 = vmatprep.subr.mxu0 0.0
    %2785 = vmatpush1.msra.mxu0 %v1874
    %2786 = vmatprep.subr.mxu0 0.0
    %2787 = vmatpush1.msra.mxu0 %v1875
    %2788 = vmatprep.subr.mxu0 0.0
    %2789 = vmatpush1.msra.mxu0 0.0
    %2790 = vmatprep.subr.mxu0 0.0
    %2791 = vmatpush1.msra.mxu0 0.0
    %2792 = vmatprep.subr.mxu0 0.0
    %2793 = vmatpush1.msra.mxu0 0.0
    %2794 = vmatprep.subr.mxu0 0.0
    %2795 = vmatpush1.msra.mxu0 0.0
    %2796 = vmatprep.subr.mxu0 0.0
    %2797 = vmatpush1.msra.mxu0 0.0
    %2798 = vmatprep.subr.mxu0 0.0
    %2799 = vmatpush1.msra.mxu0 0.0
    %2800 = vmatprep.subr.mxu0 0.0
    %2801 = vmatpush1.msra.mxu0 0.0
    %2802 = vmatprep.subr.mxu0 0.0
    %2803 = vmatpush1.msra.mxu0 0.0
    %2804 = vmatprep.subr.mxu0 0.0
    %2805 = vmatpush1.msra.mxu0 0.0
    %2806 = vmatprep.subr.mxu0 0.0
    %2807 = vmatpush1.msra.mxu0 0.0
    %2808 = vmatprep.subr.mxu0 0.0
    %2809 = vmatpush1.msra.mxu0 0.0
    %2810 = vmatprep.subr.mxu0 0.0
    %2811 = vmatpush1.msra.mxu0 0.0
    %2812 = vmatprep.subr.mxu0 0.0
    %2813 = vmatpush1.msra.mxu0 0.0
    %2814 = vmatprep.subr.mxu0 0.0
    %2815 = vmatpush1.msra.mxu0 0.0
    %2816 = vmatprep.subr.mxu0 0.0
    %2817 = vmatpush1.msra.mxu0 0.0
    %2818 = vmatprep.subr.mxu0 0.0
    %2819 = vmatpush1.msra.mxu0 0.0
    %2820 = vmatprep.subr.mxu0 0.0
    %2821 = vmatpush1.msra.mxu0 0.0
    %2822 = vmatprep.subr.mxu0 0.0
    %2823 = vmatpush1.msra.mxu0 0.0
    %2824 = vmatprep.subr.mxu0 0.0
    %2825 = vmatpush1.msra.mxu0 0.0
    %2826 = vmatprep.subr.mxu0 0.0
    %2827 = vmatpush1.msra.mxu0 0.0
    %2828 = vmatprep.subr.mxu0 0.0
    %2829 = vmatpush1.msra.mxu0 0.0
    %2830 = vmatprep.subr.mxu0 0.0
    %2831 = vmatpush1.msra.mxu0 0.0
    %2832 = vmatprep.subr.mxu0 0.0
    %2833 = vmatpush1.msra.mxu0 0.0
    %2834 = vmatprep.subr.mxu0 0.0
    %2835 = vmatpush1.msra.mxu0 0.0
    %2836 = vmatprep.subr.mxu0 0.0
    %2837 = vmatpush1.msra.mxu0 0.0
    %2838 = vmatprep.subr.mxu0 0.0
    %2839 = vmatpush1.msra.mxu0 0.0
    %2840 = vmatprep.subr.mxu0 0.0
    %2841 = vmatpush1.msra.mxu0 0.0
    %2842 = vmatprep.subr.mxu0 0.0
    %2843 = vmatpush1.msra.mxu0 0.0
    %2844 = vmatprep.mubr.f32.mxu0 0.0
    %2845 = vmatmul.mubr.f32.gmra.mrb[0].mxu0 %v2769
    %v2846 = vpop.f32.mrb[0].mxu0
    %v2847 = vadd.f32 0.0, %v2846
    %v2848 = vpop.f32.mrb[0].mxu0
    %2849 = vmatprep.mubr.f32.mxu0 0.0
    %2850 = vmatmul.mubr.f32.gmra.mrb[0].mxu0 %v2772
    %v2851 = vpop.f32.mrb[0].mxu0
    %v2852 = vadd.f32 0.0, %v2851
    %v2853 = vpop.f32.mrb[0].mxu0
    %2854 = vmatprep.mubr.f32.mxu0 0.0
    %2855 = vmatmul.mubr.f32.gmra.mrb[0].mxu0 %v2775
    %v2856 = vpop.f32.mrb[0].mxu0
    %v2857 = vadd.f32 0.0, %v2856
    %v2858 = vpop.f32.mrb[0].mxu0
    %2859 = vmatprep.mubr.f32.mxu0 0.0
    %2860 = vmatmul.mubr.f32.gmra.mrb[0].mxu0 %v2778
    %v2861 = vpop.f32.mrb[0].mxu0
    %v2862 = vadd.f32 0.0, %v2861
    %v2863 = vpop.f32.mrb[0].mxu0
    %2864 = vdwg.mxu0
    %v2865 = vsub.f32 %v2847, %v1872
    %v2866 = vsub.f32 %v2852, %v1873
    %v2867 = vsub.f32 %v2857, %v1874
    %v2868 = vsub.f32 %v2862, %v1875
    %v2869 = vld [vmem:[%s39] sm:$0xf]
    %v2870 = vld [vmem:[%s39 + $0x4] sm:$0xf]
    %v2871 = vld [vmem:[%s39 + $0x8] sm:$0xf]
    %v2872 = vld [vmem:[%s39 + $0xc] sm:$0xf]
    %v2873 = vpack.c.bf16 %v2264, %v2259
    %v2874 = vpack.c.bf16 %v2274, %v2269
    %v2875 = vld [vmem:[%s41] sm:$0xf]
    %v2876 = vld [vmem:[%s41 + $0x4] sm:$0xf]
    %v2877 = vld [vmem:[%s41 + $0x8] sm:$0xf]
    %v2878 = vld [vmem:[%s41 + $0xc] sm:$0xf]
    %v2879 = vpack.c.bf16 %v1873, %v1872
    %v2880 = vpack.c.bf16 %v1875, %v1874
    %v2885 = vunpack.c.l.b16 %v2875
    %v2886 = vunpack.c.l.b16 %v2876
    %v2887 = vunpack.c.l.b16 %v2877
    %v2888 = vunpack.c.l.b16 %v2878
    %v2889 = vpack.c.b16 %v2886, %v2885
    %v2890 = vpack.c.b16 %v2888, %v2887
    %v2894 = vsel %vm199, %v2879, 0
    %v2897 = vsel %vm199, %v2880, 0
    %2899 = vmatprep.subr.bf16.mxu0 0
    %2900 = vmatpush1.bf16.msra.mxu0 %v2889
    %2901 = vmatprep.subr.bf16.mxu0 0
    %2902 = vmatpush1.bf16.msra.mxu0 %v2890
    %2903 = vmatprep.subr.bf16.mxu0 0
    %2904 = vmatpush1.bf16.msra.mxu0 0
    %2905 = vmatprep.subr.bf16.mxu0 0
    %2906 = vmatpush1.bf16.msra.mxu0 0
    %2907 = vmatprep.subr.bf16.mxu0 0
    %2908 = vmatpush1.bf16.msra.mxu0 0
    %2909 = vmatprep.subr.bf16.mxu0 0
    %2910 = vmatpush1.bf16.msra.mxu0 0
    %2911 = vmatprep.subr.bf16.mxu0 0
    %2912 = vmatpush1.bf16.msra.mxu0 0
    %2913 = vmatprep.subr.bf16.mxu0 0
    %2914 = vmatpush1.bf16.msra.mxu0 0
    %2915 = vmatprep.subr.bf16.mxu0 0
    %2916 = vmatpush1.bf16.msra.mxu0 0
    %2917 = vmatprep.subr.bf16.mxu0 0
    %2918 = vmatpush1.bf16.msra.mxu0 0
    %2919 = vmatprep.subr.bf16.mxu0 0
    %2920 = vmatpush1.bf16.msra.mxu0 0
    %2921 = vmatprep.subr.bf16.mxu0 0
    %2922 = vmatpush1.bf16.msra.mxu0 0
    %2923 = vmatprep.subr.bf16.mxu0 0
    %2924 = vmatpush1.bf16.msra.mxu0 0
    %2925 = vmatprep.subr.bf16.mxu0 0
    %2926 = vmatpush1.bf16.msra.mxu0 0
    %2927 = vmatprep.subr.bf16.mxu0 0
    %2928 = vmatpush1.bf16.msra.mxu0 0
    %2929 = vmatprep.subr.bf16.mxu0 0
    %2930 = vmatpush1.bf16.msra.mxu0 0
    %2931 = vmatprep.mubr.bf16.mxu0 0
    %2932 = vmatmul.mubr.bf16.gmra.mrb[0].mxu0 %v2894
    %v2933 = vpop.f32.mrb[0].mxu0
    %v2934 = vadd.f32 0.0, %v2933
    %v2935 = vpop.f32.mrb[0].mxu0
    %v2936 = vpop.f32.mrb[0].mxu0
    %v2937 = vadd.f32 0.0, %v2936
    %v2938 = vpop.f32.mrb[0].mxu0
    %2939 = vmatprep.mubr.bf16.mxu0 0
    %2940 = vmatmul.mubr.bf16.gmra.mrb[0].mxu0 %v2897
    %v2941 = vpop.f32.mrb[0].mxu0
    %v2942 = vadd.f32 0.0, %v2941
    %v2943 = vpop.f32.mrb[0].mxu0
    %v2944 = vpop.f32.mrb[0].mxu0
    %v2945 = vadd.f32 0.0, %v2944
    %v2946 = vpop.f32.mrb[0].mxu0
    %2947 = vdwg.mxu0
    %v2952 = vunpack.c.l.b16 %v2869
    %v2953 = vunpack.c.l.b16 %v2870
    %v2954 = vunpack.c.l.b16 %v2871
    %v2955 = vunpack.c.l.b16 %v2872
    %v2956 = vpack.c.b16 %v2953, %v2952
    %v2957 = vpack.c.b16 %v2955, %v2954
    %v2961 = vsel %vm199, %v2873, 0
    %v2964 = vsel %vm199, %v2874, 0
    %2966 = vmatprep.subr.bf16.mxu0 0
    %2967 = vmatpush1.bf16.msra.mxu0 %v2956
    %2968 = vmatprep.subr.bf16.mxu0 0
    %2969 = vmatpush1.bf16.msra.mxu0 %v2957
    %2970 = vmatprep.subr.bf16.mxu0 0
    %2971 = vmatpush1.bf16.msra.mxu0 0
    %2972 = vmatprep.subr.bf16.mxu0 0
    %2973 = vmatpush1.bf16.msra.mxu0 0
    %2974 = vmatprep.subr.bf16.mxu0 0
    %2975 = vmatpush1.bf16.msra.mxu0 0
    %2976 = vmatprep.subr.bf16.mxu0 0
    %2977 = vmatpush1.bf16.msra.mxu0 0
    %2978 = vmatprep.subr.bf16.mxu0 0
    %2979 = vmatpush1.bf16.msra.mxu0 0
    %2980 = vmatprep.subr.bf16.mxu0 0
    %2981 = vmatpush1.bf16.msra.mxu0 0
    %2982 = vmatprep.subr.bf16.mxu0 0
    %2983 = vmatpush1.bf16.msra.mxu0 0
    %2984 = vmatprep.subr.bf16.mxu0 0
    %2985 = vmatpush1.bf16.msra.mxu0 0
    %2986 = vmatprep.subr.bf16.mxu0 0
    %2987 = vmatpush1.bf16.msra.mxu0 0
    %2988 = vmatprep.subr.bf16.mxu0 0
    %2989 = vmatpush1.bf16.msra.mxu0 0
    %2990 = vmatprep.subr.bf16.mxu0 0
    %2991 = vmatpush1.bf16.msra.mxu0 0
    %2992 = vmatprep.subr.bf16.mxu0 0
    %2993 = vmatpush1.bf16.msra.mxu0 0
    %2994 = vmatprep.subr.bf16.mxu0 0
    %2995 = vmatpush1.bf16.msra.mxu0 0
    %2996 = vmatprep.subr.bf16.mxu0 0
    %2997 = vmatpush1.bf16.msra.mxu0 0
    %2998 = vmatprep.mubr.bf16.mxu0 0
    %2999 = vmatmul.mubr.bf16.gmra.mrb[0].mxu0 %v2961
    %v3000 = vpop.f32.mrb[0].mxu0
    %v3001 = vadd.f32 %v2934, %v3000
    %v3002 = vpop.f32.mrb[0].mxu0
    %v3003 = vpop.f32.mrb[0].mxu0
    %v3004 = vadd.f32 %v2937, %v3003
    %v3005 = vpop.f32.mrb[0].mxu0
    %3006 = vmatprep.mubr.bf16.mxu0 0
    %3007 = vmatmul.mubr.bf16.gmra.mrb[0].mxu0 %v2964
    %v3008 = vpop.f32.mrb[0].mxu0
    %v3009 = vadd.f32 %v2942, %v3008
    %v3010 = vpop.f32.mrb[0].mxu0
    %v3011 = vpop.f32.mrb[0].mxu0
    %v3012 = vadd.f32 %v2945, %v3011
    %v3013 = vpop.f32.mrb[0].mxu0
    %3014 = vdwg.mxu0
    %v3015 = vld [vmem:[%s43] sm:$0xf]
    %v3016 = vld [vmem:[%s43 + $0x4] sm:$0xf]
    %v3017 = vld [vmem:[%s43 + $0x8] sm:$0xf]
    %v3018 = vld [vmem:[%s43 + $0xc] sm:$0xf]
    %v3019 = vpack.c.bf16 %v2419, %v2418
    %v3020 = vpack.c.bf16 %v2421, %v2420
    %v3021 = vpack.c.bf16 %v2568, %v2567
    %v3022 = vpack.c.bf16 %v2570, %v2569
    %v3023 = vpack.c.bf16 %v2717, %v2716
    %v3024 = vpack.c.bf16 %v2719, %v2718
    %v3025 = vpack.c.bf16 %v2866, %v2865
    %v3026 = vpack.c.bf16 %v2868, %v2867
    %v3031 = vunpack.c.l.b16 %v3015
    %v3032 = vunpack.c.l.b16 %v3016
    %v3033 = vunpack.c.l.b16 %v3017
    %v3034 = vunpack.c.l.b16 %v3018
    %v3035 = vpack.c.b16 %v3032, %v3031
    %v3036 = vpack.c.b16 %v3034, %v3033
    %v3040 = vsel %vm199, %v3019, 0
    %v3043 = vsel %vm199, %v3020, 0
    %v3046 = vsel %vm199, %v3021, 0
    %v3049 = vsel %vm199, %v3022, 0
    %v3052 = vsel %vm199, %v3023, 0
    %v3055 = vsel %vm199, %v3024, 0
    %v3058 = vsel %vm199, %v3025, 0
    %v3061 = vsel %vm199, %v3026, 0
    %3063 = vmatprep.subr.bf16.mxu0 0
    %3064 = vmatpush1.bf16.msra.mxu0 %v3035
    %3065 = vmatprep.subr.bf16.mxu0 0
    %3066 = vmatpush1.bf16.msra.mxu0 %v3036
    %3067 = vmatprep.subr.bf16.mxu0 0
    %3068 = vmatpush1.bf16.msra.mxu0 0
    %3069 = vmatprep.subr.bf16.mxu0 0
    %3070 = vmatpush1.bf16.msra.mxu0 0
    %3071 = vmatprep.subr.bf16.mxu0 0
    %3072 = vmatpush1.bf16.msra.mxu0 0
    %3073 = vmatprep.subr.bf16.mxu0 0
    %3074 = vmatpush1.bf16.msra.mxu0 0
    %3075 = vmatprep.subr.bf16.mxu0 0
    %3076 = vmatpush1.bf16.msra.mxu0 0
    %3077 = vmatprep.subr.bf16.mxu0 0
    %3078 = vmatpush1.bf16.msra.mxu0 0
    %3079 = vmatprep.subr.bf16.mxu0 0
    %3080 = vmatpush1.bf16.msra.mxu0 0
    %3081 = vmatprep.subr.bf16.mxu0 0
    %3082 = vmatpush1.bf16.msra.mxu0 0
    %3083 = vmatprep.subr.bf16.mxu0 0
    %3084 = vmatpush1.bf16.msra.mxu0 0
    %3085 = vmatprep.subr.bf16.mxu0 0
    %3086 = vmatpush1.bf16.msra.mxu0 0
    %3087 = vmatprep.subr.bf16.mxu0 0
    %3088 = vmatpush1.bf16.msra.mxu0 0
    %3089 = vmatprep.subr.bf16.mxu0 0
    %3090 = vmatpush1.bf16.msra.mxu0 0
    %3091 = vmatprep.subr.bf16.mxu0 0
    %3092 = vmatpush1.bf16.msra.mxu0 0
    %3093 = vmatprep.subr.bf16.mxu0 0
    %3094 = vmatpush1.bf16.msra.mxu0 0
    %3095 = vmatprep.mubr.bf16.mxu0 0
    %3096 = vmatmul.mubr.bf16.gmra.mrb[0].mxu0 %v3040
    %v3097 = vpop.f32.mrb[0].mxu0
    %v3098 = vadd.f32 0.0, %v3097
    %v3099 = vpop.f32.mrb[0].mxu0
    %v3100 = vpop.f32.mrb[0].mxu0
    %v3101 = vadd.f32 0.0, %v3100
    %v3102 = vpop.f32.mrb[0].mxu0
    %3103 = vmatprep.mubr.bf16.mxu0 0
    %3104 = vmatmul.mubr.bf16.gmra.mrb[0].mxu0 %v3043
    %v3105 = vpop.f32.mrb[0].mxu0
    %v3106 = vadd.f32 0.0, %v3105
    %v3107 = vpop.f32.mrb[0].mxu0
    %v3108 = vpop.f32.mrb[0].mxu0
    %v3109 = vadd.f32 0.0, %v3108
    %v3110 = vpop.f32.mrb[0].mxu0
    %3111 = vmatprep.mubr.bf16.mxu0 0
    %3112 = vmatmul.mubr.bf16.gmra.mrb[0].mxu0 %v3046
    %v3113 = vpop.f32.mrb[0].mxu0
    %v3114 = vadd.f32 0.0, %v3113
    %v3115 = vpop.f32.mrb[0].mxu0
    %v3116 = vpop.f32.mrb[0].mxu0
    %v3117 = vadd.f32 0.0, %v3116
    %v3118 = vpop.f32.mrb[0].mxu0
    %3119 = vmatprep.mubr.bf16.mxu0 0
    %3120 = vmatmul.mubr.bf16.gmra.mrb[0].mxu0 %v3049
    %v3121 = vpop.f32.mrb[0].mxu0
    %v3122 = vadd.f32 0.0, %v3121
    %v3123 = vpop.f32.mrb[0].mxu0
    %v3124 = vpop.f32.mrb[0].mxu0
    %v3125 = vadd.f32 0.0, %v3124
    %v3126 = vpop.f32.mrb[0].mxu0
    %3127 = vmatprep.mubr.bf16.mxu0 0
    %3128 = vmatmul.mubr.bf16.gmra.mrb[0].mxu0 %v3052
    %v3129 = vpop.f32.mrb[0].mxu0
    %v3130 = vadd.f32 0.0, %v3129
    %v3131 = vpop.f32.mrb[0].mxu0
    %v3132 = vpop.f32.mrb[0].mxu0
    %v3133 = vadd.f32 0.0, %v3132
    %v3134 = vpop.f32.mrb[0].mxu0
    %3135 = vmatprep.mubr.bf16.mxu0 0
    %3136 = vmatmul.mubr.bf16.gmra.mrb[0].mxu0 %v3055
    %v3137 = vpop.f32.mrb[0].mxu0
    %v3138 = vadd.f32 0.0, %v3137
    %v3139 = vpop.f32.mrb[0].mxu0
    %v3140 = vpop.f32.mrb[0].mxu0
    %v3141 = vadd.f32 0.0, %v3140
    %v3142 = vpop.f32.mrb[0].mxu0
    %3143 = vmatprep.mubr.bf16.mxu0 0
    %3144 = vmatmul.mubr.bf16.gmra.mrb[0].mxu0 %v3058
    %v3145 = vpop.f32.mrb[0].mxu0
    %v3146 = vadd.f32 0.0, %v3145
    %v3147 = vpop.f32.mrb[0].mxu0
    %v3148 = vpop.f32.mrb[0].mxu0
    %v3149 = vadd.f32 0.0, %v3148
    %v3150 = vpop.f32.mrb[0].mxu0
    %3151 = vmatprep.mubr.bf16.mxu0 0
    %3152 = vmatmul.mubr.bf16.gmra.mrb[0].mxu0 %v3061
    %v3153 = vpop.f32.mrb[0].mxu0
    %v3154 = vadd.f32 0.0, %v3153
    %v3155 = vpop.f32.mrb[0].mxu0
    %v3156 = vpop.f32.mrb[0].mxu0
    %v3157 = vadd.f32 0.0, %v3156
    %v3158 = vpop.f32.mrb[0].mxu0
    %3159 = vdwg.mxu0
    %v3160 = vadd.f32 %v3001, %v3098
    %v3161 = vadd.f32 %v3004, %v3101
    %v3162 = vadd.f32 %v3009, %v3106
    %v3163 = vadd.f32 %v3012, %v3109
    %v3164 = vadd.f32 %v3001, %v3114
    %v3165 = vadd.f32 %v3004, %v3117
    %v3166 = vadd.f32 %v3009, %v3122
    %v3167 = vadd.f32 %v3012, %v3125
    %v3168 = vadd.f32 %v3001, %v3130
    %v3169 = vadd.f32 %v3004, %v3133
    %v3170 = vadd.f32 %v3009, %v3138
    %v3171 = vadd.f32 %v3012, %v3141
    %v3172 = vadd.f32 %v3001, %v3146
    %v3173 = vadd.f32 %v3004, %v3149
    %v3174 = vadd.f32 %v3009, %v3154
    %v3175 = vadd.f32 %v3012, %v3157
    %v3176 = vmax.f32 %v3160, 0.0
    %v3177 = vmax.f32 %v3161, 0.0
    %v3178 = vmax.f32 %v3162, 0.0
    %v3179 = vmax.f32 %v3163, 0.0
    %v3180 = vmax.f32 %v3164, 0.0
    %v3181 = vmax.f32 %v3165, 0.0
    %v3182 = vmax.f32 %v3166, 0.0
    %v3183 = vmax.f32 %v3167, 0.0
    %v3184 = vmax.f32 %v3168, 0.0
    %v3185 = vmax.f32 %v3169, 0.0
    %v3186 = vmax.f32 %v3170, 0.0
    %v3187 = vmax.f32 %v3171, 0.0
    %v3188 = vmax.f32 %v3172, 0.0
    %v3189 = vmax.f32 %v3173, 0.0
    %v3190 = vmax.f32 %v3174, 0.0
    %v3191 = vmax.f32 %v3175, 0.0
    %v3192 = vld [vmem:[%s45] sm:$0xf]
    %v3193 = vld [vmem:[%s45 + $0x4] sm:$0xf]
    %v3194 = vld [vmem:[%s45 + $0x8] sm:$0xf]
    %v3195 = vld [vmem:[%s45 + $0xc] sm:$0xf]
    %v3196 = vpack.c.bf16 %v3177, %v3176
    %v3197 = vpack.c.bf16 %v3179, %v3178
    %v3198 = vpack.c.bf16 %v3181, %v3180
    %v3199 = vpack.c.bf16 %v3183, %v3182
    %v3200 = vpack.c.bf16 %v3185, %v3184
    %v3201 = vpack.c.bf16 %v3187, %v3186
    %v3202 = vpack.c.bf16 %v3189, %v3188
    %v3203 = vpack.c.bf16 %v3191, %v3190
    %v3208 = vunpack.c.l.b16 %v3192
    %v3209 = vunpack.c.l.b16 %v3193
    %v3210 = vunpack.c.l.b16 %v3194
    %v3211 = vunpack.c.l.b16 %v3195
    %v3212 = vpack.c.b16 %v3209, %v3208
    %v3213 = vpack.c.b16 %v3211, %v3210
    %v3217 = vsel %vm199, %v3196, 0
    %v3220 = vsel %vm199, %v3197, 0
    %v3223 = vsel %vm199, %v3198, 0
    %v3226 = vsel %vm199, %v3199, 0
    %v3229 = vsel %vm199, %v3200, 0
    %v3232 = vsel %vm199, %v3201, 0
    %v3235 = vsel %vm199, %v3202, 0
    %v3238 = vsel %vm199, %v3203, 0
    %3240 = vmatprep.subr.bf16.mxu0 0
    %3241 = vmatpush1.bf16.msra.mxu0 %v3212
    %3242 = vmatprep.subr.bf16.mxu0 0
    %3243 = vmatpush1.bf16.msra.mxu0 %v3213
    %3244 = vmatprep.subr.bf16.mxu0 0
    %3245 = vmatpush1.bf16.msra.mxu0 0
    %3246 = vmatprep.subr.bf16.mxu0 0
    %3247 = vmatpush1.bf16.msra.mxu0 0
    %3248 = vmatprep.subr.bf16.mxu0 0
    %3249 = vmatpush1.bf16.msra.mxu0 0
    %3250 = vmatprep.subr.bf16.mxu0 0
    %3251 = vmatpush1.bf16.msra.mxu0 0
    %3252 = vmatprep.subr.bf16.mxu0 0
    %3253 = vmatpush1.bf16.msra.mxu0 0
    %3254 = vmatprep.subr.bf16.mxu0 0
    %3255 = vmatpush1.bf16.msra.mxu0 0
    %3256 = vmatprep.subr.bf16.mxu0 0
    %3257 = vmatpush1.bf16.msra.mxu0 0
    %3258 = vmatprep.subr.bf16.mxu0 0
    %3259 = vmatpush1.bf16.msra.mxu0 0
    %3260 = vmatprep.subr.bf16.mxu0 0
    %3261 = vmatpush1.bf16.msra.mxu0 0
    %3262 = vmatprep.subr.bf16.mxu0 0
    %3263 = vmatpush1.bf16.msra.mxu0 0
    %3264 = vmatprep.subr.bf16.mxu0 0
    %3265 = vmatpush1.bf16.msra.mxu0 0
    %3266 = vmatprep.subr.bf16.mxu0 0
    %3267 = vmatpush1.bf16.msra.mxu0 0
    %3268 = vmatprep.subr.bf16.mxu0 0
    %3269 = vmatpush1.bf16.msra.mxu0 0
    %3270 = vmatprep.subr.bf16.mxu0 0
    %3271 = vmatpush1.bf16.msra.mxu0 0
    %3272 = vmatprep.mubr.bf16.mxu0 0
    %3273 = vmatmul.mubr.bf16.gmra.mrb[0].mxu0 %v3217
    %v3274 = vpop.f32.mrb[0].mxu0
    %v3275 = vadd.f32 0.0, %v3274
    %v3276 = vpop.f32.mrb[0].mxu0
    %v3277 = vpop.f32.mrb[0].mxu0
    %v3278 = vadd.f32 0.0, %v3277
    %v3279 = vpop.f32.mrb[0].mxu0
    %3280 = vmatprep.mubr.bf16.mxu0 0
    %3281 = vmatmul.mubr.bf16.gmra.mrb[0].mxu0 %v3220
    %v3282 = vpop.f32.mrb[0].mxu0
    %v3283 = vadd.f32 0.0, %v3282
    %v3284 = vpop.f32.mrb[0].mxu0
    %v3285 = vpop.f32.mrb[0].mxu0
    %v3286 = vadd.f32 0.0, %v3285
    %v3287 = vpop.f32.mrb[0].mxu0
    %3288 = vmatprep.mubr.bf16.mxu0 0
    %3289 = vmatmul.mubr.bf16.gmra.mrb[0].mxu0 %v3223
    %v3290 = vpop.f32.mrb[0].mxu0
    %v3291 = vadd.f32 0.0, %v3290
    %v3292 = vpop.f32.mrb[0].mxu0
    %v3293 = vpop.f32.mrb[0].mxu0
    %v3294 = vadd.f32 0.0, %v3293
    %v3295 = vpop.f32.mrb[0].mxu0
    %3296 = vmatprep.mubr.bf16.mxu0 0
    %3297 = vmatmul.mubr.bf16.gmra.mrb[0].mxu0 %v3226
    %v3298 = vpop.f32.mrb[0].mxu0
    %v3299 = vadd.f32 0.0, %v3298
    %v3300 = vpop.f32.mrb[0].mxu0
    %v3301 = vpop.f32.mrb[0].mxu0
    %v3302 = vadd.f32 0.0, %v3301
    %v3303 = vpop.f32.mrb[0].mxu0
    %3304 = vmatprep.mubr.bf16.mxu0 0
    %3305 = vmatmul.mubr.bf16.gmra.mrb[0].mxu0 %v3229
    %v3306 = vpop.f32.mrb[0].mxu0
    %v3307 = vadd.f32 0.0, %v3306
    %v3308 = vpop.f32.mrb[0].mxu0
    %v3309 = vpop.f32.mrb[0].mxu0
    %v3310 = vadd.f32 0.0, %v3309
    %v3311 = vpop.f32.mrb[0].mxu0
    %3312 = vmatprep.mubr.bf16.mxu0 0
    %3313 = vmatmul.mubr.bf16.gmra.mrb[0].mxu0 %v3232
    %v3314 = vpop.f32.mrb[0].mxu0
    %v3315 = vadd.f32 0.0, %v3314
    %v3316 = vpop.f32.mrb[0].mxu0
    %v3317 = vpop.f32.mrb[0].mxu0
    %v3318 = vadd.f32 0.0, %v3317
    %v3319 = vpop.f32.mrb[0].mxu0
    %3320 = vmatprep.mubr.bf16.mxu0 0
    %3321 = vmatmul.mubr.bf16.gmra.mrb[0].mxu0 %v3235
    %v3322 = vpop.f32.mrb[0].mxu0
    %v3323 = vadd.f32 0.0, %v3322
    %v3324 = vpop.f32.mrb[0].mxu0
    %v3325 = vpop.f32.mrb[0].mxu0
    %v3326 = vadd.f32 0.0, %v3325
    %v3327 = vpop.f32.mrb[0].mxu0
    %3328 = vmatprep.mubr.bf16.mxu0 0
    %3329 = vmatmul.mubr.bf16.gmra.mrb[0].mxu0 %v3238
    %v3330 = vpop.f32.mrb[0].mxu0
    %v3331 = vadd.f32 0.0, %v3330
    %v3332 = vpop.f32.mrb[0].mxu0
    %v3333 = vpop.f32.mrb[0].mxu0
    %v3334 = vadd.f32 0.0, %v3333
    %v3335 = vpop.f32.mrb[0].mxu0
    %3336 = vdwg.mxu0
    %v3337 = vmax.f32 %v3275, 0.0
    %v3338 = vmax.f32 %v3278, 0.0
    %v3339 = vmax.f32 %v3283, 0.0
    %v3340 = vmax.f32 %v3286, 0.0
    %v3341 = vmax.f32 %v3291, 0.0
    %v3342 = vmax.f32 %v3294, 0.0
    %v3343 = vmax.f32 %v3299, 0.0
    %v3344 = vmax.f32 %v3302, 0.0
    %v3345 = vmax.f32 %v3307, 0.0
    %v3346 = vmax.f32 %v3310, 0.0
    %v3347 = vmax.f32 %v3315, 0.0
    %v3348 = vmax.f32 %v3318, 0.0
    %v3349 = vmax.f32 %v3323, 0.0
    %v3350 = vmax.f32 %v3326, 0.0
    %v3351 = vmax.f32 %v3331, 0.0
    %v3352 = vmax.f32 %v3334, 0.0
    %v3353 = vld [vmem:[%s47] sm:$0xf]
    %v3354 = vld [vmem:[%s47 + $0x4] sm:$0xf]
    %v3355 = vld [vmem:[%s47 + $0x8] sm:$0xf]
    %v3356 = vld [vmem:[%s47 + $0xc] sm:$0xf]
    %v3357 = vpack.c.bf16 %v3338, %v3337
    %v3358 = vpack.c.bf16 %v3340, %v3339
    %v3359 = vpack.c.bf16 %v3342, %v3341
    %v3360 = vpack.c.bf16 %v3344, %v3343
    %v3361 = vpack.c.bf16 %v3346, %v3345
    %v3362 = vpack.c.bf16 %v3348, %v3347
    %v3363 = vpack.c.bf16 %v3350, %v3349
    %v3364 = vpack.c.bf16 %v3352, %v3351
    %v3369 = vunpack.c.l.b16 %v3353
    %v3370 = vunpack.c.l.b16 %v3354
    %v3371 = vunpack.c.l.b16 %v3355
    %v3372 = vunpack.c.l.b16 %v3356
    %v3373 = vpack.c.b16 %v3370, %v3369
    %v3374 = vpack.c.b16 %v3372, %v3371
    %v3378 = vsel %vm199, %v3357, 0
    %v3381 = vsel %vm199, %v3358, 0
    %v3384 = vsel %vm199, %v3359, 0
    %v3387 = vsel %vm199, %v3360, 0
    %v3390 = vsel %vm199, %v3361, 0
    %v3393 = vsel %vm199, %v3362, 0
    %v3396 = vsel %vm199, %v3363, 0
    %v3399 = vsel %vm199, %v3364, 0
    %3401 = vmatprep.subr.bf16.mxu0 0
    %3402 = vmatpush1.bf16.msra.mxu0 %v3373
    %3403 = vmatprep.subr.bf16.mxu0 0
    %3404 = vmatpush1.bf16.msra.mxu0 %v3374
    %3405 = vmatprep.subr.bf16.mxu0 0
    %3406 = vmatpush1.bf16.msra.mxu0 0
    %3407 = vmatprep.subr.bf16.mxu0 0
    %3408 = vmatpush1.bf16.msra.mxu0 0
    %3409 = vmatprep.subr.bf16.mxu0 0
    %3410 = vmatpush1.bf16.msra.mxu0 0
    %3411 = vmatprep.subr.bf16.mxu0 0
    %3412 = vmatpush1.bf16.msra.mxu0 0
    %3413 = vmatprep.subr.bf16.mxu0 0
    %3414 = vmatpush1.bf16.msra.mxu0 0
    %3415 = vmatprep.subr.bf16.mxu0 0
    %3416 = vmatpush1.bf16.msra.mxu0 0
    %3417 = vmatprep.subr.bf16.mxu0 0
    %3418 = vmatpush1.bf16.msra.mxu0 0
    %3419 = vmatprep.subr.bf16.mxu0 0
    %3420 = vmatpush1.bf16.msra.mxu0 0
    %3421 = vmatprep.subr.bf16.mxu0 0
    %3422 = vmatpush1.bf16.msra.mxu0 0
    %3423 = vmatprep.subr.bf16.mxu0 0
    %3424 = vmatpush1.bf16.msra.mxu0 0
    %3425 = vmatprep.subr.bf16.mxu0 0
    %3426 = vmatpush1.bf16.msra.mxu0 0
    %3427 = vmatprep.subr.bf16.mxu0 0
    %3428 = vmatpush1.bf16.msra.mxu0 0
    %3429 = vmatprep.subr.bf16.mxu0 0
    %3430 = vmatpush1.bf16.msra.mxu0 0
    %3431 = vmatprep.subr.bf16.mxu0 0
    %3432 = vmatpush1.bf16.msra.mxu0 0
    %3433 = vmatprep.mubr.bf16.mxu0 0
    %3434 = vmatmul.mubr.bf16.gmra.mrb[0].mxu0 %v3378
    %v3435 = vpop.f32.mrb[0].mxu0
    %v3436 = vadd.f32 0.0, %v3435
    %v3437 = vpop.f32.mrb[0].mxu0
    %v3438 = vpop.f32.mrb[0].mxu0
    %v3439 = vadd.f32 0.0, %v3438
    %v3440 = vpop.f32.mrb[0].mxu0
    %3441 = vmatprep.mubr.bf16.mxu0 0
    %3442 = vmatmul.mubr.bf16.gmra.mrb[0].mxu0 %v3381
    %v3443 = vpop.f32.mrb[0].mxu0
    %v3444 = vadd.f32 0.0, %v3443
    %v3445 = vpop.f32.mrb[0].mxu0
    %v3446 = vpop.f32.mrb[0].mxu0
    %v3447 = vadd.f32 0.0, %v3446
    %v3448 = vpop.f32.mrb[0].mxu0
    %3449 = vmatprep.mubr.bf16.mxu0 0
    %3450 = vmatmul.mubr.bf16.gmra.mrb[0].mxu0 %v3384
    %v3451 = vpop.f32.mrb[0].mxu0
    %v3452 = vadd.f32 0.0, %v3451
    %v3453 = vpop.f32.mrb[0].mxu0
    %v3454 = vpop.f32.mrb[0].mxu0
    %v3455 = vadd.f32 0.0, %v3454
    %v3456 = vpop.f32.mrb[0].mxu0
    %3457 = vmatprep.mubr.bf16.mxu0 0
    %3458 = vmatmul.mubr.bf16.gmra.mrb[0].mxu0 %v3387
    %v3459 = vpop.f32.mrb[0].mxu0
    %v3460 = vadd.f32 0.0, %v3459
    %v3461 = vpop.f32.mrb[0].mxu0
    %v3462 = vpop.f32.mrb[0].mxu0
    %v3463 = vadd.f32 0.0, %v3462
    %v3464 = vpop.f32.mrb[0].mxu0
    %3465 = vmatprep.mubr.bf16.mxu0 0
    %3466 = vmatmul.mubr.bf16.gmra.mrb[0].mxu0 %v3390
    %v3467 = vpop.f32.mrb[0].mxu0
    %v3468 = vadd.f32 0.0, %v3467
    %v3469 = vpop.f32.mrb[0].mxu0
    %v3470 = vpop.f32.mrb[0].mxu0
    %v3471 = vadd.f32 0.0, %v3470
    %v3472 = vpop.f32.mrb[0].mxu0
    %3473 = vmatprep.mubr.bf16.mxu0 0
    %3474 = vmatmul.mubr.bf16.gmra.mrb[0].mxu0 %v3393
    %v3475 = vpop.f32.mrb[0].mxu0
    %v3476 = vadd.f32 0.0, %v3475
    %v3477 = vpop.f32.mrb[0].mxu0
    %v3478 = vpop.f32.mrb[0].mxu0
    %v3479 = vadd.f32 0.0, %v3478
    %v3480 = vpop.f32.mrb[0].mxu0
    %3481 = vmatprep.mubr.bf16.mxu0 0
    %3482 = vmatmul.mubr.bf16.gmra.mrb[0].mxu0 %v3396
    %v3483 = vpop.f32.mrb[0].mxu0
    %v3484 = vadd.f32 0.0, %v3483
    %v3485 = vpop.f32.mrb[0].mxu0
    %v3486 = vpop.f32.mrb[0].mxu0
    %v3487 = vadd.f32 0.0, %v3486
    %v3488 = vpop.f32.mrb[0].mxu0
    %3489 = vmatprep.mubr.bf16.mxu0 0
    %3490 = vmatmul.mubr.bf16.gmra.mrb[0].mxu0 %v3399
    %v3491 = vpop.f32.mrb[0].mxu0
    %v3492 = vadd.f32 0.0, %v3491
    %v3493 = vpop.f32.mrb[0].mxu0
    %v3494 = vpop.f32.mrb[0].mxu0
    %v3495 = vadd.f32 0.0, %v3494
    %v3496 = vpop.f32.mrb[0].mxu0
    %3497 = vdwg.mxu0
    %v3498 = vmax.f32 %v3436, 0.0
    %v3499 = vmax.f32 %v3439, 0.0
    %v3500 = vmax.f32 %v3444, 0.0
    %v3501 = vmax.f32 %v3447, 0.0
    %v3502 = vmax.f32 %v3452, 0.0
    %v3503 = vmax.f32 %v3455, 0.0
    %v3504 = vmax.f32 %v3460, 0.0
    %v3505 = vmax.f32 %v3463, 0.0
    %v3506 = vmax.f32 %v3468, 0.0
    %v3507 = vmax.f32 %v3471, 0.0
    %v3508 = vmax.f32 %v3476, 0.0
    %v3509 = vmax.f32 %v3479, 0.0
    %v3510 = vmax.f32 %v3484, 0.0
    %v3511 = vmax.f32 %v3487, 0.0
    %v3512 = vmax.f32 %v3492, 0.0
    %v3513 = vmax.f32 %v3495, 0.0
    %v3514 = vmax.f32 %v3498, %v3502
    %v3515 = vmax.f32 %v3499, %v3503
    %v3516 = vmax.f32 %v3500, %v3504
    %v3517 = vmax.f32 %v3501, %v3505
    %v3518 = vmax.f32 %v3514, %v3506
    %v3519 = vmax.f32 %v3515, %v3507
    %v3520 = vmax.f32 %v3516, %v3508
    %v3521 = vmax.f32 %v3517, %v3509
    %v3522 = vmax.f32 %v3518, %v3510
    %v3523 = vmax.f32 %v3519, %v3511
    %v3524 = vmax.f32 %v3520, %v3512
    %v3525 = vmax.f32 %v3521, %v3513
    %v3526 = vld [vmem:[%s49] sm:$0xf]
    %v3527 = vld [vmem:[%s49 + $0x4] sm:$0xf]
    %v3528 = vld [vmem:[%s49 + $0x8] sm:$0xf]
    %v3529 = vld [vmem:[%s49 + $0xc] sm:$0xf]
    %v3534 = vunpack.c.l.b16 %v3526
    %v3535 = vunpack.c.l.b16 %v3527
    %v3536 = vunpack.c.l.b16 %v3528
    %v3537 = vunpack.c.l.b16 %v3529
    %v3538 = vpack.c.b16 %v3535, %v3534
    %v3539 = vpack.c.b16 %v3537, %v3536
    %3542 = vmatprep.subr.bf16.mxu0 0
    %3543 = vmatpush1.bf16.msra.mxu0 %v3538
    %3544 = vmatprep.subr.bf16.mxu0 0
    %3545 = vmatpush1.bf16.msra.mxu0 %v3539
    %3546 = vmatprep.subr.bf16.mxu0 0
    %3547 = vmatpush1.bf16.msra.mxu0 0
    %3548 = vmatprep.subr.bf16.mxu0 0
    %3549 = vmatpush1.bf16.msra.mxu0 0
    %3550 = vmatprep.subr.bf16.mxu0 0
    %3551 = vmatpush1.bf16.msra.mxu0 0
    %3552 = vmatprep.subr.bf16.mxu0 0
    %3553 = vmatpush1.bf16.msra.mxu0 0
    %3554 = vmatprep.subr.bf16.mxu0 0
    %3555 = vmatpush1.bf16.msra.mxu0 0
    %3556 = vmatprep.subr.bf16.mxu0 0
    %3557 = vmatpush1.bf16.msra.mxu0 0
    %3558 = vmatprep.subr.bf16.mxu0 0
    %3559 = vmatpush1.bf16.msra.mxu0 0
    %3560 = vmatprep.subr.bf16.mxu0 0
    %3561 = vmatpush1.bf16.msra.mxu0 0
    %3562 = vmatprep.subr.bf16.mxu0 0
    %3563 = vmatpush1.bf16.msra.mxu0 0
    %3564 = vmatprep.subr.bf16.mxu0 0
    %3565 = vmatpush1.bf16.msra.mxu0 0
    %3566 = vmatprep.subr.bf16.mxu0 0
    %3567 = vmatpush1.bf16.msra.mxu0 0
    %3568 = vmatprep.subr.bf16.mxu0 0
    %3569 = vmatpush1.bf16.msra.mxu0 0
    %3570 = vmatprep.subr.bf16.mxu0 0
    %3571 = vmatpush1.bf16.msra.mxu0 0
    %3572 = vmatprep.subr.bf16.mxu0 0
    %3573 = vmatpush1.bf16.msra.mxu0 0
    %3574 = vmatprep.mubr.bf16.mxu0 0
    %3575 = vmatmul.mubr.bf16.gmra.mrb[0].mxu0 %v2894
    %v3576 = vpop.f32.mrb[0].mxu0
    %v3577 = vadd.f32 0.0, %v3576
    %v3578 = vpop.f32.mrb[0].mxu0
    %v3579 = vpop.f32.mrb[0].mxu0
    %v3580 = vadd.f32 0.0, %v3579
    %v3581 = vpop.f32.mrb[0].mxu0
    %3582 = vmatprep.mubr.bf16.mxu0 0
    %3583 = vmatmul.mubr.bf16.gmra.mrb[0].mxu0 %v2897
    %v3584 = vpop.f32.mrb[0].mxu0
    %v3585 = vadd.f32 0.0, %v3584
    %v3586 = vpop.f32.mrb[0].mxu0
    %v3587 = vpop.f32.mrb[0].mxu0
    %v3588 = vadd.f32 0.0, %v3587
    %v3589 = vpop.f32.mrb[0].mxu0
    %3590 = vdwg.mxu0
    %v3591 = vadd.f32 %v3522, %v3577
    %v3592 = vadd.f32 %v3523, %v3580
    %v3593 = vadd.f32 %v3524, %v3585
    %v3594 = vadd.f32 %v3525, %v3588
    %v3595 = vmax.f32 %v3591, 0.0
    %v3596 = vmax.f32 %v3592, 0.0
    %v3597 = vmax.f32 %v3593, 0.0
    %v3598 = vmax.f32 %v3594, 0.0
    %3599 = vmatprep.subr.mxu0 0.0
    %3600 = vmatpush1.msra.mxu0 %v3595
    %3601 = vmatprep.subr.mxu0 0.0
    %3602 = vmatpush1.msra.mxu0 %v3596
    %3603 = vmatprep.subr.mxu0 0.0
    %3604 = vmatpush1.msra.mxu0 %v3597
    %3605 = vmatprep.subr.mxu0 0.0
    %3606 = vmatpush1.msra.mxu0 %v3598
    %3607 = vmatprep.subr.mxu0 0.0
    %3608 = vmatpush1.msra.mxu0 0.0
    %3609 = vmatprep.subr.mxu0 0.0
    %3610 = vmatpush1.msra.mxu0 0.0
    %3611 = vmatprep.subr.mxu0 0.0
    %3612 = vmatpush1.msra.mxu0 0.0
    %3613 = vmatprep.subr.mxu0 0.0
    %3614 = vmatpush1.msra.mxu0 0.0
    %3615 = vmatprep.subr.mxu0 0.0
    %3616 = vmatpush1.msra.mxu0 0.0
    %3617 = vmatprep.subr.mxu0 0.0
    %3618 = vmatpush1.msra.mxu0 0.0
    %3619 = vmatprep.subr.mxu0 0.0
    %3620 = vmatpush1.msra.mxu0 0.0
    %3621 = vmatprep.subr.mxu0 0.0
    %3622 = vmatpush1.msra.mxu0 0.0
    %3623 = vmatprep.subr.mxu0 0.0
    %3624 = vmatpush1.msra.mxu0 0.0
    %3625 = vmatprep.subr.mxu0 0.0
    %3626 = vmatpush1.msra.mxu0 0.0
    %3627 = vmatprep.subr.mxu0 0.0
    %3628 = vmatpush1.msra.mxu0 0.0
    %3629 = vmatprep.subr.mxu0 0.0
    %3630 = vmatpush1.msra.mxu0 0.0
    %3631 = vmatprep.subr.mxu0 0.0
    %3632 = vmatpush1.msra.mxu0 0.0
    %3633 = vmatprep.subr.mxu0 0.0
    %3634 = vmatpush1.msra.mxu0 0.0
    %3635 = vmatprep.subr.mxu0 0.0
    %3636 = vmatpush1.msra.mxu0 0.0
    %3637 = vmatprep.subr.mxu0 0.0
    %3638 = vmatpush1.msra.mxu0 0.0
    %3639 = vmatprep.subr.mxu0 0.0
    %3640 = vmatpush1.msra.mxu0 0.0
    %3641 = vmatprep.subr.mxu0 0.0
    %3642 = vmatpush1.msra.mxu0 0.0
    %3643 = vmatprep.subr.mxu0 0.0
    %3644 = vmatpush1.msra.mxu0 0.0
    %3645 = vmatprep.subr.mxu0 0.0
    %3646 = vmatpush1.msra.mxu0 0.0
    %3647 = vmatprep.subr.mxu0 0.0
    %3648 = vmatpush1.msra.mxu0 0.0
    %3649 = vmatprep.subr.mxu0 0.0
    %3650 = vmatpush1.msra.mxu0 0.0
    %3651 = vmatprep.subr.mxu0 0.0
    %3652 = vmatpush1.msra.mxu0 0.0
    %3653 = vmatprep.subr.mxu0 0.0
    %3654 = vmatpush1.msra.mxu0 0.0
    %3655 = vmatprep.subr.mxu0 0.0
    %3656 = vmatpush1.msra.mxu0 0.0
    %3657 = vmatprep.subr.mxu0 0.0
    %3658 = vmatpush1.msra.mxu0 0.0
    %3659 = vmatprep.subr.mxu0 0.0
    %3660 = vmatpush1.msra.mxu0 0.0
    %3661 = vmatprep.subr.mxu0 0.0
    %3662 = vmatpush1.msra.mxu0 0.0
    %3663 = vmatprep.mubr.f32.mxu0 0.0
    %3664 = vmatmul.mubr.f32.gmra.mrb[0].mxu0 %v201
    %v3665 = vpop.f32.mrb[0].mxu0
    %v3666 = vadd.f32 0.0, %v3665
    %v3667 = vpop.f32.mrb[0].mxu0
    %3668 = vdwg.mxu0
    %v3669 = vld [vmem:[%s51] sm:$0xf]
    %v3670 = vld [vmem:[%s51 + $0x4] sm:$0xf]
    %v3671 = vld [vmem:[%s51 + $0x8] sm:$0xf]
    %v3672 = vld [vmem:[%s51 + $0xc] sm:$0xf]
    %v3673 = vpack.c.bf16 %v2062, %v2062
    %v3674 = vld [vmem:[%s53] sm:$0xf]
    %v3675 = vld [vmem:[%s53 + $0x4] sm:$0xf]
    %v3676 = vld [vmem:[%s53 + $0x8] sm:$0xf]
    %v3677 = vld [vmem:[%s53 + $0xc] sm:$0xf]
    %v3678 = vpack.c.bf16 %v3666, %v3666
    %v3683 = vunpack.c.l.b16 %v3674
    %v3684 = vunpack.c.l.b16 %v3675
    %v3685 = vunpack.c.l.b16 %v3676
    %v3686 = vunpack.c.l.b16 %v3677
    %v3687 = vpack.c.b16 %v3684, %v3683
    %v3688 = vpack.c.b16 %v3686, %v3685
    %v3692 = vsel %vm199, %v3678, 0
    %3694 = vmatprep.subr.bf16.mxu0 0
    %3695 = vmatpush1.bf16.msra.mxu0 %v3687
    %3696 = vmatprep.subr.bf16.mxu0 0
    %3697 = vmatpush1.bf16.msra.mxu0 %v3688
    %3698 = vmatprep.subr.bf16.mxu0 0
    %3699 = vmatpush1.bf16.msra.mxu0 0
    %3700 = vmatprep.subr.bf16.mxu0 0
    %3701 = vmatpush1.bf16.msra.mxu0 0
    %3702 = vmatprep.subr.bf16.mxu0 0
    %3703 = vmatpush1.bf16.msra.mxu0 0
    %3704 = vmatprep.subr.bf16.mxu0 0
    %3705 = vmatpush1.bf16.msra.mxu0 0
    %3706 = vmatprep.subr.bf16.mxu0 0
    %3707 = vmatpush1.bf16.msra.mxu0 0
    %3708 = vmatprep.subr.bf16.mxu0 0
    %3709 = vmatpush1.bf16.msra.mxu0 0
    %3710 = vmatprep.subr.bf16.mxu0 0
    %3711 = vmatpush1.bf16.msra.mxu0 0
    %3712 = vmatprep.subr.bf16.mxu0 0
    %3713 = vmatpush1.bf16.msra.mxu0 0
    %3714 = vmatprep.subr.bf16.mxu0 0
    %3715 = vmatpush1.bf16.msra.mxu0 0
    %3716 = vmatprep.subr.bf16.mxu0 0
    %3717 = vmatpush1.bf16.msra.mxu0 0
    %3718 = vmatprep.subr.bf16.mxu0 0
    %3719 = vmatpush1.bf16.msra.mxu0 0
    %3720 = vmatprep.subr.bf16.mxu0 0
    %3721 = vmatpush1.bf16.msra.mxu0 0
    %3722 = vmatprep.subr.bf16.mxu0 0
    %3723 = vmatpush1.bf16.msra.mxu0 0
    %3724 = vmatprep.subr.bf16.mxu0 0
    %3725 = vmatpush1.bf16.msra.mxu0 0
    %3726 = vmatprep.mubr.bf16.mxu0 0
    %3727 = vmatmul.mubr.bf16.gmra.mrb[0].mxu0 %v3692
    %v3728 = vpop.f32.mrb[0].mxu0
    %v3729 = vadd.f32 0.0, %v3728
    %v3730 = vpop.f32.mrb[0].mxu0
    %v3731 = vpop.f32.mrb[0].mxu0
    %v3732 = vpop.f32.mrb[0].mxu0
    %3733 = vdwg.mxu0
    %v3738 = vunpack.c.l.b16 %v3669
    %v3739 = vunpack.c.l.b16 %v3670
    %v3740 = vunpack.c.l.b16 %v3671
    %v3741 = vunpack.c.l.b16 %v3672
    %v3742 = vpack.c.b16 %v3739, %v3738
    %v3743 = vpack.c.b16 %v3741, %v3740
    %v3747 = vsel %vm199, %v3673, 0
    %3749 = vmatprep.subr.bf16.mxu0 0
    %3750 = vmatpush1.bf16.msra.mxu0 %v3742
    %3751 = vmatprep.subr.bf16.mxu0 0
    %3752 = vmatpush1.bf16.msra.mxu0 %v3743
    %3753 = vmatprep.subr.bf16.mxu0 0
    %3754 = vmatpush1.bf16.msra.mxu0 0
    %3755 = vmatprep.subr.bf16.mxu0 0
    %3756 = vmatpush1.bf16.msra.mxu0 0
    %3757 = vmatprep.subr.bf16.mxu0 0
    %3758 = vmatpush1.bf16.msra.mxu0 0
    %3759 = vmatprep.subr.bf16.mxu0 0
    %3760 = vmatpush1.bf16.msra.mxu0 0
    %3761 = vmatprep.subr.bf16.mxu0 0
    %3762 = vmatpush1.bf16.msra.mxu0 0
    %3763 = vmatprep.subr.bf16.mxu0 0
    %3764 = vmatpush1.bf16.msra.mxu0 0
    %3765 = vmatprep.subr.bf16.mxu0 0
    %3766 = vmatpush1.bf16.msra.mxu0 0
    %3767 = vmatprep.subr.bf16.mxu0 0
    %3768 = vmatpush1.bf16.msra.mxu0 0
    %3769 = vmatprep.subr.bf16.mxu0 0
    %3770 = vmatpush1.bf16.msra.mxu0 0
    %3771 = vmatprep.subr.bf16.mxu0 0
    %3772 = vmatpush1.bf16.msra.mxu0 0
    %3773 = vmatprep.subr.bf16.mxu0 0
    %3774 = vmatpush1.bf16.msra.mxu0 0
    %3775 = vmatprep.subr.bf16.mxu0 0
    %3776 = vmatpush1.bf16.msra.mxu0 0
    %3777 = vmatprep.subr.bf16.mxu0 0
    %3778 = vmatpush1.bf16.msra.mxu0 0
    %3779 = vmatprep.subr.bf16.mxu0 0
    %3780 = vmatpush1.bf16.msra.mxu0 0
    %3781 = vmatprep.mubr.bf16.mxu0 0
    %3782 = vmatmul.mubr.bf16.gmra.mrb[0].mxu0 %v3747
    %v3783 = vpop.f32.mrb[0].mxu0
    %v3784 = vadd.f32 %v3729, %v3783
    %v3785 = vpop.f32.mrb[0].mxu0
    %v3786 = vpop.f32.mrb[0].mxu0
    %v3787 = vpop.f32.mrb[0].mxu0
    %3788 = vdwg.mxu0
    %v3789 = vld [vmem:[%s55] sm:$0x1]
    %v3791 = vlaneseq
    %v3792 = vshrl.u32 %v3791, 7
    %v3793 = vsub.s32 0, %v3792
    %v3794 = vrot.slane %v3789, %v3793
    %v3796 = vadd.f32 %v3784, %v3794
    %v3797 = vmax.f32 %v3796, 0.0
    %v3798 = vld [vmem:[%s57] sm:$0xf]
    %v3799 = vld [vmem:[%s57 + $0x4] sm:$0xf]
    %v3800 = vld [vmem:[%s57 + $0x8] sm:$0xf]
    %v3801 = vld [vmem:[%s57 + $0xc] sm:$0xf]
    %v3802 = vpack.c.bf16 %v3797, %v3797
    %v3803 = vld [vmem:[%s59] sm:$0x1]
    %v3805 = vlaneseq
    %v3806 = vshrl.u32 %v3805, 7
    %v3807 = vsub.s32 0, %v3806
    %v3808 = vrot.slane %v3803, %v3807
    %v3814 = vunpack.c.l.b16 %v3798
    %v3815 = vunpack.c.l.b16 %v3799
    %v3816 = vunpack.c.l.b16 %v3800
    %v3817 = vunpack.c.l.b16 %v3801
    %v3818 = vpack.c.b16 %v3815, %v3814
    %v3819 = vpack.c.b16 %v3817, %v3816
    %v3823 = vsel %vm199, %v3802, 0
    %3825 = vmatprep.subr.bf16.mxu0 0
    %3826 = vmatpush1.bf16.msra.mxu0 %v3818
    %3827 = vmatprep.subr.bf16.mxu0 0
    %3828 = vmatpush1.bf16.msra.mxu0 %v3819
    %3829 = vmatprep.subr.bf16.mxu0 0
    %3830 = vmatpush1.bf16.msra.mxu0 0
    %3831 = vmatprep.subr.bf16.mxu0 0
    %3832 = vmatpush1.bf16.msra.mxu0 0
    %3833 = vmatprep.subr.bf16.mxu0 0
    %3834 = vmatpush1.bf16.msra.mxu0 0
    %3835 = vmatprep.subr.bf16.mxu0 0
    %3836 = vmatpush1.bf16.msra.mxu0 0
    %3837 = vmatprep.subr.bf16.mxu0 0
    %3838 = vmatpush1.bf16.msra.mxu0 0
    %3839 = vmatprep.subr.bf16.mxu0 0
    %3840 = vmatpush1.bf16.msra.mxu0 0
    %3841 = vmatprep.subr.bf16.mxu0 0
    %3842 = vmatpush1.bf16.msra.mxu0 0
    %3843 = vmatprep.subr.bf16.mxu0 0
    %3844 = vmatpush1.bf16.msra.mxu0 0
    %3845 = vmatprep.subr.bf16.mxu0 0
    %3846 = vmatpush1.bf16.msra.mxu0 0
    %3847 = vmatprep.subr.bf16.mxu0 0
    %3848 = vmatpush1.bf16.msra.mxu0 0
    %3849 = vmatprep.subr.bf16.mxu0 0
    %3850 = vmatpush1.bf16.msra.mxu0 0
    %3851 = vmatprep.subr.bf16.mxu0 0
    %3852 = vmatpush1.bf16.msra.mxu0 0
    %3853 = vmatprep.subr.bf16.mxu0 0
    %3854 = vmatpush1.bf16.msra.mxu0 0
    %3855 = vmatprep.subr.bf16.mxu0 0
    %3856 = vmatpush1.bf16.msra.mxu0 0
    %3857 = vmatprep.mubr.bf16.mxu0 0
    %3858 = vmatmul.mubr.bf16.gmra.mrb[0].mxu0 %v3823
    %v3859 = vpop.f32.mrb[0].mxu0
    %v3860 = vadd.f32 %v3808, %v3859
    %v3861 = vpop.f32.mrb[0].mxu0
    %v3862 = vpop.f32.mrb[0].mxu0
    %v3863 = vpop.f32.mrb[0].mxu0
    %3864 = vdwg.mxu0
    %v3865 = vmax.f32 %v3860, 0.0
    %v3866 = vld [vmem:[%s61] sm:$0xf]
    %v3867 = vld [vmem:[%s61 + $0x4] sm:$0xf]
    %v3868 = vld [vmem:[%s61 + $0x8] sm:$0xf]
    %v3869 = vld [vmem:[%s61 + $0xc] sm:$0xf]
    %v3870 = vpack.c.bf16 %v3865, %v3865
    %v3871 = vld [vmem:[%s63] sm:$0x1]
    %v3873 = vlaneseq
    %v3874 = vshrl.u32 %v3873, 7
    %v3875 = vsub.s32 0, %v3874
    %v3876 = vrot.slane %v3871, %v3875
    %v3882 = vunpack.c.l.b16 %v3866
    %v3883 = vunpack.c.l.b16 %v3867
    %v3884 = vunpack.c.l.b16 %v3868
    %v3885 = vunpack.c.l.b16 %v3869
    %v3886 = vpack.c.b16 %v3883, %v3882
    %v3887 = vpack.c.b16 %v3885, %v3884
    %v3891 = vsel %vm199, %v3870, 0
    %3893 = vmatprep.subr.bf16.mxu0 0
    %3894 = vmatpush1.bf16.msra.mxu0 %v3886
    %3895 = vmatprep.subr.bf16.mxu0 0
    %3896 = vmatpush1.bf16.msra.mxu0 %v3887
    %3897 = vmatprep.subr.bf16.mxu0 0
    %3898 = vmatpush1.bf16.msra.mxu0 0
    %3899 = vmatprep.subr.bf16.mxu0 0
    %3900 = vmatpush1.bf16.msra.mxu0 0
    %3901 = vmatprep.subr.bf16.mxu0 0
    %3902 = vmatpush1.bf16.msra.mxu0 0
    %3903 = vmatprep.subr.bf16.mxu0 0
    %3904 = vmatpush1.bf16.msra.mxu0 0
    %3905 = vmatprep.subr.bf16.mxu0 0
    %3906 = vmatpush1.bf16.msra.mxu0 0
    %3907 = vmatprep.subr.bf16.mxu0 0
    %3908 = vmatpush1.bf16.msra.mxu0 0
    %3909 = vmatprep.subr.bf16.mxu0 0
    %3910 = vmatpush1.bf16.msra.mxu0 0
    %3911 = vmatprep.subr.bf16.mxu0 0
    %3912 = vmatpush1.bf16.msra.mxu0 0
    %3913 = vmatprep.subr.bf16.mxu0 0
    %3914 = vmatpush1.bf16.msra.mxu0 0
    %3915 = vmatprep.subr.bf16.mxu0 0
    %3916 = vmatpush1.bf16.msra.mxu0 0
    %3917 = vmatprep.subr.bf16.mxu0 0
    %3918 = vmatpush1.bf16.msra.mxu0 0
    %3919 = vmatprep.subr.bf16.mxu0 0
    %3920 = vmatpush1.bf16.msra.mxu0 0
    %3921 = vmatprep.subr.bf16.mxu0 0
    %3922 = vmatpush1.bf16.msra.mxu0 0
    %3923 = vmatprep.subr.bf16.mxu0 0
    %3924 = vmatpush1.bf16.msra.mxu0 0
    %3925 = vmatprep.mubr.bf16.mxu0 0
    %3926 = vmatmul.mubr.bf16.gmra.mrb[0].mxu0 %v3891
    %v3927 = vpop.f32.mrb[0].mxu0
    %v3928 = vadd.f32 %v3876, %v3927
    %v3929 = vpop.f32.mrb[0].mxu0
    %v3930 = vpop.f32.mrb[0].mxu0
    %v3931 = vpop.f32.mrb[0].mxu0
    %3932 = vdwg.mxu0
    %v3933 = vmax.f32 %v3928, 0.0
    %v3934 = vld [vmem:[%s65] sm:$0xf]
    %v3935 = vld [vmem:[%s65 + $0x4] sm:$0xf]
    %v3936 = vpack.c.bf16 %v3933, %v3933
    %v3937 = vld [vmem:[%s67] sm:$0x1]
    %v3939 = vlaneseq
    %v3940 = vshrl.u32 %v3939, 7
    %v3941 = vsub.s32 0, %v3940
    %v3942 = vrot.slane %v3937, %v3941
    %v3946 = vunpack.c.l.b16 %v3934
    %v3947 = vunpack.c.l.b16 %v3935
    %v3948 = vpack.c.b16 %v3947, %v3946
    %v3951 = vsel %vm1512, %v3936, 0
    %3953 = vmatprep.subr.bf16.mxu0 0
    %3954 = vmatpush1.bf16.msra.mxu0 %v3948
    %3955 = vmatprep.subr.bf16.mxu0 0
    %3956 = vmatpush1.bf16.msra.mxu0 0
    %3957 = vmatprep.subr.bf16.mxu0 0
    %3958 = vmatpush1.bf16.msra.mxu0 0
    %3959 = vmatprep.subr.bf16.mxu0 0
    %3960 = vmatpush1.bf16.msra.mxu0 0
    %3961 = vmatprep.subr.bf16.mxu0 0
    %3962 = vmatpush1.bf16.msra.mxu0 0
    %3963 = vmatprep.subr.bf16.mxu0 0
    %3964 = vmatpush1.bf16.msra.mxu0 0
    %3965 = vmatprep.subr.bf16.mxu0 0
    %3966 = vmatpush1.bf16.msra.mxu0 0
    %3967 = vmatprep.subr.bf16.mxu0 0
    %3968 = vmatpush1.bf16.msra.mxu0 0
    %3969 = vmatprep.subr.bf16.mxu0 0
    %3970 = vmatpush1.bf16.msra.mxu0 0
    %3971 = vmatprep.subr.bf16.mxu0 0
    %3972 = vmatpush1.bf16.msra.mxu0 0
    %3973 = vmatprep.subr.bf16.mxu0 0
    %3974 = vmatpush1.bf16.msra.mxu0 0
    %3975 = vmatprep.subr.bf16.mxu0 0
    %3976 = vmatpush1.bf16.msra.mxu0 0
    %3977 = vmatprep.subr.bf16.mxu0 0
    %3978 = vmatpush1.bf16.msra.mxu0 0
    %3979 = vmatprep.subr.bf16.mxu0 0
    %3980 = vmatpush1.bf16.msra.mxu0 0
    %3981 = vmatprep.subr.bf16.mxu0 0
    %3982 = vmatpush1.bf16.msra.mxu0 0
    %3983 = vmatprep.subr.bf16.mxu0 0
    %3984 = vmatpush1.bf16.msra.mxu0 0
    %3985 = vmatprep.mubr.bf16.mxu0 0
    %3986 = vmatmul.mubr.bf16.gmra.mrb[0].mxu0 %v3951
    %v3987 = vpop.f32.mrb[0].mxu0
    %v3988 = vadd.f32 %v3942, %v3987
    %v3989 = vpop.f32.mrb[0].mxu0
    %v3990 = vpop.f32.mrb[0].mxu0
    %v3991 = vpop.f32.mrb[0].mxu0
    %3992 = vdwg.mxu0
    %vm3993 = vcmask 25600
    %3994 = vst.msk [vmem:[#allocation7] sm:$0x3] %vm3993, %v3988
    // Predicated region
    $region146: #{trident_forward.1} parent=1 // pred_check
      _
    $region147: #{trident_forward.1} parent=1 // pred_check_branch
      %3996 = sbr.rel (0) target = $region149
    $region148: #{trident_forward.1} parent=1 // pred_region
      %s3998 = ssub.s32 32, 32
      %3999 = vsyncadd [#allocation4], %s3998
      %s4001 = sshll.u32 [#allocation7], 4
      %s4002 = int_to_ptr.vmem [resolvable:$true] %s4001
      %4004 = dma.vmem_to_hbm [thread:$0]  %s4002, 32, %s69, [#allocation4]
    $region149: #{trident_forward.1} parent=1 // pred_fallthru
      _
    // Predicated region
    $region150: #{trident_forward.1} parent=1 // pred_check
      _
    $region151: #{trident_forward.1} parent=1 // pred_check_branch
      %4006 = sbr.rel (0) target = $region153
    $region152: #{trident_forward.1} parent=1 // pred_region
      %4007 = dma.done [#allocation4], 32
    $region153: #{trident_forward.1} parent=1 // pred_fallthru
      _
    %4008 = vsyncpa [#allocation3], 1
    %4009 = vsyncpa [#allocation6], 1
    %4010 = vsyncpa [#allocation4], 1

</llo_original>
